<compile_context>
chip_gen: v6e
topology: v6e:2x2x1
jax: 0.10.0
libtpu: 0.0.40
codegen_flags: <defaults>
</compile_context>

<pallas_src>
import functools

import jax
import jax.numpy as jnp
from jax import lax
from jax.experimental import pallas as pl
from jax.experimental.pallas import tpu as pltpu


def up8_kernel(hid_ref, w1_ref, b1_ref, w2_ref, b2_ref, flow_ref, out_ref,
               slab_ref, *, H, W, TH, temperature):
    # hid_ref : (1, H+2, W+2, Cin)  zero-padded hidden state, bf16 (NHWC)
    # w1_ref  : (9*Cin, 256)        conv1 weights, row = k*Cin + c, k = ky*3+kx
    # b1_ref  : (1, 256)            f32
    # w2_ref  : (256, 576)          conv2 1x1 weights, bf16
    # b2_ref  : (1, 576)            f32
    # flow_ref: (1, H+2, W+2, 2)    zero-padded flow, f32 (NHWC)
    # out_ref : (1, TH*W, 128)      lanes: c*64 + i*8 + j  (c = u/v)
    # slab_ref: (TH*W, 9*Cin)       bf16 im2col scratch
    cin = hid_ref.shape[-1]
    THW = TH * W
    r0 = pl.program_id(1) * TH            # first (unpadded) row of this tile

    # ---- im2col: build the K-packed slab once per row tile ----
    for k in range(9):
        ky, kx = divmod(k, 3)
        patch = hid_ref[0, pl.ds(r0 + ky, TH), kx:kx + W, :]       # (TH, W, Cin)
        slab_ref[:, k * cin:(k + 1) * cin] = patch.reshape(THW, cin)

    # ---- conv1 (3x3, pad=1) as ONE bf16 MXU matmul + bias + ReLU ----
    acc = jnp.dot(slab_ref[...], w1_ref[...],
                  preferred_element_type=jnp.float32)              # (THW, 256)
    acc = jnp.maximum(acc + b1_ref[0], 0.0)

    # ---- conv2 (1x1) -> mask logits, channel = k*64 + (i*8+j) ----
    logits = jnp.dot(acc.astype(w2_ref.dtype), w2_ref[...],
                     preferred_element_type=jnp.float32) + b2_ref[0]
    logits = logits * (1.0 / temperature)                          # (THW, 576)

    # ---- softmax over the 9 taps, reductions on 128-lane-aligned pairs ----
    pairs = [logits[:, p * 128:(p + 1) * 128] for p in range(4)]   # taps 2p,2p+1
    tail = logits[:, 512:576]                                      # tap 8
    m128 = jnp.maximum(jnp.maximum(pairs[0], pairs[1]),
                       jnp.maximum(pairs[2], pairs[3]))            # (THW, 128)
    mmax = jnp.maximum(jnp.maximum(m128[:, :64], m128[:, 64:]), tail)
    mmax128 = jnp.concatenate([mmax, mmax], axis=1)                # (THW, 128)
    e_pairs = [jnp.exp(pairs[p] - mmax128) for p in range(4)]
    e_tail = jnp.exp(tail - mmax)
    s128 = (e_pairs[0] + e_pairs[1]) + (e_pairs[2] + e_pairs[3])
    denom = s128[:, :64] + s128[:, 64:] + e_tail                   # (THW, 64)
    inv_denom = pl.reciprocal(denom, approx=True)

    # ---- convex combination with unfolded flow (deferred normalization) ----
    out_u = jnp.zeros((THW, 64), jnp.float32)
    out_v = jnp.zeros((THW, 64), jnp.float32)
    for k in range(9):
        ky, kx = divmod(k, 3)
        if k == 8:
            ek = e_tail
        else:
            ek = e_pairs[k // 2][:, (k % 2) * 64:(k % 2 + 1) * 64]
        f = flow_ref[0, pl.ds(r0 + ky, TH), kx:kx + W, :].reshape(THW, 2)
        out_u = out_u + ek * f[:, 0:1]
        out_v = out_v + ek * f[:, 1:2]

    # single scale handles both the softmax denominator and the 8x flow scale
    scale = inv_denom * 8.0
    out128 = jnp.concatenate([out_u * scale, out_v * scale], axis=1)
    out_ref[0] = out128.astype(out_ref.dtype)


def _pick_tile_rows(H, W, max_pixels=1024):
    """Largest row-tile TH that divides H, keeps TH*W <= max_pixels and
    satisfies the TPU sublane constraint (TH*W % 8 == 0, or the full image)."""
    candidates = [th for th in range(1, H + 1)
                  if H % th == 0 and (th == H or (th * W) % 8 == 0)]
    fitting = [th for th in candidates if th * W <= max_pixels]
    return max(fitting) if fitting else min(candidates)


def up8_forward(hidden_nchw, flow_nchw, w1, b1, w2, b2,
                temperature=4.0, tile_rows=None):
    """hidden_nchw: (B, Cin, H, W), flow_nchw: (B, 2, H, W) -> (B, 2, 8H, 8W)."""
    B, Cin, H, W = hidden_nchw.shape
    HW = H * W
    TH = _pick_tile_rows(H, W) if tile_rows is None else int(tile_rows)
    if H % TH != 0 or (TH != H and (TH * W) % 8 != 0):
        raise ValueError(f"bad tile_rows={TH} for H={H}, W={W}")
    THW = TH * W

    # Glue: layout changes + padding + weight re-packing (no heavy compute).
    hid = jnp.transpose(hidden_nchw, (0, 2, 3, 1)).astype(jnp.bfloat16)
    hid_pad = jnp.pad(hid, ((0, 0), (1, 1), (1, 1), (0, 0)))
    flw = jnp.transpose(flow_nchw, (0, 2, 3, 1)).astype(jnp.float32)
    flw_pad = jnp.pad(flw, ((0, 0), (1, 1), (1, 1), (0, 0)))

    # conv1 weight (256, Cin, 3, 3) -> (9*Cin, 256), row = (ky*3+kx)*Cin + c.
    w1k = jnp.transpose(w1, (2, 3, 1, 0)).reshape(9 * Cin, 256).astype(jnp.bfloat16)
    # conv2 weight (576, 256, 1, 1) -> (256, 576).
    w2k = jnp.transpose(w2[:, :, 0, 0], (1, 0)).astype(jnp.bfloat16)
    b1k = b1.reshape(1, 256).astype(jnp.float32)
    b2k = b2.reshape(1, 576).astype(jnp.float32)

    kernel = functools.partial(up8_kernel, H=H, W=W, TH=TH,
                               temperature=float(temperature))

    out = pl.pallas_call(
        kernel,
        out_shape=jax.ShapeDtypeStruct((B, HW, 128), jnp.float32),
        grid_spec=pltpu.PrefetchScalarGridSpec(
            num_scalar_prefetch=0,
            grid=(B, H // TH),
            in_specs=[
                # padded hidden / flow stay resident per batch (constant over i)
                pl.BlockSpec((1, H + 2, W + 2, Cin), lambda b, i: (b, 0, 0, 0)),
                pl.BlockSpec((9 * Cin, 256), lambda b, i: (0, 0)),
                pl.BlockSpec((1, 256), lambda b, i: (0, 0)),
                pl.BlockSpec((256, 576), lambda b, i: (0, 0)),
                pl.BlockSpec((1, 576), lambda b, i: (0, 0)),
                pl.BlockSpec((1, H + 2, W + 2, 2), lambda b, i: (b, 0, 0, 0)),
            ],
            out_specs=pl.BlockSpec((1, THW, 128), lambda b, i: (b, i, 0)),
            scratch_shapes=[pltpu.VMEM((THW, 9 * Cin), jnp.bfloat16)],
        ),
        compiler_params=pltpu.CompilerParams(
            dimension_semantics=("parallel", "parallel"),
            vmem_limit_bytes=48 * 1024 * 1024),
    )(hid_pad, w1k, b1k, w2k, b2k, flw_pad)

    # lanes: l = c*64 + i*8 + j -> (B, 2, H, 8, W, 8) -> (B, 2, 8H, 8W)
    up = out.reshape(B, H, W, 2, 8, 8).transpose(0, 3, 1, 4, 2, 5)
    return up.reshape(B, 2, H * 8, W * 8)


def up8_reference(hidden, flow, w1, b1, w2, b2, temperature=4.0):
    """Pure-JAX reference mirroring the PyTorch forward (NCHW)."""
    B, _, H, W = flow.shape
    x = lax.conv_general_dilated(hidden, w1, (1, 1), 'SAME',
                                 dimension_numbers=('NCHW', 'OIHW', 'NCHW'),
                                 precision=lax.Precision.HIGHEST)
    x = jnp.maximum(x + b1[None, :, None, None], 0.0)
    m = lax.conv_general_dilated(x, w2, (1, 1), 'SAME',
                                 dimension_numbers=('NCHW', 'OIHW', 'NCHW'),
                                 precision=lax.Precision.HIGHEST)
    m = m + b2[None, :, None, None]
    m = m.reshape(B, 1, 9, 8, 8, H, W)
    m = jax.nn.softmax(m / temperature, axis=2)

    fp = jnp.pad(8.0 * flow, ((0, 0), (0, 0), (1, 1), (1, 1)))
    patches = jnp.stack(
        [fp[:, :, ky:ky + H, kx:kx + W] for ky in range(3) for kx in range(3)],
        axis=2)                                               # (B, 2, 9, H, W)
    up = jnp.sum(m * patches[:, :, :, None, None, :, :], axis=2)  # (B,2,8,8,H,W)
    up = up.transpose(0, 1, 4, 2, 5, 3).reshape(B, 2, H * 8, W * 8)
    return up


if __name__ == "__main__":
    B, Cin, H, W = 2, 32, 8, 8    # hidden_dim=32 for a small test instance

    key = jax.random.PRNGKey(0)
    k1, k2, k3, k4, k5, k6 = jax.random.split(key, 6)
    w1 = jax.random.normal(k1, (256, Cin, 3, 3), jnp.float32) * 0.05
    b1 = jax.random.normal(k2, (256,), jnp.float32) * 0.05
    w2 = jax.random.normal(k3, (576, 256, 1, 1), jnp.float32) * 0.05
    b2 = jax.random.normal(k4, (576,), jnp.float32) * 0.05

    hidden = jax.random.normal(k5, (B, Cin, H, W), jnp.float32)
    flow = jax.random.normal(k6, (B, 2, H, W), jnp.float32)

    ref = jax.block_until_ready(up8_reference(hidden, flow, w1, b1, w2, b2))

    # Exercise both the auto-picked single row tile and an explicit multi-tile
    # grid (tile_rows=4 -> grid=(B, 2)).
    for tr in (None, 4):
        out = up8_forward(hidden, flow, w1, b1, w2, b2, tile_rows=tr)
        out = jax.block_until_ready(out)
        assert out.shape == (B, 2, H * 8, W * 8), out.shape
        assert jnp.allclose(out, ref, rtol=5e-2, atol=5e-2), (
            tr, float(jnp.max(jnp.abs(out - ref))))

    print("KERNEL_OK")
</pallas_src>

<mosaic_0001>
module attributes {stable_mosaic.version = 11 : i64} {
  func.func @up8_kernel(%arg0: i32, %arg1: i32, %arg2: memref<1x10x10x32xbf16, #tpu.memory_space<vmem>>, %arg3: memref<288x256xbf16, #tpu.memory_space<vmem>>, %arg4: memref<1x256xf32, #tpu.memory_space<vmem>>, %arg5: memref<256x576xbf16, #tpu.memory_space<vmem>>, %arg6: memref<1x576xf32, #tpu.memory_space<vmem>>, %arg7: memref<1x10x10x2xf32, #tpu.memory_space<vmem>>, %arg8: memref<1x64x128xf32, #tpu.memory_space<vmem>>, %arg9: memref<64x288xbf16, #tpu.memory_space<vmem>>) attributes {dimension_semantics = [#tpu.dimension_semantics<parallel>, #tpu.dimension_semantics<parallel>], iteration_bounds = array<i64: 2, 1>, scalar_prefetch = 0 : i64, scratch_operands = 1 : i64, tpu.core_type = #tpu.core_type<tc>, window_params = [{transform_indices = @transform_0, window_bounds = array<i64: 1, 10, 10, 32>}, {pipeline_mode = #tpu.pipeline_mode<synchronous>, transform_indices = @transform_1, window_bounds = array<i64: 288, 256>}, {pipeline_mode = #tpu.pipeline_mode<synchronous>, transform_indices = @transform_2, window_bounds = array<i64: 1, 256>}, {pipeline_mode = #tpu.pipeline_mode<synchronous>, transform_indices = @transform_3, window_bounds = array<i64: 256, 576>}, {pipeline_mode = #tpu.pipeline_mode<synchronous>, transform_indices = @transform_4, window_bounds = array<i64: 1, 576>}, {transform_indices = @transform_5, window_bounds = array<i64: 1, 10, 10, 2>}, {transform_indices = @transform_6, window_bounds = array<i64: 1, 64, 128>}]} {
    %c8_i32 = arith.constant 8 : i32
    %0 = arith.muli %arg1, %c8_i32 : i32
    %c0_i32 = arith.constant 0 : i32
    %1 = arith.addi %0, %c0_i32 : i32
    %c0 = arith.constant 0 : index
    %2 = arith.index_cast %1 : i32 to index
    %c0_0 = arith.constant 0 : index
    %c0_1 = arith.constant 0 : index
    %3 = vector.load %arg2[%c0, %2, %c0_0, %c0_1] : memref<1x10x10x32xbf16, #tpu.memory_space<vmem>>, vector<1x8x8x32xbf16>
    %4 = vector.shape_cast %3 : vector<1x8x8x32xbf16> to vector<8x8x32xbf16>
    %5 = vector.shape_cast %4 : vector<8x8x32xbf16> to vector<64x32xbf16>
    %c0_2 = arith.constant 0 : index
    %c0_3 = arith.constant 0 : index
    %6 = vector.load %arg9[%c0_2, %c0_3] : memref<64x288xbf16, #tpu.memory_space<vmem>>, vector<64x32xbf16>
    tpu.vector_store %arg9[%c0_2, %c0_3], %5 {strides = array<i32>} : memref<64x288xbf16, #tpu.memory_space<vmem>>, vector<64x32xbf16>,
    %c0_i32_4 = arith.constant 0 : i32
    %7 = arith.addi %0, %c0_i32_4 : i32
    %c0_5 = arith.constant 0 : index
    %8 = arith.index_cast %7 : i32 to index
    %c1 = arith.constant 1 : index
    %c0_6 = arith.constant 0 : index
    %9 = vector.load %arg2[%c0_5, %8, %c1, %c0_6] : memref<1x10x10x32xbf16, #tpu.memory_space<vmem>>, vector<1x8x8x32xbf16>
    %10 = vector.shape_cast %9 : vector<1x8x8x32xbf16> to vector<8x8x32xbf16>
    %11 = vector.shape_cast %10 : vector<8x8x32xbf16> to vector<64x32xbf16>
    %c0_7 = arith.constant 0 : index
    %c32 = arith.constant 32 : index
    %12 = vector.load %arg9[%c0_7, %c32] : memref<64x288xbf16, #tpu.memory_space<vmem>>, vector<64x32xbf16>
    tpu.vector_store %arg9[%c0_7, %c32], %11 {strides = array<i32>} : memref<64x288xbf16, #tpu.memory_space<vmem>>, vector<64x32xbf16>,
    %c0_i32_8 = arith.constant 0 : i32
    %13 = arith.addi %0, %c0_i32_8 : i32
    %c0_9 = arith.constant 0 : index
    %14 = arith.index_cast %13 : i32 to index
    %c2 = arith.constant 2 : index
    %c0_10 = arith.constant 0 : index
    %15 = vector.load %arg2[%c0_9, %14, %c2, %c0_10] : memref<1x10x10x32xbf16, #tpu.memory_space<vmem>>, vector<1x8x8x32xbf16>
    %16 = vector.shape_cast %15 : vector<1x8x8x32xbf16> to vector<8x8x32xbf16>
    %17 = vector.shape_cast %16 : vector<8x8x32xbf16> to vector<64x32xbf16>
    %c0_11 = arith.constant 0 : index
    %c64 = arith.constant 64 : index
    %18 = vector.load %arg9[%c0_11, %c64] : memref<64x288xbf16, #tpu.memory_space<vmem>>, vector<64x32xbf16>
    tpu.vector_store %arg9[%c0_11, %c64], %17 {strides = array<i32>} : memref<64x288xbf16, #tpu.memory_space<vmem>>, vector<64x32xbf16>,
    %c1_i32 = arith.constant 1 : i32
    %19 = arith.addi %0, %c1_i32 : i32
    %c0_12 = arith.constant 0 : index
    %20 = arith.index_cast %19 : i32 to index
    %c0_13 = arith.constant 0 : index
    %c0_14 = arith.constant 0 : index
    %21 = vector.load %arg2[%c0_12, %20, %c0_13, %c0_14] : memref<1x10x10x32xbf16, #tpu.memory_space<vmem>>, vector<1x8x8x32xbf16>
    %22 = vector.shape_cast %21 : vector<1x8x8x32xbf16> to vector<8x8x32xbf16>
    %23 = vector.shape_cast %22 : vector<8x8x32xbf16> to vector<64x32xbf16>
    %c0_15 = arith.constant 0 : index
    %c96 = arith.constant 96 : index
    %24 = vector.load %arg9[%c0_15, %c96] : memref<64x288xbf16, #tpu.memory_space<vmem>>, vector<64x32xbf16>
    tpu.vector_store %arg9[%c0_15, %c96], %23 {strides = array<i32>} : memref<64x288xbf16, #tpu.memory_space<vmem>>, vector<64x32xbf16>,
    %c1_i32_16 = arith.constant 1 : i32
    %25 = arith.addi %0, %c1_i32_16 : i32
    %c0_17 = arith.constant 0 : index
    %26 = arith.index_cast %25 : i32 to index
    %c1_18 = arith.constant 1 : index
    %c0_19 = arith.constant 0 : index
    %27 = vector.load %arg2[%c0_17, %26, %c1_18, %c0_19] : memref<1x10x10x32xbf16, #tpu.memory_space<vmem>>, vector<1x8x8x32xbf16>
    %28 = vector.shape_cast %27 : vector<1x8x8x32xbf16> to vector<8x8x32xbf16>
    %29 = vector.shape_cast %28 : vector<8x8x32xbf16> to vector<64x32xbf16>
    %c0_20 = arith.constant 0 : index
    %c128 = arith.constant 128 : index
    %30 = vector.load %arg9[%c0_20, %c128] : memref<64x288xbf16, #tpu.memory_space<vmem>>, vector<64x32xbf16>
    tpu.vector_store %arg9[%c0_20, %c128], %29 {strides = array<i32>} : memref<64x288xbf16, #tpu.memory_space<vmem>>, vector<64x32xbf16>,
    %c1_i32_21 = arith.constant 1 : i32
    %31 = arith.addi %0, %c1_i32_21 : i32
    %c0_22 = arith.constant 0 : index
    %32 = arith.index_cast %31 : i32 to index
    %c2_23 = arith.constant 2 : index
    %c0_24 = arith.constant 0 : index
    %33 = vector.load %arg2[%c0_22, %32, %c2_23, %c0_24] : memref<1x10x10x32xbf16, #tpu.memory_space<vmem>>, vector<1x8x8x32xbf16>
    %34 = vector.shape_cast %33 : vector<1x8x8x32xbf16> to vector<8x8x32xbf16>
    %35 = vector.shape_cast %34 : vector<8x8x32xbf16> to vector<64x32xbf16>
    %c0_25 = arith.constant 0 : index
    %c160 = arith.constant 160 : index
    %36 = vector.load %arg9[%c0_25, %c160] : memref<64x288xbf16, #tpu.memory_space<vmem>>, vector<64x32xbf16>
    tpu.vector_store %arg9[%c0_25, %c160], %35 {strides = array<i32>} : memref<64x288xbf16, #tpu.memory_space<vmem>>, vector<64x32xbf16>,
    %c2_i32 = arith.constant 2 : i32
    %37 = arith.addi %0, %c2_i32 : i32
    %c0_26 = arith.constant 0 : index
    %38 = arith.index_cast %37 : i32 to index
    %c0_27 = arith.constant 0 : index
    %c0_28 = arith.constant 0 : index
    %39 = vector.load %arg2[%c0_26, %38, %c0_27, %c0_28] : memref<1x10x10x32xbf16, #tpu.memory_space<vmem>>, vector<1x8x8x32xbf16>
    %40 = vector.shape_cast %39 : vector<1x8x8x32xbf16> to vector<8x8x32xbf16>
    %41 = vector.shape_cast %40 : vector<8x8x32xbf16> to vector<64x32xbf16>
    %c0_29 = arith.constant 0 : index
    %c192 = arith.constant 192 : index
    %42 = vector.load %arg9[%c0_29, %c192] : memref<64x288xbf16, #tpu.memory_space<vmem>>, vector<64x32xbf16>
    tpu.vector_store %arg9[%c0_29, %c192], %41 {strides = array<i32>} : memref<64x288xbf16, #tpu.memory_space<vmem>>, vector<64x32xbf16>,
    %c2_i32_30 = arith.constant 2 : i32
    %43 = arith.addi %0, %c2_i32_30 : i32
    %c0_31 = arith.constant 0 : index
    %44 = arith.index_cast %43 : i32 to index
    %c1_32 = arith.constant 1 : index
    %c0_33 = arith.constant 0 : index
    %45 = vector.load %arg2[%c0_31, %44, %c1_32, %c0_33] : memref<1x10x10x32xbf16, #tpu.memory_space<vmem>>, vector<1x8x8x32xbf16>
    %46 = vector.shape_cast %45 : vector<1x8x8x32xbf16> to vector<8x8x32xbf16>
    %47 = vector.shape_cast %46 : vector<8x8x32xbf16> to vector<64x32xbf16>
    %c0_34 = arith.constant 0 : index
    %c224 = arith.constant 224 : index
    %48 = vector.load %arg9[%c0_34, %c224] : memref<64x288xbf16, #tpu.memory_space<vmem>>, vector<64x32xbf16>
    tpu.vector_store %arg9[%c0_34, %c224], %47 {strides = array<i32>} : memref<64x288xbf16, #tpu.memory_space<vmem>>, vector<64x32xbf16>,
    %c2_i32_35 = arith.constant 2 : i32
    %49 = arith.addi %0, %c2_i32_35 : i32
    %c0_36 = arith.constant 0 : index
    %50 = arith.index_cast %49 : i32 to index
    %c2_37 = arith.constant 2 : index
    %c0_38 = arith.constant 0 : index
    %51 = vector.load %arg2[%c0_36, %50, %c2_37, %c0_38] : memref<1x10x10x32xbf16, #tpu.memory_space<vmem>>, vector<1x8x8x32xbf16>
    %52 = vector.shape_cast %51 : vector<1x8x8x32xbf16> to vector<8x8x32xbf16>
    %53 = vector.shape_cast %52 : vector<8x8x32xbf16> to vector<64x32xbf16>
    %c0_39 = arith.constant 0 : index
    %c256 = arith.constant 256 : index
    %54 = vector.load %arg9[%c0_39, %c256] : memref<64x288xbf16, #tpu.memory_space<vmem>>, vector<64x32xbf16>
    tpu.vector_store %arg9[%c0_39, %c256], %53 {strides = array<i32>} : memref<64x288xbf16, #tpu.memory_space<vmem>>, vector<64x32xbf16>,
    %c0_40 = arith.constant 0 : index
    %c0_41 = arith.constant 0 : index
    %55 = vector.load %arg9[%c0_40, %c0_41] : memref<64x288xbf16, #tpu.memory_space<vmem>>, vector<64x288xbf16>
    %c0_42 = arith.constant 0 : index
    %c0_43 = arith.constant 0 : index
    %56 = vector.load %arg3[%c0_42, %c0_43] : memref<288x256xbf16, #tpu.memory_space<vmem>>, vector<288x256xbf16>
    %cst = arith.constant dense<0.000000e+00> : vector<64x256xf32>
    %57 = tpu.matmul %55, %56, %cst {dimension_numbers = #tpu.dot_dimension_numbers<[1], [0], [0], [1], [0, 0, 1, 1], [], []>} : vector<64x288xbf16>, vector<288x256xbf16>, vector<64x256xf32> -> vector<64x256xf32>
    %c0_44 = arith.constant 0 : index
    %c0_45 = arith.constant 0 : index
    %58 = vector.load %arg4[%c0_44, %c0_45] : memref<1x256xf32, #tpu.memory_space<vmem>>, vector<1x256xf32>
    %59 = vector.shape_cast %58 : vector<1x256xf32> to vector<256xf32>
    %60 = vector.shape_cast %59 : vector<256xf32> to vector<1x256xf32>
    %61 = vector.broadcast %60 : vector<1x256xf32> to vector<64x256xf32>
    %62 = arith.addf %57, %61 : vector<64x256xf32>
    %cst_46 = arith.constant 0.000000e+00 : f32
    %63 = vector.broadcast %cst_46 : f32 to vector<64x256xf32>
    %64 = arith.maximumf %62, %63 : vector<64x256xf32>
    %65 = arith.truncf %64 : vector<64x256xf32> to vector<64x256xbf16>
    %c0_47 = arith.constant 0 : index
    %c0_48 = arith.constant 0 : index
    %66 = vector.load %arg5[%c0_47, %c0_48] : memref<256x576xbf16, #tpu.memory_space<vmem>>, vector<256x576xbf16>
    %cst_49 = arith.constant dense<0.000000e+00> : vector<64x576xf32>
    %67 = tpu.matmul %65, %66, %cst_49 {dimension_numbers = #tpu.dot_dimension_numbers<[1], [0], [0], [1], [0, 0, 1, 1], [], []>} : vector<64x256xbf16>, vector<256x576xbf16>, vector<64x576xf32> -> vector<64x576xf32>
    %c0_50 = arith.constant 0 : index
    %c0_51 = arith.constant 0 : index
    %68 = vector.load %arg6[%c0_50, %c0_51] : memref<1x576xf32, #tpu.memory_space<vmem>>, vector<1x576xf32>
    %69 = vector.shape_cast %68 : vector<1x576xf32> to vector<576xf32>
    %70 = vector.shape_cast %69 : vector<576xf32> to vector<1x576xf32>
    %71 = vector.broadcast %70 : vector<1x576xf32> to vector<64x576xf32>
    %72 = arith.addf %67, %71 : vector<64x576xf32>
    %cst_52 = arith.constant 2.500000e-01 : f32
    %73 = vector.broadcast %cst_52 : f32 to vector<64x576xf32>
    %74 = arith.mulf %72, %73 : vector<64x576xf32>
    %75 = vector.extract_strided_slice %74 {offsets = [0, 0], sizes = [64, 128], strides = [1, 1]} : vector<64x576xf32> to vector<64x128xf32>
    %76 = vector.extract_strided_slice %74 {offsets = [0, 128], sizes = [64, 128], strides = [1, 1]} : vector<64x576xf32> to vector<64x128xf32>
    %77 = vector.extract_strided_slice %74 {offsets = [0, 256], sizes = [64, 128], strides = [1, 1]} : vector<64x576xf32> to vector<64x128xf32>
    %78 = vector.extract_strided_slice %74 {offsets = [0, 384], sizes = [64, 128], strides = [1, 1]} : vector<64x576xf32> to vector<64x128xf32>
    %79 = vector.extract_strided_slice %74 {offsets = [0, 512], sizes = [64, 64], strides = [1, 1]} : vector<64x576xf32> to vector<64x64xf32>
    %80 = arith.maximumf %75, %76 : vector<64x128xf32>
    %81 = arith.maximumf %77, %78 : vector<64x128xf32>
    %82 = arith.maximumf %80, %81 : vector<64x128xf32>
    %83 = vector.extract_strided_slice %82 {offsets = [0, 0], sizes = [64, 64], strides = [1, 1]} : vector<64x128xf32> to vector<64x64xf32>
    %84 = vector.extract_strided_slice %82 {offsets = [0, 64], sizes = [64, 64], strides = [1, 1]} : vector<64x128xf32> to vector<64x64xf32>
    %85 = arith.maximumf %83, %84 : vector<64x64xf32>
    %86 = arith.maximumf %85, %79 : vector<64x64xf32>
    %87 = tpu.concatenate %86, %86 in 1 : vector<64x64xf32>, vector<64x64xf32> -> vector<64x128xf32>
    %88 = arith.subf %75, %87 : vector<64x128xf32>
    %89 = math.exp %88 : vector<64x128xf32>
    %90 = arith.subf %76, %87 : vector<64x128xf32>
    %91 = math.exp %90 : vector<64x128xf32>
    %92 = arith.subf %77, %87 : vector<64x128xf32>
    %93 = math.exp %92 : vector<64x128xf32>
    %94 = arith.subf %78, %87 : vector<64x128xf32>
    %95 = math.exp %94 : vector<64x128xf32>
    %96 = arith.subf %79, %86 : vector<64x64xf32>
    %97 = math.exp %96 : vector<64x64xf32>
    %98 = arith.addf %89, %91 : vector<64x128xf32>
    %99 = arith.addf %93, %95 : vector<64x128xf32>
    %100 = arith.addf %98, %99 : vector<64x128xf32>
    %101 = vector.extract_strided_slice %100 {offsets = [0, 0], sizes = [64, 64], strides = [1, 1]} : vector<64x128xf32> to vector<64x64xf32>
    %102 = vector.extract_strided_slice %100 {offsets = [0, 64], sizes = [64, 64], strides = [1, 1]} : vector<64x128xf32> to vector<64x64xf32>
    %103 = arith.addf %101, %102 : vector<64x64xf32>
    %104 = arith.addf %103, %97 : vector<64x64xf32>
    %105 = tpu.reciprocal %104 {approx = true} : vector<64x64xf32> -> vector<64x64xf32>
    %cst_53 = arith.constant 0.000000e+00 : f32
    %106 = vector.broadcast %cst_53 : f32 to vector<64x64xf32>
    %cst_54 = arith.constant 0.000000e+00 : f32
    %107 = vector.broadcast %cst_54 : f32 to vector<64x64xf32>
    %108 = vector.extract_strided_slice %89 {offsets = [0, 0], sizes = [64, 64], strides = [1, 1]} : vector<64x128xf32> to vector<64x64xf32>
    %c0_i32_55 = arith.constant 0 : i32
    %109 = arith.addi %0, %c0_i32_55 : i32
    %c0_56 = arith.constant 0 : index
    %110 = arith.index_cast %109 : i32 to index
    %c0_57 = arith.constant 0 : index
    %c0_58 = arith.constant 0 : index
    %111 = vector.load %arg7[%c0_56, %110, %c0_57, %c0_58] : memref<1x10x10x2xf32, #tpu.memory_space<vmem>>, vector<1x8x8x2xf32>
    %112 = vector.shape_cast %111 : vector<1x8x8x2xf32> to vector<8x8x2xf32>
    %113 = vector.shape_cast %112 : vector<8x8x2xf32> to vector<64x2xf32>
    %114 = vector.extract_strided_slice %113 {offsets = [0, 0], sizes = [64, 1], strides = [1, 1]} : vector<64x2xf32> to vector<64x1xf32>
    %115 = vector.broadcast %114 : vector<64x1xf32> to vector<64x64xf32>
    %116 = arith.mulf %108, %115 : vector<64x64xf32>
    %117 = arith.addf %106, %116 : vector<64x64xf32>
    %118 = vector.extract_strided_slice %113 {offsets = [0, 1], sizes = [64, 1], strides = [1, 1]} : vector<64x2xf32> to vector<64x1xf32>
    %119 = vector.broadcast %118 : vector<64x1xf32> to vector<64x64xf32>
    %120 = arith.mulf %108, %119 : vector<64x64xf32>
    %121 = arith.addf %107, %120 : vector<64x64xf32>
    %122 = vector.extract_strided_slice %89 {offsets = [0, 64], sizes = [64, 64], strides = [1, 1]} : vector<64x128xf32> to vector<64x64xf32>
    %c0_i32_59 = arith.constant 0 : i32
    %123 = arith.addi %0, %c0_i32_59 : i32
    %c0_60 = arith.constant 0 : index
    %124 = arith.index_cast %123 : i32 to index
    %c1_61 = arith.constant 1 : index
    %c0_62 = arith.constant 0 : index
    %125 = vector.load %arg7[%c0_60, %124, %c1_61, %c0_62] : memref<1x10x10x2xf32, #tpu.memory_space<vmem>>, vector<1x8x8x2xf32>
    %126 = vector.shape_cast %125 : vector<1x8x8x2xf32> to vector<8x8x2xf32>
    %127 = vector.shape_cast %126 : vector<8x8x2xf32> to vector<64x2xf32>
    %128 = vector.extract_strided_slice %127 {offsets = [0, 0], sizes = [64, 1], strides = [1, 1]} : vector<64x2xf32> to vector<64x1xf32>
    %129 = vector.broadcast %128 : vector<64x1xf32> to vector<64x64xf32>
    %130 = arith.mulf %122, %129 : vector<64x64xf32>
    %131 = arith.addf %117, %130 : vector<64x64xf32>
    %132 = vector.extract_strided_slice %127 {offsets = [0, 1], sizes = [64, 1], strides = [1, 1]} : vector<64x2xf32> to vector<64x1xf32>
    %133 = vector.broadcast %132 : vector<64x1xf32> to vector<64x64xf32>
    %134 = arith.mulf %122, %133 : vector<64x64xf32>
    %135 = arith.addf %121, %134 : vector<64x64xf32>
    %136 = vector.extract_strided_slice %91 {offsets = [0, 0], sizes = [64, 64], strides = [1, 1]} : vector<64x128xf32> to vector<64x64xf32>
    %c0_i32_63 = arith.constant 0 : i32
    %137 = arith.addi %0, %c0_i32_63 : i32
    %c0_64 = arith.constant 0 : index
    %138 = arith.index_cast %137 : i32 to index
    %c2_65 = arith.constant 2 : index
    %c0_66 = arith.constant 0 : index
    %139 = vector.load %arg7[%c0_64, %138, %c2_65, %c0_66] : memref<1x10x10x2xf32, #tpu.memory_space<vmem>>, vector<1x8x8x2xf32>
    %140 = vector.shape_cast %139 : vector<1x8x8x2xf32> to vector<8x8x2xf32>
    %141 = vector.shape_cast %140 : vector<8x8x2xf32> to vector<64x2xf32>
    %142 = vector.extract_strided_slice %141 {offsets = [0, 0], sizes = [64, 1], strides = [1, 1]} : vector<64x2xf32> to vector<64x1xf32>
    %143 = vector.broadcast %142 : vector<64x1xf32> to vector<64x64xf32>
    %144 = arith.mulf %136, %143 : vector<64x64xf32>
    %145 = arith.addf %131, %144 : vector<64x64xf32>
    %146 = vector.extract_strided_slice %141 {offsets = [0, 1], sizes = [64, 1], strides = [1, 1]} : vector<64x2xf32> to vector<64x1xf32>
    %147 = vector.broadcast %146 : vector<64x1xf32> to vector<64x64xf32>
    %148 = arith.mulf %136, %147 : vector<64x64xf32>
    %149 = arith.addf %135, %148 : vector<64x64xf32>
    %150 = vector.extract_strided_slice %91 {offsets = [0, 64], sizes = [64, 64], strides = [1, 1]} : vector<64x128xf32> to vector<64x64xf32>
    %c1_i32_67 = arith.constant 1 : i32
    %151 = arith.addi %0, %c1_i32_67 : i32
    %c0_68 = arith.constant 0 : index
    %152 = arith.index_cast %151 : i32 to index
    %c0_69 = arith.constant 0 : index
    %c0_70 = arith.constant 0 : index
    %153 = vector.load %arg7[%c0_68, %152, %c0_69, %c0_70] : memref<1x10x10x2xf32, #tpu.memory_space<vmem>>, vector<1x8x8x2xf32>
    %154 = vector.shape_cast %153 : vector<1x8x8x2xf32> to vector<8x8x2xf32>
    %155 = vector.shape_cast %154 : vector<8x8x2xf32> to vector<64x2xf32>
    %156 = vector.extract_strided_slice %155 {offsets = [0, 0], sizes = [64, 1], strides = [1, 1]} : vector<64x2xf32> to vector<64x1xf32>
    %157 = vector.broadcast %156 : vector<64x1xf32> to vector<64x64xf32>
    %158 = arith.mulf %150, %157 : vector<64x64xf32>
    %159 = arith.addf %145, %158 : vector<64x64xf32>
    %160 = vector.extract_strided_slice %155 {offsets = [0, 1], sizes = [64, 1], strides = [1, 1]} : vector<64x2xf32> to vector<64x1xf32>
    %161 = vector.broadcast %160 : vector<64x1xf32> to vector<64x64xf32>
    %162 = arith.mulf %150, %161 : vector<64x64xf32>
    %163 = arith.addf %149, %162 : vector<64x64xf32>
    %164 = vector.extract_strided_slice %93 {offsets = [0, 0], sizes = [64, 64], strides = [1, 1]} : vector<64x128xf32> to vector<64x64xf32>
    %c1_i32_71 = arith.constant 1 : i32
    %165 = arith.addi %0, %c1_i32_71 : i32
    %c0_72 = arith.constant 0 : index
    %166 = arith.index_cast %165 : i32 to index
    %c1_73 = arith.constant 1 : index
    %c0_74 = arith.constant 0 : index
    %167 = vector.load %arg7[%c0_72, %166, %c1_73, %c0_74] : memref<1x10x10x2xf32, #tpu.memory_space<vmem>>, vector<1x8x8x2xf32>
    %168 = vector.shape_cast %167 : vector<1x8x8x2xf32> to vector<8x8x2xf32>
    %169 = vector.shape_cast %168 : vector<8x8x2xf32> to vector<64x2xf32>
    %170 = vector.extract_strided_slice %169 {offsets = [0, 0], sizes = [64, 1], strides = [1, 1]} : vector<64x2xf32> to vector<64x1xf32>
    %171 = vector.broadcast %170 : vector<64x1xf32> to vector<64x64xf32>
    %172 = arith.mulf %164, %171 : vector<64x64xf32>
    %173 = arith.addf %159, %172 : vector<64x64xf32>
    %174 = vector.extract_strided_slice %169 {offsets = [0, 1], sizes = [64, 1], strides = [1, 1]} : vector<64x2xf32> to vector<64x1xf32>
    %175 = vector.broadcast %174 : vector<64x1xf32> to vector<64x64xf32>
    %176 = arith.mulf %164, %175 : vector<64x64xf32>
    %177 = arith.addf %163, %176 : vector<64x64xf32>
    %178 = vector.extract_strided_slice %93 {offsets = [0, 64], sizes = [64, 64], strides = [1, 1]} : vector<64x128xf32> to vector<64x64xf32>
    %c1_i32_75 = arith.constant 1 : i32
    %179 = arith.addi %0, %c1_i32_75 : i32
    %c0_76 = arith.constant 0 : index
    %180 = arith.index_cast %179 : i32 to index
    %c2_77 = arith.constant 2 : index
    %c0_78 = arith.constant 0 : index
    %181 = vector.load %arg7[%c0_76, %180, %c2_77, %c0_78] : memref<1x10x10x2xf32, #tpu.memory_space<vmem>>, vector<1x8x8x2xf32>
    %182 = vector.shape_cast %181 : vector<1x8x8x2xf32> to vector<8x8x2xf32>
    %183 = vector.shape_cast %182 : vector<8x8x2xf32> to vector<64x2xf32>
    %184 = vector.extract_strided_slice %183 {offsets = [0, 0], sizes = [64, 1], strides = [1, 1]} : vector<64x2xf32> to vector<64x1xf32>
    %185 = vector.broadcast %184 : vector<64x1xf32> to vector<64x64xf32>
    %186 = arith.mulf %178, %185 : vector<64x64xf32>
    %187 = arith.addf %173, %186 : vector<64x64xf32>
    %188 = vector.extract_strided_slice %183 {offsets = [0, 1], sizes = [64, 1], strides = [1, 1]} : vector<64x2xf32> to vector<64x1xf32>
    %189 = vector.broadcast %188 : vector<64x1xf32> to vector<64x64xf32>
    %190 = arith.mulf %178, %189 : vector<64x64xf32>
    %191 = arith.addf %177, %190 : vector<64x64xf32>
    %192 = vector.extract_strided_slice %95 {offsets = [0, 0], sizes = [64, 64], strides = [1, 1]} : vector<64x128xf32> to vector<64x64xf32>
    %c2_i32_79 = arith.constant 2 : i32
    %193 = arith.addi %0, %c2_i32_79 : i32
    %c0_80 = arith.constant 0 : index
    %194 = arith.index_cast %193 : i32 to index
    %c0_81 = arith.constant 0 : index
    %c0_82 = arith.constant 0 : index
    %195 = vector.load %arg7[%c0_80, %194, %c0_81, %c0_82] : memref<1x10x10x2xf32, #tpu.memory_space<vmem>>, vector<1x8x8x2xf32>
    %196 = vector.shape_cast %195 : vector<1x8x8x2xf32> to vector<8x8x2xf32>
    %197 = vector.shape_cast %196 : vector<8x8x2xf32> to vector<64x2xf32>
    %198 = vector.extract_strided_slice %197 {offsets = [0, 0], sizes = [64, 1], strides = [1, 1]} : vector<64x2xf32> to vector<64x1xf32>
    %199 = vector.broadcast %198 : vector<64x1xf32> to vector<64x64xf32>
    %200 = arith.mulf %192, %199 : vector<64x64xf32>
    %201 = arith.addf %187, %200 : vector<64x64xf32>
    %202 = vector.extract_strided_slice %197 {offsets = [0, 1], sizes = [64, 1], strides = [1, 1]} : vector<64x2xf32> to vector<64x1xf32>
    %203 = vector.broadcast %202 : vector<64x1xf32> to vector<64x64xf32>
    %204 = arith.mulf %192, %203 : vector<64x64xf32>
    %205 = arith.addf %191, %204 : vector<64x64xf32>
    %206 = vector.extract_strided_slice %95 {offsets = [0, 64], sizes = [64, 64], strides = [1, 1]} : vector<64x128xf32> to vector<64x64xf32>
    %c2_i32_83 = arith.constant 2 : i32
    %207 = arith.addi %0, %c2_i32_83 : i32
    %c0_84 = arith.constant 0 : index
    %208 = arith.index_cast %207 : i32 to index
    %c1_85 = arith.constant 1 : index
    %c0_86 = arith.constant 0 : index
    %209 = vector.load %arg7[%c0_84, %208, %c1_85, %c0_86] : memref<1x10x10x2xf32, #tpu.memory_space<vmem>>, vector<1x8x8x2xf32>
    %210 = vector.shape_cast %209 : vector<1x8x8x2xf32> to vector<8x8x2xf32>
    %211 = vector.shape_cast %210 : vector<8x8x2xf32> to vector<64x2xf32>
    %212 = vector.extract_strided_slice %211 {offsets = [0, 0], sizes = [64, 1], strides = [1, 1]} : vector<64x2xf32> to vector<64x1xf32>
    %213 = vector.broadcast %212 : vector<64x1xf32> to vector<64x64xf32>
    %214 = arith.mulf %206, %213 : vector<64x64xf32>
    %215 = arith.addf %201, %214 : vector<64x64xf32>
    %216 = vector.extract_strided_slice %211 {offsets = [0, 1], sizes = [64, 1], strides = [1, 1]} : vector<64x2xf32> to vector<64x1xf32>
    %217 = vector.broadcast %216 : vector<64x1xf32> to vector<64x64xf32>
    %218 = arith.mulf %206, %217 : vector<64x64xf32>
    %219 = arith.addf %205, %218 : vector<64x64xf32>
    %c2_i32_87 = arith.constant 2 : i32
    %220 = arith.addi %0, %c2_i32_87 : i32
    %c0_88 = arith.constant 0 : index
    %221 = arith.index_cast %220 : i32 to index
    %c2_89 = arith.constant 2 : index
    %c0_90 = arith.constant 0 : index
    %222 = vector.load %arg7[%c0_88, %221, %c2_89, %c0_90] : memref<1x10x10x2xf32, #tpu.memory_space<vmem>>, vector<1x8x8x2xf32>
    %223 = vector.shape_cast %222 : vector<1x8x8x2xf32> to vector<8x8x2xf32>
    %224 = vector.shape_cast %223 : vector<8x8x2xf32> to vector<64x2xf32>
    %225 = vector.extract_strided_slice %224 {offsets = [0, 0], sizes = [64, 1], strides = [1, 1]} : vector<64x2xf32> to vector<64x1xf32>
    %226 = vector.broadcast %225 : vector<64x1xf32> to vector<64x64xf32>
    %227 = arith.mulf %97, %226 : vector<64x64xf32>
    %228 = arith.addf %215, %227 : vector<64x64xf32>
    %229 = vector.extract_strided_slice %224 {offsets = [0, 1], sizes = [64, 1], strides = [1, 1]} : vector<64x2xf32> to vector<64x1xf32>
    %230 = vector.broadcast %229 : vector<64x1xf32> to vector<64x64xf32>
    %231 = arith.mulf %97, %230 : vector<64x64xf32>
    %232 = arith.addf %219, %231 : vector<64x64xf32>
    %cst_91 = arith.constant 8.000000e+00 : f32
    %233 = vector.broadcast %cst_91 : f32 to vector<64x64xf32>
    %234 = arith.mulf %105, %233 : vector<64x64xf32>
    %235 = arith.mulf %228, %234 : vector<64x64xf32>
    %236 = arith.mulf %232, %234 : vector<64x64xf32>
    %237 = tpu.concatenate %235, %236 in 1 : vector<64x64xf32>, vector<64x64xf32> -> vector<64x128xf32>
    %c0_92 = arith.constant 0 : index
    %c0_93 = arith.constant 0 : index
    %c0_94 = arith.constant 0 : index
    %238 = vector.load %arg8[%c0_92, %c0_93, %c0_94] : memref<1x64x128xf32, #tpu.memory_space<vmem>>, vector<1x64x128xf32>
    %239 = vector.shape_cast %238 : vector<1x64x128xf32> to vector<64x128xf32>
    %240 = vector.shape_cast %237 : vector<64x128xf32> to vector<1x64x128xf32>
    tpu.vector_store %arg8[%c0_92, %c0_93, %c0_94], %240 {strides = array<i32>} : memref<1x64x128xf32, #tpu.memory_space<vmem>>, vector<1x64x128xf32>,
    return
  }
  func.func @transform_0(%arg0: i32, %arg1: i32) -> (i32, i32, i32, i32) {
    %c0_i32 = arith.constant 0 : i32
    %c0_i32_0 = arith.constant 0 : i32
    %c0_i32_1 = arith.constant 0 : i32
    %c0_i32_2 = arith.constant 0 : i32
    return %arg0, %c0_i32, %c0_i32_0, %c0_i32_1 : i32, i32, i32, i32
  }
  func.func @transform_1(%arg0: i32, %arg1: i32) -> (i32, i32) {
    %c0_i32 = arith.constant 0 : i32
    %c0_i32_0 = arith.constant 0 : i32
    %c0_i32_1 = arith.constant 0 : i32
    return %c0_i32, %c0_i32_0 : i32, i32
  }
  func.func @transform_2(%arg0: i32, %arg1: i32) -> (i32, i32) {
    %c0_i32 = arith.constant 0 : i32
    %c0_i32_0 = arith.constant 0 : i32
    %c0_i32_1 = arith.constant 0 : i32
    return %c0_i32, %c0_i32_0 : i32, i32
  }
  func.func @transform_3(%arg0: i32, %arg1: i32) -> (i32, i32) {
    %c0_i32 = arith.constant 0 : i32
    %c0_i32_0 = arith.constant 0 : i32
    %c0_i32_1 = arith.constant 0 : i32
    return %c0_i32, %c0_i32_0 : i32, i32
  }
  func.func @transform_4(%arg0: i32, %arg1: i32) -> (i32, i32) {
    %c0_i32 = arith.constant 0 : i32
    %c0_i32_0 = arith.constant 0 : i32
    %c0_i32_1 = arith.constant 0 : i32
    return %c0_i32, %c0_i32_0 : i32, i32
  }
  func.func @transform_5(%arg0: i32, %arg1: i32) -> (i32, i32, i32, i32) {
    %c0_i32 = arith.constant 0 : i32
    %c0_i32_0 = arith.constant 0 : i32
    %c0_i32_1 = arith.constant 0 : i32
    %c0_i32_2 = arith.constant 0 : i32
    return %arg0, %c0_i32, %c0_i32_0, %c0_i32_1 : i32, i32, i32, i32
  }
  func.func @transform_6(%arg0: i32, %arg1: i32) -> (i32, i32, i32) {
    %c0_i32 = arith.constant 0 : i32
    %c0_i32_0 = arith.constant 0 : i32
    return %arg0, %arg1, %c0_i32 : i32, i32, i32
  }
}

</mosaic_0001>

<llo_original>
// kernel: tpu_custom_call.1
$region0: #{tpu_custom_call.1}
  #allocation0 [shape = 'u32[]', space=smem, size = 0x4, offset = 0x4, fixed_abs, tag = 'smem constant byte address 0x4 - core index']
  #allocation1 [shape = 'u32[144,128]{1,0:T(1,128)}', space=vmem, size = 0x12000, scoped, tag = 'internal scratch']
  #allocation2 [shape = 'bf16[64,288]{1,0:T(8,128)(2,1)}', space=vmem, size = 0xc000, scoped, tag = 'scratch operand']
  %s0 = inlined_call_operand.vmem [shape: bf16[2,10,10,32], index: 0, kind: input, shape index: {}]
  %s1 = inlined_call_operand.vmem [shape: bf16[288,256], index: 1, kind: input, shape index: {}]
  %s2 = inlined_call_operand.vmem [shape: f32[1,256], index: 2, kind: input, shape index: {}]
  %s3 = inlined_call_operand.vmem [shape: bf16[256,576], index: 3, kind: input, shape index: {}]
  %s4 = inlined_call_operand.vmem [shape: f32[1,576], index: 4, kind: input, shape index: {}]
  %s5 = inlined_call_operand.vmem [shape: f32[2,10,10,2], index: 5, kind: input, shape index: {}]
  %s6 = inlined_call_operand.hbm [shape: f32[2,64,128], index: 6, kind: output, shape index: {}]
  %s7 = sld [smem:[#allocation0]]
  $region57: #{tpu_custom_call.1} parent=0
    _
  %s9 = ssub.s32 1, %s7
  %s10 = scalar_select 0, %s9, %s7
  $region1: #{tpu_custom_call.1} parent=0
    #allocation3 [shape = 'u8[65536]{0}', space=vmem, size = 0x10000, scoped, tag = 'output window, operand 0']
    #allocation4 [shape = 's32[2]{0}', space=sflag, size = 0x8, scoped, tag = 'scoped memory for tpu_custom_call.1']
    %11 = vsyncpa [#allocation4], 0
    %s12 = scalar_lea.sflag [#allocation4], 1
    %13 = vsyncpa %s12, 0
    loop: start=0, step=1, limit=4
    $region2: #{tpu_custom_call.1} parent=1 // loop_pre_header
      _
    $region3: #{tpu_custom_call.1} parent=1 // loop_header
      %s15 = sphi 0, %s19
      %p16 = scmp.ge.s32.totalorder %s15, 4
      %s22 = sphi 0, %s34
      %s23 = sphi 0, %s30
      %s24 = sphi 0, %s22
      %s25 = sphi 0, %s23
      %s26 = sphi 0, %s24
      %s27 = sphi 0, %s25
      %s37 = sphi 0, %s39
      %s40 = sphi 0, %s37
      %s41 = sphi 0, %s40
      %s57 = sphi 0, %s41
      %s61 = sphi 0, %s61
      %s63 = sphi 0, %s61
      %s64 = sphi 0, %s63
      %s78 = sphi 0, %s64
      %s82 = sphi 0, %s82
      %s84 = sphi 0, %s82
      %s85 = sphi 0, %s84
      %s99 = sphi 0, %s85
      %s103 = sphi 0, %s103
      %s105 = sphi 0, %s103
      %s106 = sphi 0, %s105
      %s120 = sphi 0, %s106
      %s124 = sphi 0, %s124
      %s126 = sphi 0, %s124
      %s127 = sphi 0, %s126
      %s141 = sphi 0, %s127
      %s147 = sphi 0, %s149
      %s150 = sphi 0, %s147
      %s151 = sphi 0, %s150
      %s167 = sphi 0, %s151
      %s175 = sphi 0, %s177
      %s178 = sphi 0, %s175
      %s179 = sphi 0, %s178
      %s195 = sphi 0, %s179
    $region4: #{tpu_custom_call.1} parent=1 // loop_header_branch
      %18 = sbr.rel (%p16) target = $region8
    $region5: #{tpu_custom_call.1} parent=1 // loop_body
      %s20 = ssub.s32 %s15, 1
      %s21 = ssub.s32 %s15, 2
      %s28 = sadd.s32 1, %s23
      %p29 = scmp.ge.s32.totalorder %s28, 1
      %s30 = scalar_select %p29, 0, %s28
      %s31 = sadd.s32 1, %s22
      %s32 = scalar_select %p29, %s31, %s22
      %p33 = scmp.ge.s32.totalorder %s32, 2
      %s34 = scalar_select %p33, 0, %s32
      %s35 = ssub.s32 %s22, %s34
      %p36 = scmp.eq.s32.totalorder %s35, 0
      %s38 = sadd.s32 %s37, 1
      %s39 = scalar_select %p36, %s37, %s38
      %p42 = pneg %p36
      %p43 = scmp.eq.s32.totalorder %s15, 1
      %p44 = por %p42, %p43
      %p45 = scmp.ne.s32.totalorder %s37, %s40
      %p46 = scmp.eq.s32.totalorder %s15, 0
      %p47 = por %p45, %p46
      %p48 = scmp.ne.s32.totalorder %s37, %s40
      %p49 = scmp.eq.s32.totalorder %s20, 1
      %p50 = por %p48, %p49
      %p51 = scmp.ne.s32.totalorder %s40, %s41
      %p52 = scmp.eq.s32.totalorder %s20, 0
      %p53 = por %p51, %p52
      %p54 = scmp.ne.s32.totalorder %s40, %s41
      %p55 = scmp.eq.s32.totalorder %s21, 1
      %p56 = por %p54, %p55
      %p58 = scmp.ne.s32.totalorder %s41, %s57
      %p59 = scmp.eq.s32.totalorder %s21, 0
      %p60 = por %p58, %p59
      %s62 = sadd.s32 %s61, 1
      %p65 = scmp.eq.s32.totalorder %s15, 1
      %p66 = scmp.ne.s32.totalorder %s61, %s63
      %p67 = scmp.eq.s32.totalorder %s15, 0
      %p68 = por %p66, %p67
      %p69 = scmp.ne.s32.totalorder %s61, %s63
      %p70 = scmp.eq.s32.totalorder %s20, 1
      %p71 = por %p69, %p70
      %p72 = scmp.ne.s32.totalorder %s63, %s64
      %p73 = scmp.eq.s32.totalorder %s20, 0
      %p74 = por %p72, %p73
      %p75 = scmp.ne.s32.totalorder %s63, %s64
      %p76 = scmp.eq.s32.totalorder %s21, 1
      %p77 = por %p75, %p76
      %p79 = scmp.ne.s32.totalorder %s64, %s78
      %p80 = scmp.eq.s32.totalorder %s21, 0
      %p81 = por %p79, %p80
      %s83 = sadd.s32 %s82, 1
      %p86 = scmp.eq.s32.totalorder %s15, 1
      %p87 = scmp.ne.s32.totalorder %s82, %s84
      %p88 = scmp.eq.s32.totalorder %s15, 0
      %p89 = por %p87, %p88
      %p90 = scmp.ne.s32.totalorder %s82, %s84
      %p91 = scmp.eq.s32.totalorder %s20, 1
      %p92 = por %p90, %p91
      %p93 = scmp.ne.s32.totalorder %s84, %s85
      %p94 = scmp.eq.s32.totalorder %s20, 0
      %p95 = por %p93, %p94
      %p96 = scmp.ne.s32.totalorder %s84, %s85
      %p97 = scmp.eq.s32.totalorder %s21, 1
      %p98 = por %p96, %p97
      %p100 = scmp.ne.s32.totalorder %s85, %s99
      %p101 = scmp.eq.s32.totalorder %s21, 0
      %p102 = por %p100, %p101
      %s104 = sadd.s32 %s103, 1
      %p107 = scmp.eq.s32.totalorder %s15, 1
      %p108 = scmp.ne.s32.totalorder %s103, %s105
      %p109 = scmp.eq.s32.totalorder %s15, 0
      %p110 = por %p108, %p109
      %p111 = scmp.ne.s32.totalorder %s103, %s105
      %p112 = scmp.eq.s32.totalorder %s20, 1
      %p113 = por %p111, %p112
      %p114 = scmp.ne.s32.totalorder %s105, %s106
      %p115 = scmp.eq.s32.totalorder %s20, 0
      %p116 = por %p114, %p115
      %p117 = scmp.ne.s32.totalorder %s105, %s106
      %p118 = scmp.eq.s32.totalorder %s21, 1
      %p119 = por %p117, %p118
      %p121 = scmp.ne.s32.totalorder %s106, %s120
      %p122 = scmp.eq.s32.totalorder %s21, 0
      %p123 = por %p121, %p122
      %s125 = sadd.s32 %s124, 1
      %p128 = scmp.eq.s32.totalorder %s15, 1
      %p129 = scmp.ne.s32.totalorder %s124, %s126
      %p130 = scmp.eq.s32.totalorder %s15, 0
      %p131 = por %p129, %p130
      %p132 = scmp.ne.s32.totalorder %s124, %s126
      %p133 = scmp.eq.s32.totalorder %s20, 1
      %p134 = por %p132, %p133
      %p135 = scmp.ne.s32.totalorder %s126, %s127
      %p136 = scmp.eq.s32.totalorder %s20, 0
      %p137 = por %p135, %p136
      %p138 = scmp.ne.s32.totalorder %s126, %s127
      %p139 = scmp.eq.s32.totalorder %s21, 1
      %p140 = por %p138, %p139
      %p142 = scmp.ne.s32.totalorder %s127, %s141
      %p143 = scmp.eq.s32.totalorder %s21, 0
      %p144 = por %p142, %p143
      %s145 = ssub.s32 %s22, %s34
      %p146 = scmp.eq.s32.totalorder %s145, 0
      %s148 = sadd.s32 %s147, 1
      %s149 = scalar_select %p146, %s147, %s148
      %p152 = pneg %p146
      %p153 = scmp.eq.s32.totalorder %s15, 1
      %p154 = por %p152, %p153
      %p155 = scmp.ne.s32.totalorder %s147, %s150
      %p156 = scmp.eq.s32.totalorder %s15, 0
      %p157 = por %p155, %p156
      %p158 = scmp.ne.s32.totalorder %s147, %s150
      %p159 = scmp.eq.s32.totalorder %s20, 1
      %p160 = por %p158, %p159
      %p161 = scmp.ne.s32.totalorder %s150, %s151
      %p162 = scmp.eq.s32.totalorder %s20, 0
      %p163 = por %p161, %p162
      %p164 = scmp.ne.s32.totalorder %s150, %s151
      %p165 = scmp.eq.s32.totalorder %s21, 1
      %p166 = por %p164, %p165
      %p168 = scmp.ne.s32.totalorder %s151, %s167
      %p169 = scmp.eq.s32.totalorder %s21, 0
      %p170 = por %p168, %p169
      %s171 = ssub.s32 %s22, %s34
      %s172 = ssub.s32 %s23, %s30
      %s173 = sor.u32 %s171, %s172
      %p174 = scmp.eq.s32.totalorder %s173, 0
      %s176 = sadd.s32 %s175, 1
      %s177 = scalar_select %p174, %s175, %s176
      %p180 = pneg %p174
      %p181 = scmp.eq.s32.totalorder %s15, 1
      %p182 = por %p180, %p181
      %p183 = scmp.ne.s32.totalorder %s175, %s178
      %p184 = scmp.eq.s32.totalorder %s15, 0
      %p185 = por %p183, %p184
      %p186 = scmp.ne.s32.totalorder %s175, %s178
      %p187 = scmp.eq.s32.totalorder %s20, 1
      %p188 = por %p186, %p187
      %p189 = scmp.ne.s32.totalorder %s178, %s179
      %p190 = scmp.eq.s32.totalorder %s20, 0
      %p191 = por %p189, %p190
      %p192 = scmp.ne.s32.totalorder %s178, %s179
      %p193 = scmp.eq.s32.totalorder %s21, 1
      %p194 = por %p192, %p193
      %p196 = scmp.ne.s32.totalorder %s179, %s195
      %p197 = scmp.eq.s32.totalorder %s21, 0
      %p198 = por %p196, %p197
      %p199 = scmp.le.s32.totalorder 1, %s15
      %p200 = scmp.lt.s32.totalorder %s15, 3
      %p201 = pnand %p199, %p200
      %p202 = pneg %p201
      // Predicated region
      $region9: #{tpu_custom_call.1} parent=5 // pred_check
        _
      $region10: #{tpu_custom_call.1} parent=5 // pred_check_branch
        %204 = sbr.rel (%p201) target = $region12
      $region11: #{tpu_custom_call.1} parent=5 // pred_region
        %s205 = ssub.s32 %s15, 1
        // Predicated region
        $region13: #{tpu_custom_call.1} parent=11 // pred_check
          %p206 = pneg %p74
        $region14: #{tpu_custom_call.1} parent=11 // pred_check_branch
          %208 = sbr.rel (%p206) target = $region16
        $region15: #{tpu_custom_call.1} parent=11 // pred_region
          _
        $region16: #{tpu_custom_call.1} parent=11 // pred_fallthru
          _
        // Predicated region
        $region17: #{tpu_custom_call.1} parent=11 // pred_check
          %p209 = pneg %p95
        $region18: #{tpu_custom_call.1} parent=11 // pred_check_branch
          %211 = sbr.rel (%p209) target = $region20
        $region19: #{tpu_custom_call.1} parent=11 // pred_region
          _
        $region20: #{tpu_custom_call.1} parent=11 // pred_fallthru
          _
        // Predicated region
        $region21: #{tpu_custom_call.1} parent=11 // pred_check
          %p212 = pneg %p116
        $region22: #{tpu_custom_call.1} parent=11 // pred_check_branch
          %214 = sbr.rel (%p212) target = $region24
        $region23: #{tpu_custom_call.1} parent=11 // pred_region
          _
        $region24: #{tpu_custom_call.1} parent=11 // pred_fallthru
          _
        // Predicated region
        $region25: #{tpu_custom_call.1} parent=11 // pred_check
          %p215 = pneg %p137
        $region26: #{tpu_custom_call.1} parent=11 // pred_check_branch
          %217 = sbr.rel (%p215) target = $region28
        $region27: #{tpu_custom_call.1} parent=11 // pred_region
          _
        $region28: #{tpu_custom_call.1} parent=11 // pred_fallthru
          _
      $region12: #{tpu_custom_call.1} parent=5 // pred_fallthru
        _
      %p218 = scmp.lt.s32.totalorder %s15, 2
      // Predicated region
      $region29: #{tpu_custom_call.1} parent=5 // pred_check
        %p219 = pneg %p218
      $region30: #{tpu_custom_call.1} parent=5 // pred_check_branch
        %221 = sbr.rel (%p219) target = $region32
      $region31: #{tpu_custom_call.1} parent=5 // pred_region
        // Predicated region
        $region33: #{tpu_custom_call.1} parent=31 // pred_check
          %p222 = pneg %p47
        $region34: #{tpu_custom_call.1} parent=31 // pred_check_branch
          %224 = sbr.rel (%p222) target = $region36
        $region35: #{tpu_custom_call.1} parent=31 // pred_region
          %p225 = scmp.lt.s32.totalorder %s22, 1
          %s226 = scalar_select %p225, %s22, 1
          %s227 = smul.addr %s226, 20
          %s228 = smul.addr %s227, 4
          %s229 = scalar_lea.vmem %s0, %s228
        $region36: #{tpu_custom_call.1} parent=31 // pred_fallthru
          _
        // Predicated region
        $region37: #{tpu_custom_call.1} parent=31 // pred_check
          %p230 = pneg %p157
        $region38: #{tpu_custom_call.1} parent=31 // pred_check_branch
          %232 = sbr.rel (%p230) target = $region40
        $region39: #{tpu_custom_call.1} parent=31 // pred_region
          %p233 = scmp.lt.s32.totalorder %s22, 1
          %s234 = scalar_select %p233, %s22, 1
          %s235 = smul.addr %s234, 20
          %s236 = smul.addr %s235, 8
          %s237 = scalar_lea.vmem %s5, %s236
        $region40: #{tpu_custom_call.1} parent=31 // pred_fallthru
          _
      $region32: #{tpu_custom_call.1} parent=5 // pred_fallthru
        _
      %p238 = scmp.le.s32.totalorder 1, %s15
      %p239 = scmp.lt.s32.totalorder %s15, 3
      %p240 = pnand %p238, %p239
      %p241 = pneg %p240
      // Predicated region
      $region41: #{tpu_custom_call.1} parent=5 // pred_check
        _
      $region42: #{tpu_custom_call.1} parent=5 // pred_check_branch
        %243 = sbr.rel (%p240) target = $region44
      $region43: #{tpu_custom_call.1} parent=5 // pred_region
        %s244 = ssub.s32 %s15, 1
        %p245 = scmp.lt.s32.totalorder %s24, 1
        %s246 = scalar_select %p245, %s24, 1
        %s247 = smul.addr %s246, 20
        %s248 = smul.addr %s247, 4
        %s249 = scalar_lea.vmem %s0, %s248
        %p250 = pneg %p53
        %p251 = pneg %p50
        %p252 = pneg %p74
        %p253 = pneg %p71
        %p254 = pneg %p95
        %p255 = pneg %p92
        %p256 = pneg %p116
        %p257 = pneg %p113
        %p258 = pneg %p137
        %p259 = pneg %p134
        %p260 = scmp.lt.s32.totalorder %s24, 1
        %s261 = scalar_select %p260, %s24, 1
        %s262 = smul.addr %s261, 20
        %s263 = smul.addr %s262, 8
        %s264 = scalar_lea.vmem %s5, %s263
        %p265 = pneg %p163
        %p266 = pneg %p160
        %p267 = pneg %p191
        %p268 = pneg %p188
        %s269 = sand.u32 %s178, 1
        %s270 = scalar_lea.sflag [#allocation4], %s269
        %s271 = sand.u32 %s178, 1
        %s272 = smul.addr %s271, 64
        %s273 = scalar_lea.vmem [#allocation3], %s272
        %p274 = scmp.lt.s32.totalorder %s24, 1
        %s275 = scalar_select %p274, %s24, 1
        %s276 = smul.addr %s275, 20
        %s277 = smul.addr %s276, 4
        %s278 = scalar_lea.vmem %s0, %s277
        %p279 = scmp.lt.s32.totalorder %s24, 1
        %s280 = scalar_select %p279, %s24, 1
        %s281 = smul.addr %s280, 20
        %s282 = smul.addr %s281, 8
        %s283 = scalar_lea.vmem %s5, %s282
        %s284 = smul.u32 8, %s25
        %s286 = smul.u32 %s25, 8
        %s287 = smul.u32 %s286, 2
        %s288 = smul.addr %s287, 4
        %s289 = scalar_lea.vmem %s278, %s288
        %v290 = vld [vmem:[%s289] sm:$0xf]
        %v291 = vld [vmem:[%s289 + $0x8] sm:$0xf]
        %v292 = vld [vmem:[%s289 + $0x10] sm:$0xf]
        %v293 = vld [vmem:[%s289 + $0x18] sm:$0xf]
        %v294 = vld [vmem:[%s289 + $0x20] sm:$0xf]
        %v295 = vld [vmem:[%s289 + $0x28] sm:$0xf]
        %v296 = vld [vmem:[%s289 + $0x30] sm:$0xf]
        %v297 = vld [vmem:[%s289 + $0x38] sm:$0xf]
        %vm298 = vcmask 257024
        %299 = vst.msk [vmem:[#allocation2] sm:$0xf] %vm298, %v290
        %300 = vst.msk [vmem:[#allocation2 + $0xc] sm:$0xf] %vm298, %v291
        %301 = vst.msk [vmem:[#allocation2 + $0x18] sm:$0xf] %vm298, %v292
        %302 = vst.msk [vmem:[#allocation2 + $0x24] sm:$0xf] %vm298, %v293
        %303 = vst.msk [vmem:[#allocation2 + $0x30] sm:$0xf] %vm298, %v294
        %304 = vst.msk [vmem:[#allocation2 + $0x3c] sm:$0xf] %vm298, %v295
        %305 = vst.msk [vmem:[#allocation2 + $0x48] sm:$0xf] %vm298, %v296
        %306 = vst.msk [vmem:[#allocation2 + $0x54] sm:$0xf] %vm298, %v297
        %v307 = vld [vmem:[%s289] sm:$0xf]
        %v308 = vld [vmem:[%s289 + $0x4] sm:$0x1]
        %v309 = vld [vmem:[%s289 + $0x8] sm:$0xf]
        %v310 = vld [vmem:[%s289 + $0xc] sm:$0x1]
        %v311 = vld [vmem:[%s289 + $0x10] sm:$0xf]
        %v312 = vld [vmem:[%s289 + $0x14] sm:$0x1]
        %v313 = vld [vmem:[%s289 + $0x18] sm:$0xf]
        %v314 = vld [vmem:[%s289 + $0x1c] sm:$0x1]
        %v315 = vld [vmem:[%s289 + $0x20] sm:$0xf]
        %v316 = vld [vmem:[%s289 + $0x24] sm:$0x1]
        %v317 = vld [vmem:[%s289 + $0x28] sm:$0xf]
        %v318 = vld [vmem:[%s289 + $0x2c] sm:$0x1]
        %v319 = vld [vmem:[%s289 + $0x30] sm:$0xf]
        %v320 = vld [vmem:[%s289 + $0x34] sm:$0x1]
        %v321 = vld [vmem:[%s289 + $0x38] sm:$0xf]
        %v322 = vld [vmem:[%s289 + $0x3c] sm:$0x1]
        %vm323 = vsmask.f32 3328
        %vm324 = vsmask.f32 7440
        %vm325 = vmor %vm323, %vm324
        %v327 = vshrl.u32 %v307, 16
        %v329 = vrot.slane %v327, 4
        %v330 = vshll.u32 %v307, 16
        %v332 = vrot.slane %v330, 5
        %v333 = vor.u32 %v329, %v332
        %v334 = vrot.slane %v333, 4
        %v336 = vshll.u32 %v308, 16
        %v338 = vrot.slane %v336, 5
        %v339 = vsel %vm325, %v334, %v338
        %v341 = vshrl.u32 %v309, 16
        %v343 = vrot.slane %v341, 4
        %v344 = vshll.u32 %v309, 16
        %v346 = vrot.slane %v344, 5
        %v347 = vor.u32 %v343, %v346
        %v348 = vrot.slane %v347, 4
        %v350 = vshll.u32 %v310, 16
        %v352 = vrot.slane %v350, 5
        %v353 = vsel %vm325, %v348, %v352
        %v355 = vshrl.u32 %v311, 16
        %v357 = vrot.slane %v355, 4
        %v358 = vshll.u32 %v311, 16
        %v360 = vrot.slane %v358, 5
        %v361 = vor.u32 %v357, %v360
        %v362 = vrot.slane %v361, 4
        %v364 = vshll.u32 %v312, 16
        %v366 = vrot.slane %v364, 5
        %v367 = vsel %vm325, %v362, %v366
        %v369 = vshrl.u32 %v313, 16
        %v371 = vrot.slane %v369, 4
        %v372 = vshll.u32 %v313, 16
        %v374 = vrot.slane %v372, 5
        %v375 = vor.u32 %v371, %v374
        %v376 = vrot.slane %v375, 4
        %v378 = vshll.u32 %v314, 16
        %v380 = vrot.slane %v378, 5
        %v381 = vsel %vm325, %v376, %v380
        %v383 = vshrl.u32 %v315, 16
        %v385 = vrot.slane %v383, 4
        %v386 = vshll.u32 %v315, 16
        %v388 = vrot.slane %v386, 5
        %v389 = vor.u32 %v385, %v388
        %v390 = vrot.slane %v389, 4
        %v392 = vshll.u32 %v316, 16
        %v394 = vrot.slane %v392, 5
        %v395 = vsel %vm325, %v390, %v394
        %v397 = vshrl.u32 %v317, 16
        %v399 = vrot.slane %v397, 4
        %v400 = vshll.u32 %v317, 16
        %v402 = vrot.slane %v400, 5
        %v403 = vor.u32 %v399, %v402
        %v404 = vrot.slane %v403, 4
        %v406 = vshll.u32 %v318, 16
        %v408 = vrot.slane %v406, 5
        %v409 = vsel %vm325, %v404, %v408
        %v411 = vshrl.u32 %v319, 16
        %v413 = vrot.slane %v411, 4
        %v414 = vshll.u32 %v319, 16
        %v416 = vrot.slane %v414, 5
        %v417 = vor.u32 %v413, %v416
        %v418 = vrot.slane %v417, 4
        %v420 = vshll.u32 %v320, 16
        %v422 = vrot.slane %v420, 5
        %v423 = vsel %vm325, %v418, %v422
        %v425 = vshrl.u32 %v321, 16
        %v427 = vrot.slane %v425, 4
        %v428 = vshll.u32 %v321, 16
        %v430 = vrot.slane %v428, 5
        %v431 = vor.u32 %v427, %v430
        %v432 = vrot.slane %v431, 4
        %v434 = vshll.u32 %v322, 16
        %v436 = vrot.slane %v434, 5
        %v437 = vsel %vm325, %v432, %v436
        %438 = vrot.lane.b32.xlu0 %v339, 32
        %v439 = vpop.permute.xlu0 %438
        %440 = vrot.lane.b32.xlu0 %v353, 32
        %v441 = vpop.permute.xlu0 %440
        %442 = vrot.lane.b32.xlu0 %v367, 32
        %v443 = vpop.permute.xlu0 %442
        %444 = vrot.lane.b32.xlu0 %v381, 32
        %v445 = vpop.permute.xlu0 %444
        %446 = vrot.lane.b32.xlu0 %v395, 32
        %v447 = vpop.permute.xlu0 %446
        %448 = vrot.lane.b32.xlu0 %v409, 32
        %v449 = vpop.permute.xlu0 %448
        %450 = vrot.lane.b32.xlu0 %v423, 32
        %v451 = vpop.permute.xlu0 %450
        %452 = vrot.lane.b32.xlu0 %v437, 32
        %v453 = vpop.permute.xlu0 %452
        %vm462 = vcmask 519424
        %463 = vst.msk [vmem:[#allocation2] sm:$0xf] %vm462, %v439
        %464 = vst.msk [vmem:[#allocation2 + $0xc] sm:$0xf] %vm462, %v441
        %465 = vst.msk [vmem:[#allocation2 + $0x18] sm:$0xf] %vm462, %v443
        %466 = vst.msk [vmem:[#allocation2 + $0x24] sm:$0xf] %vm462, %v445
        %467 = vst.msk [vmem:[#allocation2 + $0x30] sm:$0xf] %vm462, %v447
        %468 = vst.msk [vmem:[#allocation2 + $0x3c] sm:$0xf] %vm462, %v449
        %469 = vst.msk [vmem:[#allocation2 + $0x48] sm:$0xf] %vm462, %v451
        %470 = vst.msk [vmem:[#allocation2 + $0x54] sm:$0xf] %vm462, %v453
        %v471 = vld [vmem:[%s289] sm:$0xe]
        %v472 = vld [vmem:[%s289 + $0x4] sm:$0x1]
        %v473 = vld [vmem:[%s289 + $0x8] sm:$0xe]
        %v474 = vld [vmem:[%s289 + $0xc] sm:$0x1]
        %v475 = vld [vmem:[%s289 + $0x10] sm:$0xe]
        %v476 = vld [vmem:[%s289 + $0x14] sm:$0x1]
        %v477 = vld [vmem:[%s289 + $0x18] sm:$0xe]
        %v478 = vld [vmem:[%s289 + $0x1c] sm:$0x1]
        %v479 = vld [vmem:[%s289 + $0x20] sm:$0xe]
        %v480 = vld [vmem:[%s289 + $0x24] sm:$0x1]
        %v481 = vld [vmem:[%s289 + $0x28] sm:$0xe]
        %v482 = vld [vmem:[%s289 + $0x2c] sm:$0x1]
        %v483 = vld [vmem:[%s289 + $0x30] sm:$0xe]
        %v484 = vld [vmem:[%s289 + $0x34] sm:$0x1]
        %v485 = vld [vmem:[%s289 + $0x38] sm:$0xe]
        %v486 = vld [vmem:[%s289 + $0x3c] sm:$0x1]
        %vm503 = vcmask 1042432
        %vm504 = vcmask 1046532
        %vm505 = vmor %vm503, %vm504
        %v506 = vrot.slane %v471, 5
        %v507 = vrot.slane %v506, 4
        %v508 = vrot.slane %v472, 5
        %v509 = vsel %vm505, %v507, %v508
        %v510 = vrot.slane %v473, 5
        %v511 = vrot.slane %v510, 4
        %v512 = vrot.slane %v474, 5
        %v513 = vsel %vm505, %v511, %v512
        %v514 = vrot.slane %v475, 5
        %v515 = vrot.slane %v514, 4
        %v516 = vrot.slane %v476, 5
        %v517 = vsel %vm505, %v515, %v516
        %v518 = vrot.slane %v477, 5
        %v519 = vrot.slane %v518, 4
        %v520 = vrot.slane %v478, 5
        %v521 = vsel %vm505, %v519, %v520
        %v522 = vrot.slane %v479, 5
        %v523 = vrot.slane %v522, 4
        %v524 = vrot.slane %v480, 5
        %v525 = vsel %vm505, %v523, %v524
        %v526 = vrot.slane %v481, 5
        %v527 = vrot.slane %v526, 4
        %v528 = vrot.slane %v482, 5
        %v529 = vsel %vm505, %v527, %v528
        %v530 = vrot.slane %v483, 5
        %v531 = vrot.slane %v530, 4
        %v532 = vrot.slane %v484, 5
        %v533 = vsel %vm505, %v531, %v532
        %v534 = vrot.slane %v485, 5
        %v535 = vrot.slane %v534, 4
        %v536 = vrot.slane %v486, 5
        %v537 = vsel %vm505, %v535, %v536
        %538 = vrot.lane.b32.xlu0 %v509, 64
        %v539 = vpop.permute.xlu0 %538
        %540 = vrot.lane.b32.xlu0 %v513, 64
        %v541 = vpop.permute.xlu0 %540
        %542 = vrot.lane.b32.xlu0 %v517, 64
        %v543 = vpop.permute.xlu0 %542
        %544 = vrot.lane.b32.xlu0 %v521, 64
        %v545 = vpop.permute.xlu0 %544
        %546 = vrot.lane.b32.xlu0 %v525, 64
        %v547 = vpop.permute.xlu0 %546
        %548 = vrot.lane.b32.xlu0 %v529, 64
        %v549 = vpop.permute.xlu0 %548
        %550 = vrot.lane.b32.xlu0 %v533, 64
        %v551 = vpop.permute.xlu0 %550
        %552 = vrot.lane.b32.xlu0 %v537, 64
        %v553 = vpop.permute.xlu0 %552
        %vm562 = vcmask 781824
        %563 = vst.msk [vmem:[#allocation2] sm:$0xf] %vm562, %v539
        %564 = vst.msk [vmem:[#allocation2 + $0xc] sm:$0xf] %vm562, %v541
        %565 = vst.msk [vmem:[#allocation2 + $0x18] sm:$0xf] %vm562, %v543
        %566 = vst.msk [vmem:[#allocation2 + $0x24] sm:$0xf] %vm562, %v545
        %567 = vst.msk [vmem:[#allocation2 + $0x30] sm:$0xf] %vm562, %v547
        %568 = vst.msk [vmem:[#allocation2 + $0x3c] sm:$0xf] %vm562, %v549
        %569 = vst.msk [vmem:[#allocation2 + $0x48] sm:$0xf] %vm562, %v551
        %570 = vst.msk [vmem:[#allocation2 + $0x54] sm:$0xf] %vm562, %v553
        %s571 = sadd.s32 %s286, 1
        %s572 = smul.u32 %s571, 2
        %s573 = smul.addr %s572, 4
        %s574 = scalar_lea.vmem %s278, %s573
        %v575 = vld [vmem:[%s574] sm:$0xf]
        %v576 = vld [vmem:[%s574 + $0x8] sm:$0xf]
        %v577 = vld [vmem:[%s574 + $0x10] sm:$0xf]
        %v578 = vld [vmem:[%s574 + $0x18] sm:$0xf]
        %v579 = vld [vmem:[%s574 + $0x20] sm:$0xf]
        %v580 = vld [vmem:[%s574 + $0x28] sm:$0xf]
        %v581 = vld [vmem:[%s574 + $0x30] sm:$0xf]
        %v582 = vld [vmem:[%s574 + $0x38] sm:$0xf]
        %591 = vrot.lane.b32.xlu0 %v575, 96
        %v592 = vpop.permute.xlu0 %591
        %593 = vrot.lane.b32.xlu0 %v576, 96
        %v594 = vpop.permute.xlu0 %593
        %595 = vrot.lane.b32.xlu0 %v577, 96
        %v596 = vpop.permute.xlu0 %595
        %597 = vrot.lane.b32.xlu0 %v578, 96
        %v598 = vpop.permute.xlu0 %597
        %599 = vrot.lane.b32.xlu0 %v579, 96
        %v600 = vpop.permute.xlu0 %599
        %601 = vrot.lane.b32.xlu0 %v580, 96
        %v602 = vpop.permute.xlu0 %601
        %603 = vrot.lane.b32.xlu0 %v581, 96
        %v604 = vpop.permute.xlu0 %603
        %605 = vrot.lane.b32.xlu0 %v582, 96
        %v606 = vpop.permute.xlu0 %605
        %vm615 = vcmask 1044224
        %616 = vst.msk [vmem:[#allocation2] sm:$0xf] %vm615, %v592
        %617 = vst.msk [vmem:[#allocation2 + $0xc] sm:$0xf] %vm615, %v594
        %618 = vst.msk [vmem:[#allocation2 + $0x18] sm:$0xf] %vm615, %v596
        %619 = vst.msk [vmem:[#allocation2 + $0x24] sm:$0xf] %vm615, %v598
        %620 = vst.msk [vmem:[#allocation2 + $0x30] sm:$0xf] %vm615, %v600
        %621 = vst.msk [vmem:[#allocation2 + $0x3c] sm:$0xf] %vm615, %v602
        %622 = vst.msk [vmem:[#allocation2 + $0x48] sm:$0xf] %vm615, %v604
        %623 = vst.msk [vmem:[#allocation2 + $0x54] sm:$0xf] %vm615, %v606
        %v624 = vld [vmem:[%s574] sm:$0xf]
        %v625 = vld [vmem:[%s574 + $0x4] sm:$0x1]
        %v626 = vld [vmem:[%s574 + $0x8] sm:$0xf]
        %v627 = vld [vmem:[%s574 + $0xc] sm:$0x1]
        %v628 = vld [vmem:[%s574 + $0x10] sm:$0xf]
        %v629 = vld [vmem:[%s574 + $0x14] sm:$0x1]
        %v630 = vld [vmem:[%s574 + $0x18] sm:$0xf]
        %v631 = vld [vmem:[%s574 + $0x1c] sm:$0x1]
        %v632 = vld [vmem:[%s574 + $0x20] sm:$0xf]
        %v633 = vld [vmem:[%s574 + $0x24] sm:$0x1]
        %v634 = vld [vmem:[%s574 + $0x28] sm:$0xf]
        %v635 = vld [vmem:[%s574 + $0x2c] sm:$0x1]
        %v636 = vld [vmem:[%s574 + $0x30] sm:$0xf]
        %v637 = vld [vmem:[%s574 + $0x34] sm:$0x1]
        %v638 = vld [vmem:[%s574 + $0x38] sm:$0xf]
        %v639 = vld [vmem:[%s574 + $0x3c] sm:$0x1]
        %v641 = vshrl.u32 %v624, 16
        %v643 = vrot.slane %v641, 4
        %v644 = vshll.u32 %v624, 16
        %v646 = vrot.slane %v644, 5
        %v647 = vor.u32 %v643, %v646
        %v648 = vrot.slane %v647, 4
        %v650 = vshll.u32 %v625, 16
        %v652 = vrot.slane %v650, 5
        %v653 = vsel %vm325, %v648, %v652
        %v655 = vshrl.u32 %v626, 16
        %v657 = vrot.slane %v655, 4
        %v658 = vshll.u32 %v626, 16
        %v660 = vrot.slane %v658, 5
        %v661 = vor.u32 %v657, %v660
        %v662 = vrot.slane %v661, 4
        %v664 = vshll.u32 %v627, 16
        %v666 = vrot.slane %v664, 5
        %v667 = vsel %vm325, %v662, %v666
        %v669 = vshrl.u32 %v628, 16
        %v671 = vrot.slane %v669, 4
        %v672 = vshll.u32 %v628, 16
        %v674 = vrot.slane %v672, 5
        %v675 = vor.u32 %v671, %v674
        %v676 = vrot.slane %v675, 4
        %v678 = vshll.u32 %v629, 16
        %v680 = vrot.slane %v678, 5
        %v681 = vsel %vm325, %v676, %v680
        %v683 = vshrl.u32 %v630, 16
        %v685 = vrot.slane %v683, 4
        %v686 = vshll.u32 %v630, 16
        %v688 = vrot.slane %v686, 5
        %v689 = vor.u32 %v685, %v688
        %v690 = vrot.slane %v689, 4
        %v692 = vshll.u32 %v631, 16
        %v694 = vrot.slane %v692, 5
        %v695 = vsel %vm325, %v690, %v694
        %v697 = vshrl.u32 %v632, 16
        %v699 = vrot.slane %v697, 4
        %v700 = vshll.u32 %v632, 16
        %v702 = vrot.slane %v700, 5
        %v703 = vor.u32 %v699, %v702
        %v704 = vrot.slane %v703, 4
        %v706 = vshll.u32 %v633, 16
        %v708 = vrot.slane %v706, 5
        %v709 = vsel %vm325, %v704, %v708
        %v711 = vshrl.u32 %v634, 16
        %v713 = vrot.slane %v711, 4
        %v714 = vshll.u32 %v634, 16
        %v716 = vrot.slane %v714, 5
        %v717 = vor.u32 %v713, %v716
        %v718 = vrot.slane %v717, 4
        %v720 = vshll.u32 %v635, 16
        %v722 = vrot.slane %v720, 5
        %v723 = vsel %vm325, %v718, %v722
        %v725 = vshrl.u32 %v636, 16
        %v727 = vrot.slane %v725, 4
        %v728 = vshll.u32 %v636, 16
        %v730 = vrot.slane %v728, 5
        %v731 = vor.u32 %v727, %v730
        %v732 = vrot.slane %v731, 4
        %v734 = vshll.u32 %v637, 16
        %v736 = vrot.slane %v734, 5
        %v737 = vsel %vm325, %v732, %v736
        %v739 = vshrl.u32 %v638, 16
        %v741 = vrot.slane %v739, 4
        %v742 = vshll.u32 %v638, 16
        %v744 = vrot.slane %v742, 5
        %v745 = vor.u32 %v741, %v744
        %v746 = vrot.slane %v745, 4
        %v748 = vshll.u32 %v639, 16
        %v750 = vrot.slane %v748, 5
        %v751 = vsel %vm325, %v746, %v750
        %760 = vst.msk [vmem:[#allocation2 + $0x4] sm:$0xf] %vm298, %v653
        %761 = vst.msk [vmem:[#allocation2 + $0x10] sm:$0xf] %vm298, %v667
        %762 = vst.msk [vmem:[#allocation2 + $0x1c] sm:$0xf] %vm298, %v681
        %763 = vst.msk [vmem:[#allocation2 + $0x28] sm:$0xf] %vm298, %v695
        %764 = vst.msk [vmem:[#allocation2 + $0x34] sm:$0xf] %vm298, %v709
        %765 = vst.msk [vmem:[#allocation2 + $0x40] sm:$0xf] %vm298, %v723
        %766 = vst.msk [vmem:[#allocation2 + $0x4c] sm:$0xf] %vm298, %v737
        %767 = vst.msk [vmem:[#allocation2 + $0x58] sm:$0xf] %vm298, %v751
        %v768 = vld [vmem:[%s574] sm:$0xe]
        %v769 = vld [vmem:[%s574 + $0x4] sm:$0x1]
        %v770 = vld [vmem:[%s574 + $0x8] sm:$0xe]
        %v771 = vld [vmem:[%s574 + $0xc] sm:$0x1]
        %v772 = vld [vmem:[%s574 + $0x10] sm:$0xe]
        %v773 = vld [vmem:[%s574 + $0x14] sm:$0x1]
        %v774 = vld [vmem:[%s574 + $0x18] sm:$0xe]
        %v775 = vld [vmem:[%s574 + $0x1c] sm:$0x1]
        %v776 = vld [vmem:[%s574 + $0x20] sm:$0xe]
        %v777 = vld [vmem:[%s574 + $0x24] sm:$0x1]
        %v778 = vld [vmem:[%s574 + $0x28] sm:$0xe]
        %v779 = vld [vmem:[%s574 + $0x2c] sm:$0x1]
        %v780 = vld [vmem:[%s574 + $0x30] sm:$0xe]
        %v781 = vld [vmem:[%s574 + $0x34] sm:$0x1]
        %v782 = vld [vmem:[%s574 + $0x38] sm:$0xe]
        %v783 = vld [vmem:[%s574 + $0x3c] sm:$0x1]
        %v800 = vrot.slane %v768, 5
        %v801 = vrot.slane %v800, 4
        %v802 = vrot.slane %v769, 5
        %v803 = vsel %vm505, %v801, %v802
        %v804 = vrot.slane %v770, 5
        %v805 = vrot.slane %v804, 4
        %v806 = vrot.slane %v771, 5
        %v807 = vsel %vm505, %v805, %v806
        %v808 = vrot.slane %v772, 5
        %v809 = vrot.slane %v808, 4
        %v810 = vrot.slane %v773, 5
        %v811 = vsel %vm505, %v809, %v810
        %v812 = vrot.slane %v774, 5
        %v813 = vrot.slane %v812, 4
        %v814 = vrot.slane %v775, 5
        %v815 = vsel %vm505, %v813, %v814
        %v816 = vrot.slane %v776, 5
        %v817 = vrot.slane %v816, 4
        %v818 = vrot.slane %v777, 5
        %v819 = vsel %vm505, %v817, %v818
        %v820 = vrot.slane %v778, 5
        %v821 = vrot.slane %v820, 4
        %v822 = vrot.slane %v779, 5
        %v823 = vsel %vm505, %v821, %v822
        %v824 = vrot.slane %v780, 5
        %v825 = vrot.slane %v824, 4
        %v826 = vrot.slane %v781, 5
        %v827 = vsel %vm505, %v825, %v826
        %v828 = vrot.slane %v782, 5
        %v829 = vrot.slane %v828, 4
        %v830 = vrot.slane %v783, 5
        %v831 = vsel %vm505, %v829, %v830
        %832 = vrot.lane.b32.xlu0 %v803, 32
        %v833 = vpop.permute.xlu0 %832
        %834 = vrot.lane.b32.xlu0 %v807, 32
        %v835 = vpop.permute.xlu0 %834
        %836 = vrot.lane.b32.xlu0 %v811, 32
        %v837 = vpop.permute.xlu0 %836
        %838 = vrot.lane.b32.xlu0 %v815, 32
        %v839 = vpop.permute.xlu0 %838
        %840 = vrot.lane.b32.xlu0 %v819, 32
        %v841 = vpop.permute.xlu0 %840
        %842 = vrot.lane.b32.xlu0 %v823, 32
        %v843 = vpop.permute.xlu0 %842
        %844 = vrot.lane.b32.xlu0 %v827, 32
        %v845 = vpop.permute.xlu0 %844
        %846 = vrot.lane.b32.xlu0 %v831, 32
        %v847 = vpop.permute.xlu0 %846
        %856 = vst.msk [vmem:[#allocation2 + $0x4] sm:$0xf] %vm462, %v833
        %857 = vst.msk [vmem:[#allocation2 + $0x10] sm:$0xf] %vm462, %v835
        %858 = vst.msk [vmem:[#allocation2 + $0x1c] sm:$0xf] %vm462, %v837
        %859 = vst.msk [vmem:[#allocation2 + $0x28] sm:$0xf] %vm462, %v839
        %860 = vst.msk [vmem:[#allocation2 + $0x34] sm:$0xf] %vm462, %v841
        %861 = vst.msk [vmem:[#allocation2 + $0x40] sm:$0xf] %vm462, %v843
        %862 = vst.msk [vmem:[#allocation2 + $0x4c] sm:$0xf] %vm462, %v845
        %863 = vst.msk [vmem:[#allocation2 + $0x58] sm:$0xf] %vm462, %v847
        %s864 = sadd.s32 %s286, 2
        %s865 = smul.u32 %s864, 2
        %s866 = smul.addr %s865, 4
        %s867 = scalar_lea.vmem %s278, %s866
        %v868 = vld [vmem:[%s867] sm:$0xf]
        %v869 = vld [vmem:[%s867 + $0x8] sm:$0xf]
        %v870 = vld [vmem:[%s867 + $0x10] sm:$0xf]
        %v871 = vld [vmem:[%s867 + $0x18] sm:$0xf]
        %v872 = vld [vmem:[%s867 + $0x20] sm:$0xf]
        %v873 = vld [vmem:[%s867 + $0x28] sm:$0xf]
        %v874 = vld [vmem:[%s867 + $0x30] sm:$0xf]
        %v875 = vld [vmem:[%s867 + $0x38] sm:$0xf]
        %884 = vrot.lane.b32.xlu0 %v868, 64
        %v885 = vpop.permute.xlu0 %884
        %886 = vrot.lane.b32.xlu0 %v869, 64
        %v887 = vpop.permute.xlu0 %886
        %888 = vrot.lane.b32.xlu0 %v870, 64
        %v889 = vpop.permute.xlu0 %888
        %890 = vrot.lane.b32.xlu0 %v871, 64
        %v891 = vpop.permute.xlu0 %890
        %892 = vrot.lane.b32.xlu0 %v872, 64
        %v893 = vpop.permute.xlu0 %892
        %894 = vrot.lane.b32.xlu0 %v873, 64
        %v895 = vpop.permute.xlu0 %894
        %896 = vrot.lane.b32.xlu0 %v874, 64
        %v897 = vpop.permute.xlu0 %896
        %898 = vrot.lane.b32.xlu0 %v875, 64
        %v899 = vpop.permute.xlu0 %898
        %908 = vst.msk [vmem:[#allocation2 + $0x4] sm:$0xf] %vm562, %v885
        %909 = vst.msk [vmem:[#allocation2 + $0x10] sm:$0xf] %vm562, %v887
        %910 = vst.msk [vmem:[#allocation2 + $0x1c] sm:$0xf] %vm562, %v889
        %911 = vst.msk [vmem:[#allocation2 + $0x28] sm:$0xf] %vm562, %v891
        %912 = vst.msk [vmem:[#allocation2 + $0x34] sm:$0xf] %vm562, %v893
        %913 = vst.msk [vmem:[#allocation2 + $0x40] sm:$0xf] %vm562, %v895
        %914 = vst.msk [vmem:[#allocation2 + $0x4c] sm:$0xf] %vm562, %v897
        %915 = vst.msk [vmem:[#allocation2 + $0x58] sm:$0xf] %vm562, %v899
        %v916 = vld [vmem:[%s867] sm:$0xf]
        %v917 = vld [vmem:[%s867 + $0x4] sm:$0x1]
        %v918 = vld [vmem:[%s867 + $0x8] sm:$0xf]
        %v919 = vld [vmem:[%s867 + $0xc] sm:$0x1]
        %v920 = vld [vmem:[%s867 + $0x10] sm:$0xf]
        %v921 = vld [vmem:[%s867 + $0x14] sm:$0x1]
        %v922 = vld [vmem:[%s867 + $0x18] sm:$0xf]
        %v923 = vld [vmem:[%s867 + $0x1c] sm:$0x1]
        %v924 = vld [vmem:[%s867 + $0x20] sm:$0xf]
        %v925 = vld [vmem:[%s867 + $0x24] sm:$0x1]
        %v926 = vld [vmem:[%s867 + $0x28] sm:$0xf]
        %v927 = vld [vmem:[%s867 + $0x2c] sm:$0x1]
        %v928 = vld [vmem:[%s867 + $0x30] sm:$0xf]
        %v929 = vld [vmem:[%s867 + $0x34] sm:$0x1]
        %v930 = vld [vmem:[%s867 + $0x38] sm:$0xf]
        %v931 = vld [vmem:[%s867 + $0x3c] sm:$0x1]
        %v933 = vshrl.u32 %v916, 16
        %v935 = vrot.slane %v933, 4
        %v936 = vshll.u32 %v916, 16
        %v938 = vrot.slane %v936, 5
        %v939 = vor.u32 %v935, %v938
        %v940 = vrot.slane %v939, 4
        %v942 = vshll.u32 %v917, 16
        %v944 = vrot.slane %v942, 5
        %v945 = vsel %vm325, %v940, %v944
        %v947 = vshrl.u32 %v918, 16
        %v949 = vrot.slane %v947, 4
        %v950 = vshll.u32 %v918, 16
        %v952 = vrot.slane %v950, 5
        %v953 = vor.u32 %v949, %v952
        %v954 = vrot.slane %v953, 4
        %v956 = vshll.u32 %v919, 16
        %v958 = vrot.slane %v956, 5
        %v959 = vsel %vm325, %v954, %v958
        %v961 = vshrl.u32 %v920, 16
        %v963 = vrot.slane %v961, 4
        %v964 = vshll.u32 %v920, 16
        %v966 = vrot.slane %v964, 5
        %v967 = vor.u32 %v963, %v966
        %v968 = vrot.slane %v967, 4
        %v970 = vshll.u32 %v921, 16
        %v972 = vrot.slane %v970, 5
        %v973 = vsel %vm325, %v968, %v972
        %v975 = vshrl.u32 %v922, 16
        %v977 = vrot.slane %v975, 4
        %v978 = vshll.u32 %v922, 16
        %v980 = vrot.slane %v978, 5
        %v981 = vor.u32 %v977, %v980
        %v982 = vrot.slane %v981, 4
        %v984 = vshll.u32 %v923, 16
        %v986 = vrot.slane %v984, 5
        %v987 = vsel %vm325, %v982, %v986
        %v989 = vshrl.u32 %v924, 16
        %v991 = vrot.slane %v989, 4
        %v992 = vshll.u32 %v924, 16
        %v994 = vrot.slane %v992, 5
        %v995 = vor.u32 %v991, %v994
        %v996 = vrot.slane %v995, 4
        %v998 = vshll.u32 %v925, 16
        %v1000 = vrot.slane %v998, 5
        %v1001 = vsel %vm325, %v996, %v1000
        %v1003 = vshrl.u32 %v926, 16
        %v1005 = vrot.slane %v1003, 4
        %v1006 = vshll.u32 %v926, 16
        %v1008 = vrot.slane %v1006, 5
        %v1009 = vor.u32 %v1005, %v1008
        %v1010 = vrot.slane %v1009, 4
        %v1012 = vshll.u32 %v927, 16
        %v1014 = vrot.slane %v1012, 5
        %v1015 = vsel %vm325, %v1010, %v1014
        %v1017 = vshrl.u32 %v928, 16
        %v1019 = vrot.slane %v1017, 4
        %v1020 = vshll.u32 %v928, 16
        %v1022 = vrot.slane %v1020, 5
        %v1023 = vor.u32 %v1019, %v1022
        %v1024 = vrot.slane %v1023, 4
        %v1026 = vshll.u32 %v929, 16
        %v1028 = vrot.slane %v1026, 5
        %v1029 = vsel %vm325, %v1024, %v1028
        %v1031 = vshrl.u32 %v930, 16
        %v1033 = vrot.slane %v1031, 4
        %v1034 = vshll.u32 %v930, 16
        %v1036 = vrot.slane %v1034, 5
        %v1037 = vor.u32 %v1033, %v1036
        %v1038 = vrot.slane %v1037, 4
        %v1040 = vshll.u32 %v931, 16
        %v1042 = vrot.slane %v1040, 5
        %v1043 = vsel %vm325, %v1038, %v1042
        %1044 = vrot.lane.b32.xlu0 %v945, 96
        %v1045 = vpop.permute.xlu0 %1044
        %1046 = vrot.lane.b32.xlu0 %v959, 96
        %v1047 = vpop.permute.xlu0 %1046
        %1048 = vrot.lane.b32.xlu0 %v973, 96
        %v1049 = vpop.permute.xlu0 %1048
        %1050 = vrot.lane.b32.xlu0 %v987, 96
        %v1051 = vpop.permute.xlu0 %1050
        %1052 = vrot.lane.b32.xlu0 %v1001, 96
        %v1053 = vpop.permute.xlu0 %1052
        %1054 = vrot.lane.b32.xlu0 %v1015, 96
        %v1055 = vpop.permute.xlu0 %1054
        %1056 = vrot.lane.b32.xlu0 %v1029, 96
        %v1057 = vpop.permute.xlu0 %1056
        %1058 = vrot.lane.b32.xlu0 %v1043, 96
        %v1059 = vpop.permute.xlu0 %1058
        %1068 = vst.msk [vmem:[#allocation2 + $0x4] sm:$0xf] %vm615, %v1045
        %1069 = vst.msk [vmem:[#allocation2 + $0x10] sm:$0xf] %vm615, %v1047
        %1070 = vst.msk [vmem:[#allocation2 + $0x1c] sm:$0xf] %vm615, %v1049
        %1071 = vst.msk [vmem:[#allocation2 + $0x28] sm:$0xf] %vm615, %v1051
        %1072 = vst.msk [vmem:[#allocation2 + $0x34] sm:$0xf] %vm615, %v1053
        %1073 = vst.msk [vmem:[#allocation2 + $0x40] sm:$0xf] %vm615, %v1055
        %1074 = vst.msk [vmem:[#allocation2 + $0x4c] sm:$0xf] %vm615, %v1057
        %1075 = vst.msk [vmem:[#allocation2 + $0x58] sm:$0xf] %vm615, %v1059
        %v1076 = vld [vmem:[%s867] sm:$0xe]
        %v1077 = vld [vmem:[%s867 + $0x4] sm:$0x1]
        %v1078 = vld [vmem:[%s867 + $0x8] sm:$0xe]
        %v1079 = vld [vmem:[%s867 + $0xc] sm:$0x1]
        %v1080 = vld [vmem:[%s867 + $0x10] sm:$0xe]
        %v1081 = vld [vmem:[%s867 + $0x14] sm:$0x1]
        %v1082 = vld [vmem:[%s867 + $0x18] sm:$0xe]
        %v1083 = vld [vmem:[%s867 + $0x1c] sm:$0x1]
        %v1084 = vld [vmem:[%s867 + $0x20] sm:$0xe]
        %v1085 = vld [vmem:[%s867 + $0x24] sm:$0x1]
        %v1086 = vld [vmem:[%s867 + $0x28] sm:$0xe]
        %v1087 = vld [vmem:[%s867 + $0x2c] sm:$0x1]
        %v1088 = vld [vmem:[%s867 + $0x30] sm:$0xe]
        %v1089 = vld [vmem:[%s867 + $0x34] sm:$0x1]
        %v1090 = vld [vmem:[%s867 + $0x38] sm:$0xe]
        %v1091 = vld [vmem:[%s867 + $0x3c] sm:$0x1]
        %v1108 = vrot.slane %v1076, 5
        %v1109 = vrot.slane %v1108, 4
        %v1110 = vrot.slane %v1077, 5
        %v1111 = vsel %vm505, %v1109, %v1110
        %v1112 = vrot.slane %v1078, 5
        %v1113 = vrot.slane %v1112, 4
        %v1114 = vrot.slane %v1079, 5
        %v1115 = vsel %vm505, %v1113, %v1114
        %v1116 = vrot.slane %v1080, 5
        %v1117 = vrot.slane %v1116, 4
        %v1118 = vrot.slane %v1081, 5
        %v1119 = vsel %vm505, %v1117, %v1118
        %v1120 = vrot.slane %v1082, 5
        %v1121 = vrot.slane %v1120, 4
        %v1122 = vrot.slane %v1083, 5
        %v1123 = vsel %vm505, %v1121, %v1122
        %v1124 = vrot.slane %v1084, 5
        %v1125 = vrot.slane %v1124, 4
        %v1126 = vrot.slane %v1085, 5
        %v1127 = vsel %vm505, %v1125, %v1126
        %v1128 = vrot.slane %v1086, 5
        %v1129 = vrot.slane %v1128, 4
        %v1130 = vrot.slane %v1087, 5
        %v1131 = vsel %vm505, %v1129, %v1130
        %v1132 = vrot.slane %v1088, 5
        %v1133 = vrot.slane %v1132, 4
        %v1134 = vrot.slane %v1089, 5
        %v1135 = vsel %vm505, %v1133, %v1134
        %v1136 = vrot.slane %v1090, 5
        %v1137 = vrot.slane %v1136, 4
        %v1138 = vrot.slane %v1091, 5
        %v1139 = vsel %vm505, %v1137, %v1138
        %1148 = vst.msk [vmem:[#allocation2 + $0x8] sm:$0xf] %vm298, %v1111
        %1149 = vst.msk [vmem:[#allocation2 + $0x14] sm:$0xf] %vm298, %v1115
        %1150 = vst.msk [vmem:[#allocation2 + $0x20] sm:$0xf] %vm298, %v1119
        %1151 = vst.msk [vmem:[#allocation2 + $0x2c] sm:$0xf] %vm298, %v1123
        %1152 = vst.msk [vmem:[#allocation2 + $0x38] sm:$0xf] %vm298, %v1127
        %1153 = vst.msk [vmem:[#allocation2 + $0x44] sm:$0xf] %vm298, %v1131
        %1154 = vst.msk [vmem:[#allocation2 + $0x50] sm:$0xf] %vm298, %v1135
        %1155 = vst.msk [vmem:[#allocation2 + $0x5c] sm:$0xf] %vm298, %v1139
        %v1156 = vld [vmem:[#allocation2] sm:$0xff]
        %v1157 = vld [vmem:[#allocation2 + $0x8] sm:$0xf]
        %v1158 = vld [vmem:[#allocation2 + $0xc] sm:$0xff]
        %v1159 = vld [vmem:[#allocation2 + $0x14] sm:$0xf]
        %v1160 = vld [vmem:[#allocation2 + $0x18] sm:$0xff]
        %v1161 = vld [vmem:[#allocation2 + $0x20] sm:$0xf]
        %v1162 = vld [vmem:[#allocation2 + $0x24] sm:$0xff]
        %v1163 = vld [vmem:[#allocation2 + $0x2c] sm:$0xf]
        %v1164 = vld [vmem:[#allocation2 + $0x30] sm:$0xff]
        %v1165 = vld [vmem:[#allocation2 + $0x38] sm:$0xf]
        %v1166 = vld [vmem:[#allocation2 + $0x3c] sm:$0xff]
        %v1167 = vld [vmem:[#allocation2 + $0x44] sm:$0xf]
        %v1168 = vld [vmem:[#allocation2 + $0x48] sm:$0xff]
        %v1169 = vld [vmem:[#allocation2 + $0x50] sm:$0xf]
        %v1170 = vld [vmem:[#allocation2 + $0x54] sm:$0xff]
        %v1171 = vld [vmem:[#allocation2 + $0x5c] sm:$0xf]
        %v1172 = vld [vmem:[%s1] sm:$0xff]
        %v1173 = vld [vmem:[%s1 + $0x8] sm:$0xff]
        %v1174 = vld [vmem:[%s1 + $0x10] sm:$0xff]
        %v1175 = vld [vmem:[%s1 + $0x18] sm:$0xff]
        %v1176 = vld [vmem:[%s1 + $0x20] sm:$0xff]
        %v1177 = vld [vmem:[%s1 + $0x28] sm:$0xff]
        %v1178 = vld [vmem:[%s1 + $0x30] sm:$0xff]
        %v1179 = vld [vmem:[%s1 + $0x38] sm:$0xff]
        %v1180 = vld [vmem:[%s1 + $0x40] sm:$0xff]
        %v1181 = vld [vmem:[%s1 + $0x48] sm:$0xff]
        %v1182 = vld [vmem:[%s1 + $0x50] sm:$0xff]
        %v1183 = vld [vmem:[%s1 + $0x58] sm:$0xff]
        %v1184 = vld [vmem:[%s1 + $0x60] sm:$0xff]
        %v1185 = vld [vmem:[%s1 + $0x68] sm:$0xff]
        %v1186 = vld [vmem:[%s1 + $0x70] sm:$0xff]
        %v1187 = vld [vmem:[%s1 + $0x78] sm:$0xff]
        %v1188 = vld [vmem:[%s1 + $0x80] sm:$0xff]
        %v1189 = vld [vmem:[%s1 + $0x88] sm:$0xff]
        %v1190 = vld [vmem:[%s1 + $0x90] sm:$0xff]
        %v1191 = vld [vmem:[%s1 + $0x98] sm:$0xff]
        %v1192 = vld [vmem:[%s1 + $0xa0] sm:$0xff]
        %v1193 = vld [vmem:[%s1 + $0xa8] sm:$0xff]
        %v1194 = vld [vmem:[%s1 + $0xb0] sm:$0xff]
        %v1195 = vld [vmem:[%s1 + $0xb8] sm:$0xff]
        %v1196 = vld [vmem:[%s1 + $0xc0] sm:$0xff]
        %v1197 = vld [vmem:[%s1 + $0xc8] sm:$0xff]
        %v1198 = vld [vmem:[%s1 + $0xd0] sm:$0xff]
        %v1199 = vld [vmem:[%s1 + $0xd8] sm:$0xff]
        %v1200 = vld [vmem:[%s1 + $0xe0] sm:$0xff]
        %v1201 = vld [vmem:[%s1 + $0xe8] sm:$0xff]
        %v1202 = vld [vmem:[%s1 + $0xf0] sm:$0xff]
        %v1203 = vld [vmem:[%s1 + $0xf8] sm:$0xff]
        %v1204 = vld [vmem:[%s1 + $0x100] sm:$0xff]
        %v1205 = vld [vmem:[%s1 + $0x108] sm:$0xff]
        %v1206 = vld [vmem:[%s1 + $0x110] sm:$0xff]
        %v1207 = vld [vmem:[%s1 + $0x118] sm:$0xff]
        %v1208 = vld [vmem:[%s2] sm:$0x3]
        %v1210 = vlaneseq
        %v1211 = vshrl.u32 %v1210, 7
        %v1212 = vsub.s32 0, %v1211
        %v1213 = vrot.slane %v1208, %v1212
        %v1214 = vlaneseq
        %v1215 = vshrl.u32 %v1214, 7
        %v1216 = vsub.s32 1, %v1215
        %v1217 = vrot.slane %v1208, %v1216
        %v1236 = vunpack.c.l.b16 %v1156
        %v1237 = vunpack.c.h.b16 %v1156
        %v1238 = vunpack.c.l.b16 %v1157
        %v1239 = vunpack.c.l.b16 %v1158
        %v1240 = vunpack.c.h.b16 %v1158
        %v1241 = vunpack.c.l.b16 %v1159
        %v1242 = vunpack.c.l.b16 %v1160
        %v1243 = vunpack.c.h.b16 %v1160
        %v1244 = vunpack.c.l.b16 %v1161
        %v1245 = vunpack.c.l.b16 %v1162
        %v1246 = vunpack.c.h.b16 %v1162
        %v1247 = vunpack.c.l.b16 %v1163
        %v1248 = vunpack.c.l.b16 %v1164
        %v1249 = vunpack.c.h.b16 %v1164
        %v1250 = vunpack.c.l.b16 %v1165
        %v1251 = vunpack.c.l.b16 %v1166
        %v1252 = vunpack.c.h.b16 %v1166
        %v1253 = vunpack.c.l.b16 %v1167
        %v1254 = vunpack.c.l.b16 %v1168
        %v1255 = vunpack.c.h.b16 %v1168
        %v1256 = vunpack.c.l.b16 %v1169
        %v1257 = vunpack.c.l.b16 %v1170
        %v1258 = vunpack.c.h.b16 %v1170
        %v1259 = vunpack.c.l.b16 %v1171
        %v1260 = vpack.c.b16 %v1239, %v1236
        %v1261 = vpack.c.b16 %v1240, %v1237
        %v1262 = vpack.c.b16 %v1241, %v1238
        %v1263 = vpack.c.b16 %v1245, %v1242
        %v1264 = vpack.c.b16 %v1246, %v1243
        %v1265 = vpack.c.b16 %v1247, %v1244
        %v1266 = vpack.c.b16 %v1251, %v1248
        %v1267 = vpack.c.b16 %v1252, %v1249
        %v1268 = vpack.c.b16 %v1253, %v1250
        %v1269 = vpack.c.b16 %v1257, %v1254
        %v1270 = vpack.c.b16 %v1258, %v1255
        %v1271 = vpack.c.b16 %v1259, %v1256
        %v1316 = vunpack.c.l.b16 %v1172
        %v1317 = vunpack.c.h.b16 %v1172
        %v1318 = vunpack.c.l.b16 %v1173
        %v1319 = vunpack.c.h.b16 %v1173
        %v1320 = vunpack.c.l.b16 %v1174
        %v1321 = vunpack.c.h.b16 %v1174
        %v1322 = vunpack.c.l.b16 %v1175
        %v1323 = vunpack.c.h.b16 %v1175
        %v1324 = vunpack.c.l.b16 %v1176
        %v1325 = vunpack.c.h.b16 %v1176
        %v1326 = vunpack.c.l.b16 %v1177
        %v1327 = vunpack.c.h.b16 %v1177
        %v1328 = vunpack.c.l.b16 %v1178
        %v1329 = vunpack.c.h.b16 %v1178
        %v1330 = vunpack.c.l.b16 %v1179
        %v1331 = vunpack.c.h.b16 %v1179
        %v1332 = vunpack.c.l.b16 %v1180
        %v1333 = vunpack.c.h.b16 %v1180
        %v1334 = vunpack.c.l.b16 %v1181
        %v1335 = vunpack.c.h.b16 %v1181
        %v1336 = vunpack.c.l.b16 %v1182
        %v1337 = vunpack.c.h.b16 %v1182
        %v1338 = vunpack.c.l.b16 %v1183
        %v1339 = vunpack.c.h.b16 %v1183
        %v1340 = vunpack.c.l.b16 %v1184
        %v1341 = vunpack.c.h.b16 %v1184
        %v1342 = vunpack.c.l.b16 %v1185
        %v1343 = vunpack.c.h.b16 %v1185
        %v1344 = vunpack.c.l.b16 %v1186
        %v1345 = vunpack.c.h.b16 %v1186
        %v1346 = vunpack.c.l.b16 %v1187
        %v1347 = vunpack.c.h.b16 %v1187
        %v1348 = vunpack.c.l.b16 %v1188
        %v1349 = vunpack.c.h.b16 %v1188
        %v1350 = vunpack.c.l.b16 %v1189
        %v1351 = vunpack.c.h.b16 %v1189
        %v1352 = vunpack.c.l.b16 %v1190
        %v1353 = vunpack.c.h.b16 %v1190
        %v1354 = vunpack.c.l.b16 %v1191
        %v1355 = vunpack.c.h.b16 %v1191
        %v1356 = vunpack.c.l.b16 %v1192
        %v1357 = vunpack.c.h.b16 %v1192
        %v1358 = vunpack.c.l.b16 %v1193
        %v1359 = vunpack.c.h.b16 %v1193
        %v1360 = vunpack.c.l.b16 %v1194
        %v1361 = vunpack.c.h.b16 %v1194
        %v1362 = vunpack.c.l.b16 %v1195
        %v1363 = vunpack.c.h.b16 %v1195
        %v1364 = vunpack.c.l.b16 %v1196
        %v1365 = vunpack.c.h.b16 %v1196
        %v1366 = vunpack.c.l.b16 %v1197
        %v1367 = vunpack.c.h.b16 %v1197
        %v1368 = vunpack.c.l.b16 %v1198
        %v1369 = vunpack.c.h.b16 %v1198
        %v1370 = vunpack.c.l.b16 %v1199
        %v1371 = vunpack.c.h.b16 %v1199
        %v1372 = vunpack.c.l.b16 %v1200
        %v1373 = vunpack.c.h.b16 %v1200
        %v1374 = vunpack.c.l.b16 %v1201
        %v1375 = vunpack.c.h.b16 %v1201
        %v1376 = vunpack.c.l.b16 %v1202
        %v1377 = vunpack.c.h.b16 %v1202
        %v1378 = vunpack.c.l.b16 %v1203
        %v1379 = vunpack.c.h.b16 %v1203
        %v1380 = vunpack.c.l.b16 %v1204
        %v1381 = vunpack.c.h.b16 %v1204
        %v1382 = vunpack.c.l.b16 %v1205
        %v1383 = vunpack.c.h.b16 %v1205
        %v1384 = vunpack.c.l.b16 %v1206
        %v1385 = vunpack.c.h.b16 %v1206
        %v1386 = vunpack.c.l.b16 %v1207
        %v1387 = vunpack.c.h.b16 %v1207
        %v1388 = vpack.c.b16 %v1318, %v1316
        %v1389 = vpack.c.b16 %v1319, %v1317
        %v1390 = vpack.c.b16 %v1322, %v1320
        %v1391 = vpack.c.b16 %v1323, %v1321
        %v1392 = vpack.c.b16 %v1326, %v1324
        %v1393 = vpack.c.b16 %v1327, %v1325
        %v1394 = vpack.c.b16 %v1330, %v1328
        %v1395 = vpack.c.b16 %v1331, %v1329
        %v1396 = vpack.c.b16 %v1334, %v1332
        %v1397 = vpack.c.b16 %v1335, %v1333
        %v1398 = vpack.c.b16 %v1338, %v1336
        %v1399 = vpack.c.b16 %v1339, %v1337
        %v1400 = vpack.c.b16 %v1342, %v1340
        %v1401 = vpack.c.b16 %v1343, %v1341
        %v1402 = vpack.c.b16 %v1346, %v1344
        %v1403 = vpack.c.b16 %v1347, %v1345
        %v1404 = vpack.c.b16 %v1350, %v1348
        %v1405 = vpack.c.b16 %v1351, %v1349
        %v1406 = vpack.c.b16 %v1354, %v1352
        %v1407 = vpack.c.b16 %v1355, %v1353
        %v1408 = vpack.c.b16 %v1358, %v1356
        %v1409 = vpack.c.b16 %v1359, %v1357
        %v1410 = vpack.c.b16 %v1362, %v1360
        %v1411 = vpack.c.b16 %v1363, %v1361
        %v1412 = vpack.c.b16 %v1366, %v1364
        %v1413 = vpack.c.b16 %v1367, %v1365
        %v1414 = vpack.c.b16 %v1370, %v1368
        %v1415 = vpack.c.b16 %v1371, %v1369
        %v1416 = vpack.c.b16 %v1374, %v1372
        %v1417 = vpack.c.b16 %v1375, %v1373
        %v1418 = vpack.c.b16 %v1378, %v1376
        %v1419 = vpack.c.b16 %v1379, %v1377
        %v1420 = vpack.c.b16 %v1382, %v1380
        %v1421 = vpack.c.b16 %v1383, %v1381
        %v1422 = vpack.c.b16 %v1386, %v1384
        %v1423 = vpack.c.b16 %v1387, %v1385
        %vm1460 = vcmask 261120
        %v1462 = vsel %vm1460, %v1262, 0
        %v1465 = vsel %vm1460, %v1265, 0
        %v1468 = vsel %vm1460, %v1268, 0
        %v1471 = vsel %vm1460, %v1271, 0
        %1473 = vmatprep.subr.bf16.mxu0 %v1403
        %1474 = vmatpush1.bf16.msra.mxu0 %v1402
        %1475 = vmatprep.subr.bf16.mxu0 %v1401
        %1476 = vmatpush1.bf16.msra.mxu0 %v1400
        %1477 = vmatprep.subr.bf16.mxu0 %v1399
        %1478 = vmatpush1.bf16.msra.mxu0 %v1398
        %1479 = vmatprep.subr.bf16.mxu0 %v1397
        %1480 = vmatpush1.bf16.msra.mxu0 %v1396
        %1481 = vmatprep.subr.bf16.mxu0 %v1395
        %1482 = vmatpush1.bf16.msra.mxu0 %v1394
        %1483 = vmatprep.subr.bf16.mxu0 %v1393
        %1484 = vmatpush1.bf16.msra.mxu0 %v1392
        %1485 = vmatprep.subr.bf16.mxu0 %v1391
        %1486 = vmatpush1.bf16.msra.mxu0 %v1390
        %1487 = vmatprep.subr.bf16.mxu0 %v1389
        %1488 = vmatpush1.bf16.msra.mxu0 %v1388
        %1489 = vmatprep.subr.bf16.mxu0 %v1419
        %1490 = vmatpush2.bf16.msra.mxu0 %v1418
        %1491 = vmatprep.subr.bf16.mxu0 %v1417
        %1492 = vmatpush2.bf16.msra.mxu0 %v1416
        %1493 = vmatprep.subr.bf16.mxu0 %v1415
        %1494 = vmatpush2.bf16.msra.mxu0 %v1414
        %1495 = vmatprep.subr.bf16.mxu0 %v1413
        %1496 = vmatpush2.bf16.msra.mxu0 %v1412
        %1497 = vmatprep.subr.bf16.mxu0 %v1411
        %1498 = vmatpush2.bf16.msra.mxu0 %v1410
        %1499 = vmatprep.subr.bf16.mxu0 %v1409
        %1500 = vmatpush2.bf16.msra.mxu0 %v1408
        %1501 = vmatprep.subr.bf16.mxu0 %v1407
        %1502 = vmatpush2.bf16.msra.mxu0 %v1406
        %1503 = vmatprep.subr.bf16.mxu0 %v1405
        %1504 = vmatpush2.bf16.msra.mxu0 %v1404
        %1505 = vmatprep.mubr.bf16.mxu0 %v1261
        %1506 = vmatmul.mubr.bf16.gmra.mxu0 %v1260
        %v1507 = vpop.f32.mrf.mxu0
        %v1508 = vadd.f32 %v1213, %v1507
        %v1509 = vpop.f32.mrf.mxu0
        %v1510 = vadd.f32 %v1217, %v1509
        %v1511 = vpop.f32.mrf.mxu0
        %v1512 = vadd.f32 %v1213, %v1511
        %v1513 = vpop.f32.mrf.mxu0
        %v1514 = vadd.f32 %v1217, %v1513
        %1515 = vmatprep.mubr.bf16.mxu0 %v1264
        %1516 = vmatmul.mubr.bf16.gmra.mxu0 %v1263
        %v1517 = vpop.f32.mrf.mxu0
        %v1518 = vadd.f32 %v1213, %v1517
        %v1519 = vpop.f32.mrf.mxu0
        %v1520 = vadd.f32 %v1217, %v1519
        %v1521 = vpop.f32.mrf.mxu0
        %v1522 = vadd.f32 %v1213, %v1521
        %v1523 = vpop.f32.mrf.mxu0
        %v1524 = vadd.f32 %v1217, %v1523
        %1525 = vmatprep.mubr.bf16.mxu0 %v1267
        %1526 = vmatmul.mubr.bf16.gmra.mxu0 %v1266
        %v1527 = vpop.f32.mrf.mxu0
        %v1528 = vadd.f32 %v1213, %v1527
        %v1529 = vpop.f32.mrf.mxu0
        %v1530 = vadd.f32 %v1217, %v1529
        %v1531 = vpop.f32.mrf.mxu0
        %v1532 = vadd.f32 %v1213, %v1531
        %v1533 = vpop.f32.mrf.mxu0
        %v1534 = vadd.f32 %v1217, %v1533
        %1535 = vmatprep.mubr.bf16.mxu0 %v1270
        %1536 = vmatmul.mubr.bf16.gmra.mxu0 %v1269
        %v1537 = vpop.f32.mrf.mxu0
        %v1538 = vadd.f32 %v1213, %v1537
        %v1539 = vpop.f32.mrf.mxu0
        %v1540 = vadd.f32 %v1217, %v1539
        %v1541 = vpop.f32.mrf.mxu0
        %v1542 = vadd.f32 %v1213, %v1541
        %v1543 = vpop.f32.mrf.mxu0
        %v1544 = vadd.f32 %v1217, %v1543
        %1545 = vdwg.mxu0
        %1546 = vmatprep.subr.bf16.mxu0 0
        %1547 = vmatpush1.bf16.msra.mxu0 0
        %1548 = vmatprep.subr.bf16.mxu0 0
        %1549 = vmatpush1.bf16.msra.mxu0 0
        %1550 = vmatprep.subr.bf16.mxu0 0
        %1551 = vmatpush1.bf16.msra.mxu0 0
        %1552 = vmatprep.subr.bf16.mxu0 0
        %1553 = vmatpush1.bf16.msra.mxu0 0
        %1554 = vmatprep.subr.bf16.mxu0 0
        %1555 = vmatpush1.bf16.msra.mxu0 0
        %1556 = vmatprep.subr.bf16.mxu0 0
        %1557 = vmatpush1.bf16.msra.mxu0 0
        %1558 = vmatprep.subr.bf16.mxu0 %v1423
        %1559 = vmatpush1.bf16.msra.mxu0 %v1422
        %1560 = vmatprep.subr.bf16.mxu0 %v1421
        %1561 = vmatpush1.bf16.msra.mxu0 %v1420
        %1562 = vmatprep.subr.bf16.mxu0 0
        %1563 = vmatpush2.bf16.msra.mxu0 0
        %1564 = vmatprep.subr.bf16.mxu0 0
        %1565 = vmatpush2.bf16.msra.mxu0 0
        %1566 = vmatprep.subr.bf16.mxu0 0
        %1567 = vmatpush2.bf16.msra.mxu0 0
        %1568 = vmatprep.subr.bf16.mxu0 0
        %1569 = vmatpush2.bf16.msra.mxu0 0
        %1570 = vmatprep.subr.bf16.mxu0 0
        %1571 = vmatpush2.bf16.msra.mxu0 0
        %1572 = vmatprep.subr.bf16.mxu0 0
        %1573 = vmatpush2.bf16.msra.mxu0 0
        %1574 = vmatprep.subr.bf16.mxu0 0
        %1575 = vmatpush2.bf16.msra.mxu0 0
        %1576 = vmatprep.subr.bf16.mxu0 0
        %1577 = vmatpush2.bf16.msra.mxu0 0
        %1578 = vmatprep.mubr.bf16.mxu0 0
        %1579 = vmatmul.mubr.bf16.gmra.mxu0 %v1462
        %v1580 = vpop.f32.mrf.mxu0
        %v1581 = vadd.f32 %v1508, %v1580
        %v1582 = vpop.f32.mrf.mxu0
        %v1583 = vadd.f32 %v1510, %v1582
        %v1584 = vpop.f32.mrf.mxu0
        %v1585 = vadd.f32 %v1512, %v1584
        %v1586 = vpop.f32.mrf.mxu0
        %v1587 = vadd.f32 %v1514, %v1586
        %1588 = vmatprep.mubr.bf16.mxu0 0
        %1589 = vmatmul.mubr.bf16.gmra.mxu0 %v1465
        %v1590 = vpop.f32.mrf.mxu0
        %v1591 = vadd.f32 %v1518, %v1590
        %v1592 = vpop.f32.mrf.mxu0
        %v1593 = vadd.f32 %v1520, %v1592
        %v1594 = vpop.f32.mrf.mxu0
        %v1595 = vadd.f32 %v1522, %v1594
        %v1596 = vpop.f32.mrf.mxu0
        %v1597 = vadd.f32 %v1524, %v1596
        %1598 = vmatprep.mubr.bf16.mxu0 0
        %1599 = vmatmul.mubr.bf16.gmra.mxu0 %v1468
        %v1600 = vpop.f32.mrf.mxu0
        %v1601 = vadd.f32 %v1528, %v1600
        %v1602 = vpop.f32.mrf.mxu0
        %v1603 = vadd.f32 %v1530, %v1602
        %v1604 = vpop.f32.mrf.mxu0
        %v1605 = vadd.f32 %v1532, %v1604
        %v1606 = vpop.f32.mrf.mxu0
        %v1607 = vadd.f32 %v1534, %v1606
        %1608 = vmatprep.mubr.bf16.mxu0 0
        %1609 = vmatmul.mubr.bf16.gmra.mxu0 %v1471
        %v1610 = vpop.f32.mrf.mxu0
        %v1611 = vadd.f32 %v1538, %v1610
        %v1612 = vpop.f32.mrf.mxu0
        %v1613 = vadd.f32 %v1540, %v1612
        %v1614 = vpop.f32.mrf.mxu0
        %v1615 = vadd.f32 %v1542, %v1614
        %v1616 = vpop.f32.mrf.mxu0
        %v1617 = vadd.f32 %v1544, %v1616
        %1618 = vdwg.mxu0
        %v1619 = vmax.f32 %v1581, 0.0
        %v1620 = vmax.f32 %v1583, 0.0
        %v1621 = vmax.f32 %v1585, 0.0
        %v1622 = vmax.f32 %v1587, 0.0
        %v1623 = vmax.f32 %v1591, 0.0
        %v1624 = vmax.f32 %v1593, 0.0
        %v1625 = vmax.f32 %v1595, 0.0
        %v1626 = vmax.f32 %v1597, 0.0
        %v1627 = vmax.f32 %v1601, 0.0
        %v1628 = vmax.f32 %v1603, 0.0
        %v1629 = vmax.f32 %v1605, 0.0
        %v1630 = vmax.f32 %v1607, 0.0
        %v1631 = vmax.f32 %v1611, 0.0
        %v1632 = vmax.f32 %v1613, 0.0
        %v1633 = vmax.f32 %v1615, 0.0
        %v1634 = vmax.f32 %v1617, 0.0
        %v1635 = vpack.c.bf16 %v1621, %v1619
        %v1636 = vpack.c.bf16 %v1622, %v1620
        %v1637 = vpack.c.bf16 %v1625, %v1623
        %v1638 = vpack.c.bf16 %v1626, %v1624
        %v1639 = vpack.c.bf16 %v1629, %v1627
        %v1640 = vpack.c.bf16 %v1630, %v1628
        %v1641 = vpack.c.bf16 %v1633, %v1631
        %v1642 = vpack.c.bf16 %v1634, %v1632
        %v1643 = vld [vmem:[%s3] sm:$0xff]
        %v1644 = vld [vmem:[%s3 + $0x8] sm:$0xff]
        %v1645 = vld [vmem:[%s3 + $0x10] sm:$0xf]
        %v1646 = vld [vmem:[%s3 + $0x14] sm:$0xff]
        %v1647 = vld [vmem:[%s3 + $0x1c] sm:$0xff]
        %v1648 = vld [vmem:[%s3 + $0x24] sm:$0xf]
        %v1649 = vld [vmem:[%s3 + $0x28] sm:$0xff]
        %v1650 = vld [vmem:[%s3 + $0x30] sm:$0xff]
        %v1651 = vld [vmem:[%s3 + $0x38] sm:$0xf]
        %v1652 = vld [vmem:[%s3 + $0x3c] sm:$0xff]
        %v1653 = vld [vmem:[%s3 + $0x44] sm:$0xff]
        %v1654 = vld [vmem:[%s3 + $0x4c] sm:$0xf]
        %v1655 = vld [vmem:[%s3 + $0x50] sm:$0xff]
        %v1656 = vld [vmem:[%s3 + $0x58] sm:$0xff]
        %v1657 = vld [vmem:[%s3 + $0x60] sm:$0xf]
        %v1658 = vld [vmem:[%s3 + $0x64] sm:$0xff]
        %v1659 = vld [vmem:[%s3 + $0x6c] sm:$0xff]
        %v1660 = vld [vmem:[%s3 + $0x74] sm:$0xf]
        %v1661 = vld [vmem:[%s3 + $0x78] sm:$0xff]
        %v1662 = vld [vmem:[%s3 + $0x80] sm:$0xff]
        %v1663 = vld [vmem:[%s3 + $0x88] sm:$0xf]
        %v1664 = vld [vmem:[%s3 + $0x8c] sm:$0xff]
        %v1665 = vld [vmem:[%s3 + $0x94] sm:$0xff]
        %v1666 = vld [vmem:[%s3 + $0x9c] sm:$0xf]
        %v1667 = vld [vmem:[%s3 + $0xa0] sm:$0xff]
        %v1668 = vld [vmem:[%s3 + $0xa8] sm:$0xff]
        %v1669 = vld [vmem:[%s3 + $0xb0] sm:$0xf]
        %v1670 = vld [vmem:[%s3 + $0xb4] sm:$0xff]
        %v1671 = vld [vmem:[%s3 + $0xbc] sm:$0xff]
        %v1672 = vld [vmem:[%s3 + $0xc4] sm:$0xf]
        %v1673 = vld [vmem:[%s3 + $0xc8] sm:$0xff]
        %v1674 = vld [vmem:[%s3 + $0xd0] sm:$0xff]
        %v1675 = vld [vmem:[%s3 + $0xd8] sm:$0xf]
        %v1676 = vld [vmem:[%s3 + $0xdc] sm:$0xff]
        %v1677 = vld [vmem:[%s3 + $0xe4] sm:$0xff]
        %v1678 = vld [vmem:[%s3 + $0xec] sm:$0xf]
        %v1679 = vld [vmem:[%s3 + $0xf0] sm:$0xff]
        %v1680 = vld [vmem:[%s3 + $0xf8] sm:$0xff]
        %v1681 = vld [vmem:[%s3 + $0x100] sm:$0xf]
        %v1682 = vld [vmem:[%s3 + $0x104] sm:$0xff]
        %v1683 = vld [vmem:[%s3 + $0x10c] sm:$0xff]
        %v1684 = vld [vmem:[%s3 + $0x114] sm:$0xf]
        %v1685 = vld [vmem:[%s3 + $0x118] sm:$0xff]
        %v1686 = vld [vmem:[%s3 + $0x120] sm:$0xff]
        %v1687 = vld [vmem:[%s3 + $0x128] sm:$0xf]
        %v1688 = vld [vmem:[%s3 + $0x12c] sm:$0xff]
        %v1689 = vld [vmem:[%s3 + $0x134] sm:$0xff]
        %v1690 = vld [vmem:[%s3 + $0x13c] sm:$0xf]
        %v1691 = vld [vmem:[%s3 + $0x140] sm:$0xff]
        %v1692 = vld [vmem:[%s3 + $0x148] sm:$0xff]
        %v1693 = vld [vmem:[%s3 + $0x150] sm:$0xf]
        %v1694 = vld [vmem:[%s3 + $0x154] sm:$0xff]
        %v1695 = vld [vmem:[%s3 + $0x15c] sm:$0xff]
        %v1696 = vld [vmem:[%s3 + $0x164] sm:$0xf]
        %v1697 = vld [vmem:[%s3 + $0x168] sm:$0xff]
        %v1698 = vld [vmem:[%s3 + $0x170] sm:$0xff]
        %v1699 = vld [vmem:[%s3 + $0x178] sm:$0xf]
        %v1700 = vld [vmem:[%s3 + $0x17c] sm:$0xff]
        %v1701 = vld [vmem:[%s3 + $0x184] sm:$0xff]
        %v1702 = vld [vmem:[%s3 + $0x18c] sm:$0xf]
        %v1703 = vld [vmem:[%s3 + $0x190] sm:$0xff]
        %v1704 = vld [vmem:[%s3 + $0x198] sm:$0xff]
        %v1705 = vld [vmem:[%s3 + $0x1a0] sm:$0xf]
        %v1706 = vld [vmem:[%s3 + $0x1a4] sm:$0xff]
        %v1707 = vld [vmem:[%s3 + $0x1ac] sm:$0xff]
        %v1708 = vld [vmem:[%s3 + $0x1b4] sm:$0xf]
        %v1709 = vld [vmem:[%s3 + $0x1b8] sm:$0xff]
        %v1710 = vld [vmem:[%s3 + $0x1c0] sm:$0xff]
        %v1711 = vld [vmem:[%s3 + $0x1c8] sm:$0xf]
        %v1712 = vld [vmem:[%s3 + $0x1cc] sm:$0xff]
        %v1713 = vld [vmem:[%s3 + $0x1d4] sm:$0xff]
        %v1714 = vld [vmem:[%s3 + $0x1dc] sm:$0xf]
        %v1715 = vld [vmem:[%s3 + $0x1e0] sm:$0xff]
        %v1716 = vld [vmem:[%s3 + $0x1e8] sm:$0xff]
        %v1717 = vld [vmem:[%s3 + $0x1f0] sm:$0xf]
        %v1718 = vld [vmem:[%s3 + $0x1f4] sm:$0xff]
        %v1719 = vld [vmem:[%s3 + $0x1fc] sm:$0xff]
        %v1720 = vld [vmem:[%s3 + $0x204] sm:$0xf]
        %v1721 = vld [vmem:[%s3 + $0x208] sm:$0xff]
        %v1722 = vld [vmem:[%s3 + $0x210] sm:$0xff]
        %v1723 = vld [vmem:[%s3 + $0x218] sm:$0xf]
        %v1724 = vld [vmem:[%s3 + $0x21c] sm:$0xff]
        %v1725 = vld [vmem:[%s3 + $0x224] sm:$0xff]
        %v1726 = vld [vmem:[%s3 + $0x22c] sm:$0xf]
        %v1727 = vld [vmem:[%s3 + $0x230] sm:$0xff]
        %v1728 = vld [vmem:[%s3 + $0x238] sm:$0xff]
        %v1729 = vld [vmem:[%s3 + $0x240] sm:$0xf]
        %v1730 = vld [vmem:[%s3 + $0x244] sm:$0xff]
        %v1731 = vld [vmem:[%s3 + $0x24c] sm:$0xff]
        %v1732 = vld [vmem:[%s3 + $0x254] sm:$0xf]
        %v1733 = vld [vmem:[%s3 + $0x258] sm:$0xff]
        %v1734 = vld [vmem:[%s3 + $0x260] sm:$0xff]
        %v1735 = vld [vmem:[%s3 + $0x268] sm:$0xf]
        %v1736 = vld [vmem:[%s3 + $0x26c] sm:$0xff]
        %v1737 = vld [vmem:[%s3 + $0x274] sm:$0xff]
        %v1738 = vld [vmem:[%s3 + $0x27c] sm:$0xf]
        %v1739 = vld [vmem:[%s4] sm:$0x1f]
        %v1741 = vlaneseq
        %v1742 = vshrl.u32 %v1741, 7
        %v1743 = vsub.s32 0, %v1742
        %v1744 = vrot.slane %v1739, %v1743
        %v1745 = vlaneseq
        %v1746 = vshrl.u32 %v1745, 7
        %v1747 = vsub.s32 1, %v1746
        %v1748 = vrot.slane %v1739, %v1747
        %v1749 = vlaneseq
        %v1750 = vshrl.u32 %v1749, 7
        %v1751 = vsub.s32 2, %v1750
        %v1752 = vrot.slane %v1739, %v1751
        %v1753 = vlaneseq
        %v1754 = vshrl.u32 %v1753, 7
        %v1755 = vsub.s32 3, %v1754
        %v1756 = vrot.slane %v1739, %v1755
        %v1757 = vlaneseq
        %v1758 = vshrl.u32 %v1757, 7
        %v1759 = vsub.s32 4, %v1758
        %v1760 = vrot.slane %v1739, %v1759
        %v1862 = vunpack.c.l.b16 %v1643
        %v1863 = vunpack.c.h.b16 %v1643
        %v1864 = vunpack.c.l.b16 %v1644
        %v1865 = vunpack.c.h.b16 %v1644
        %v1866 = vunpack.c.l.b16 %v1645
        %v1867 = vunpack.c.l.b16 %v1646
        %v1868 = vunpack.c.h.b16 %v1646
        %v1869 = vunpack.c.l.b16 %v1647
        %v1870 = vunpack.c.h.b16 %v1647
        %v1871 = vunpack.c.l.b16 %v1648
        %v1872 = vunpack.c.l.b16 %v1649
        %v1873 = vunpack.c.h.b16 %v1649
        %v1874 = vunpack.c.l.b16 %v1650
        %v1875 = vunpack.c.h.b16 %v1650
        %v1876 = vunpack.c.l.b16 %v1651
        %v1877 = vunpack.c.l.b16 %v1652
        %v1878 = vunpack.c.h.b16 %v1652
        %v1879 = vunpack.c.l.b16 %v1653
        %v1880 = vunpack.c.h.b16 %v1653
        %v1881 = vunpack.c.l.b16 %v1654
        %v1882 = vunpack.c.l.b16 %v1655
        %v1883 = vunpack.c.h.b16 %v1655
        %v1884 = vunpack.c.l.b16 %v1656
        %v1885 = vunpack.c.h.b16 %v1656
        %v1886 = vunpack.c.l.b16 %v1657
        %v1887 = vunpack.c.l.b16 %v1658
        %v1888 = vunpack.c.h.b16 %v1658
        %v1889 = vunpack.c.l.b16 %v1659
        %v1890 = vunpack.c.h.b16 %v1659
        %v1891 = vunpack.c.l.b16 %v1660
        %v1892 = vunpack.c.l.b16 %v1661
        %v1893 = vunpack.c.h.b16 %v1661
        %v1894 = vunpack.c.l.b16 %v1662
        %v1895 = vunpack.c.h.b16 %v1662
        %v1896 = vunpack.c.l.b16 %v1663
        %v1897 = vunpack.c.l.b16 %v1664
        %v1898 = vunpack.c.h.b16 %v1664
        %v1899 = vunpack.c.l.b16 %v1665
        %v1900 = vunpack.c.h.b16 %v1665
        %v1901 = vunpack.c.l.b16 %v1666
        %v1902 = vunpack.c.l.b16 %v1667
        %v1903 = vunpack.c.h.b16 %v1667
        %v1904 = vunpack.c.l.b16 %v1668
        %v1905 = vunpack.c.h.b16 %v1668
        %v1906 = vunpack.c.l.b16 %v1669
        %v1907 = vunpack.c.l.b16 %v1670
        %v1908 = vunpack.c.h.b16 %v1670
        %v1909 = vunpack.c.l.b16 %v1671
        %v1910 = vunpack.c.h.b16 %v1671
        %v1911 = vunpack.c.l.b16 %v1672
        %v1912 = vunpack.c.l.b16 %v1673
        %v1913 = vunpack.c.h.b16 %v1673
        %v1914 = vunpack.c.l.b16 %v1674
        %v1915 = vunpack.c.h.b16 %v1674
        %v1916 = vunpack.c.l.b16 %v1675
        %v1917 = vunpack.c.l.b16 %v1676
        %v1918 = vunpack.c.h.b16 %v1676
        %v1919 = vunpack.c.l.b16 %v1677
        %v1920 = vunpack.c.h.b16 %v1677
        %v1921 = vunpack.c.l.b16 %v1678
        %v1922 = vunpack.c.l.b16 %v1679
        %v1923 = vunpack.c.h.b16 %v1679
        %v1924 = vunpack.c.l.b16 %v1680
        %v1925 = vunpack.c.h.b16 %v1680
        %v1926 = vunpack.c.l.b16 %v1681
        %v1927 = vunpack.c.l.b16 %v1682
        %v1928 = vunpack.c.h.b16 %v1682
        %v1929 = vunpack.c.l.b16 %v1683
        %v1930 = vunpack.c.h.b16 %v1683
        %v1931 = vunpack.c.l.b16 %v1684
        %v1932 = vunpack.c.l.b16 %v1685
        %v1933 = vunpack.c.h.b16 %v1685
        %v1934 = vunpack.c.l.b16 %v1686
        %v1935 = vunpack.c.h.b16 %v1686
        %v1936 = vunpack.c.l.b16 %v1687
        %v1937 = vunpack.c.l.b16 %v1688
        %v1938 = vunpack.c.h.b16 %v1688
        %v1939 = vunpack.c.l.b16 %v1689
        %v1940 = vunpack.c.h.b16 %v1689
        %v1941 = vunpack.c.l.b16 %v1690
        %v1942 = vunpack.c.l.b16 %v1691
        %v1943 = vunpack.c.h.b16 %v1691
        %v1944 = vunpack.c.l.b16 %v1692
        %v1945 = vunpack.c.h.b16 %v1692
        %v1946 = vunpack.c.l.b16 %v1693
        %v1947 = vunpack.c.l.b16 %v1694
        %v1948 = vunpack.c.h.b16 %v1694
        %v1949 = vunpack.c.l.b16 %v1695
        %v1950 = vunpack.c.h.b16 %v1695
        %v1951 = vunpack.c.l.b16 %v1696
        %v1952 = vunpack.c.l.b16 %v1697
        %v1953 = vunpack.c.h.b16 %v1697
        %v1954 = vunpack.c.l.b16 %v1698
        %v1955 = vunpack.c.h.b16 %v1698
        %v1956 = vunpack.c.l.b16 %v1699
        %v1957 = vunpack.c.l.b16 %v1700
        %v1958 = vunpack.c.h.b16 %v1700
        %v1959 = vunpack.c.l.b16 %v1701
        %v1960 = vunpack.c.h.b16 %v1701
        %v1961 = vunpack.c.l.b16 %v1702
        %v1962 = vunpack.c.l.b16 %v1703
        %v1963 = vunpack.c.h.b16 %v1703
        %v1964 = vunpack.c.l.b16 %v1704
        %v1965 = vunpack.c.h.b16 %v1704
        %v1966 = vunpack.c.l.b16 %v1705
        %v1967 = vunpack.c.l.b16 %v1706
        %v1968 = vunpack.c.h.b16 %v1706
        %v1969 = vunpack.c.l.b16 %v1707
        %v1970 = vunpack.c.h.b16 %v1707
        %v1971 = vunpack.c.l.b16 %v1708
        %v1972 = vunpack.c.l.b16 %v1709
        %v1973 = vunpack.c.h.b16 %v1709
        %v1974 = vunpack.c.l.b16 %v1710
        %v1975 = vunpack.c.h.b16 %v1710
        %v1976 = vunpack.c.l.b16 %v1711
        %v1977 = vunpack.c.l.b16 %v1712
        %v1978 = vunpack.c.h.b16 %v1712
        %v1979 = vunpack.c.l.b16 %v1713
        %v1980 = vunpack.c.h.b16 %v1713
        %v1981 = vunpack.c.l.b16 %v1714
        %v1982 = vunpack.c.l.b16 %v1715
        %v1983 = vunpack.c.h.b16 %v1715
        %v1984 = vunpack.c.l.b16 %v1716
        %v1985 = vunpack.c.h.b16 %v1716
        %v1986 = vunpack.c.l.b16 %v1717
        %v1987 = vunpack.c.l.b16 %v1718
        %v1988 = vunpack.c.h.b16 %v1718
        %v1989 = vunpack.c.l.b16 %v1719
        %v1990 = vunpack.c.h.b16 %v1719
        %v1991 = vunpack.c.l.b16 %v1720
        %v1992 = vunpack.c.l.b16 %v1721
        %v1993 = vunpack.c.h.b16 %v1721
        %v1994 = vunpack.c.l.b16 %v1722
        %v1995 = vunpack.c.h.b16 %v1722
        %v1996 = vunpack.c.l.b16 %v1723
        %v1997 = vunpack.c.l.b16 %v1724
        %v1998 = vunpack.c.h.b16 %v1724
        %v1999 = vunpack.c.l.b16 %v1725
        %v2000 = vunpack.c.h.b16 %v1725
        %v2001 = vunpack.c.l.b16 %v1726
        %v2002 = vunpack.c.l.b16 %v1727
        %v2003 = vunpack.c.h.b16 %v1727
        %v2004 = vunpack.c.l.b16 %v1728
        %v2005 = vunpack.c.h.b16 %v1728
        %v2006 = vunpack.c.l.b16 %v1729
        %v2007 = vunpack.c.l.b16 %v1730
        %v2008 = vunpack.c.h.b16 %v1730
        %v2009 = vunpack.c.l.b16 %v1731
        %v2010 = vunpack.c.h.b16 %v1731
        %v2011 = vunpack.c.l.b16 %v1732
        %v2012 = vunpack.c.l.b16 %v1733
        %v2013 = vunpack.c.h.b16 %v1733
        %v2014 = vunpack.c.l.b16 %v1734
        %v2015 = vunpack.c.h.b16 %v1734
        %v2016 = vunpack.c.l.b16 %v1735
        %v2017 = vunpack.c.l.b16 %v1736
        %v2018 = vunpack.c.h.b16 %v1736
        %v2019 = vunpack.c.l.b16 %v1737
        %v2020 = vunpack.c.h.b16 %v1737
        %v2021 = vunpack.c.l.b16 %v1738
        %v2022 = vpack.c.b16 %v1867, %v1862
        %v2023 = vpack.c.b16 %v1868, %v1863
        %v2024 = vpack.c.b16 %v1869, %v1864
        %v2025 = vpack.c.b16 %v1870, %v1865
        %v2026 = vpack.c.b16 %v1871, %v1866
        %v2027 = vpack.c.b16 %v1877, %v1872
        %v2028 = vpack.c.b16 %v1878, %v1873
        %v2029 = vpack.c.b16 %v1879, %v1874
        %v2030 = vpack.c.b16 %v1880, %v1875
        %v2031 = vpack.c.b16 %v1881, %v1876
        %v2032 = vpack.c.b16 %v1887, %v1882
        %v2033 = vpack.c.b16 %v1888, %v1883
        %v2034 = vpack.c.b16 %v1889, %v1884
        %v2035 = vpack.c.b16 %v1890, %v1885
        %v2036 = vpack.c.b16 %v1891, %v1886
        %v2037 = vpack.c.b16 %v1897, %v1892
        %v2038 = vpack.c.b16 %v1898, %v1893
        %v2039 = vpack.c.b16 %v1899, %v1894
        %v2040 = vpack.c.b16 %v1900, %v1895
        %v2041 = vpack.c.b16 %v1901, %v1896
        %v2042 = vpack.c.b16 %v1907, %v1902
        %v2043 = vpack.c.b16 %v1908, %v1903
        %v2044 = vpack.c.b16 %v1909, %v1904
        %v2045 = vpack.c.b16 %v1910, %v1905
        %v2046 = vpack.c.b16 %v1911, %v1906
        %v2047 = vpack.c.b16 %v1917, %v1912
        %v2048 = vpack.c.b16 %v1918, %v1913
        %v2049 = vpack.c.b16 %v1919, %v1914
        %v2050 = vpack.c.b16 %v1920, %v1915
        %v2051 = vpack.c.b16 %v1921, %v1916
        %v2052 = vpack.c.b16 %v1927, %v1922
        %v2053 = vpack.c.b16 %v1928, %v1923
        %v2054 = vpack.c.b16 %v1929, %v1924
        %v2055 = vpack.c.b16 %v1930, %v1925
        %v2056 = vpack.c.b16 %v1931, %v1926
        %v2057 = vpack.c.b16 %v1937, %v1932
        %v2058 = vpack.c.b16 %v1938, %v1933
        %v2059 = vpack.c.b16 %v1939, %v1934
        %v2060 = vpack.c.b16 %v1940, %v1935
        %v2061 = vpack.c.b16 %v1941, %v1936
        %v2062 = vpack.c.b16 %v1947, %v1942
        %v2063 = vpack.c.b16 %v1948, %v1943
        %v2064 = vpack.c.b16 %v1949, %v1944
        %v2065 = vpack.c.b16 %v1950, %v1945
        %v2066 = vpack.c.b16 %v1951, %v1946
        %v2067 = vpack.c.b16 %v1957, %v1952
        %v2068 = vpack.c.b16 %v1958, %v1953
        %v2069 = vpack.c.b16 %v1959, %v1954
        %v2070 = vpack.c.b16 %v1960, %v1955
        %v2071 = vpack.c.b16 %v1961, %v1956
        %v2072 = vpack.c.b16 %v1967, %v1962
        %v2073 = vpack.c.b16 %v1968, %v1963
        %v2074 = vpack.c.b16 %v1969, %v1964
        %v2075 = vpack.c.b16 %v1970, %v1965
        %v2076 = vpack.c.b16 %v1971, %v1966
        %v2077 = vpack.c.b16 %v1977, %v1972
        %v2078 = vpack.c.b16 %v1978, %v1973
        %v2079 = vpack.c.b16 %v1979, %v1974
        %v2080 = vpack.c.b16 %v1980, %v1975
        %v2081 = vpack.c.b16 %v1981, %v1976
        %v2082 = vpack.c.b16 %v1987, %v1982
        %v2083 = vpack.c.b16 %v1988, %v1983
        %v2084 = vpack.c.b16 %v1989, %v1984
        %v2085 = vpack.c.b16 %v1990, %v1985
        %v2086 = vpack.c.b16 %v1991, %v1986
        %v2087 = vpack.c.b16 %v1997, %v1992
        %v2088 = vpack.c.b16 %v1998, %v1993
        %v2089 = vpack.c.b16 %v1999, %v1994
        %v2090 = vpack.c.b16 %v2000, %v1995
        %v2091 = vpack.c.b16 %v2001, %v1996
        %v2092 = vpack.c.b16 %v2007, %v2002
        %v2093 = vpack.c.b16 %v2008, %v2003
        %v2094 = vpack.c.b16 %v2009, %v2004
        %v2095 = vpack.c.b16 %v2010, %v2005
        %v2096 = vpack.c.b16 %v2011, %v2006
        %v2097 = vpack.c.b16 %v2017, %v2012
        %v2098 = vpack.c.b16 %v2018, %v2013
        %v2099 = vpack.c.b16 %v2019, %v2014
        %v2100 = vpack.c.b16 %v2020, %v2015
        %v2101 = vpack.c.b16 %v2021, %v2016
        %2182 = vmatprep.subr.bf16.mxu0 %v2058
        %2183 = vmatpush1.bf16.msra.mxu0 %v2057
        %2184 = vmatprep.subr.bf16.mxu0 %v2053
        %2185 = vmatpush1.bf16.msra.mxu0 %v2052
        %2186 = vmatprep.subr.bf16.mxu0 %v2048
        %2187 = vmatpush1.bf16.msra.mxu0 %v2047
        %2188 = vmatprep.subr.bf16.mxu0 %v2043
        %2189 = vmatpush1.bf16.msra.mxu0 %v2042
        %2190 = vmatprep.subr.bf16.mxu0 %v2038
        %2191 = vmatpush1.bf16.msra.mxu0 %v2037
        %2192 = vmatprep.subr.bf16.mxu0 %v2033
        %2193 = vmatpush1.bf16.msra.mxu0 %v2032
        %2194 = vmatprep.subr.bf16.mxu0 %v2028
        %2195 = vmatpush1.bf16.msra.mxu0 %v2027
        %2196 = vmatprep.subr.bf16.mxu0 %v2023
        %2197 = vmatpush1.bf16.msra.mxu0 %v2022
        %2198 = vmatprep.subr.bf16.mxu0 %v2098
        %2199 = vmatpush2.bf16.msra.mxu0 %v2097
        %2200 = vmatprep.subr.bf16.mxu0 %v2093
        %2201 = vmatpush2.bf16.msra.mxu0 %v2092
        %2202 = vmatprep.subr.bf16.mxu0 %v2088
        %2203 = vmatpush2.bf16.msra.mxu0 %v2087
        %2204 = vmatprep.subr.bf16.mxu0 %v2083
        %2205 = vmatpush2.bf16.msra.mxu0 %v2082
        %2206 = vmatprep.subr.bf16.mxu0 %v2078
        %2207 = vmatpush2.bf16.msra.mxu0 %v2077
        %2208 = vmatprep.subr.bf16.mxu0 %v2073
        %2209 = vmatpush2.bf16.msra.mxu0 %v2072
        %2210 = vmatprep.subr.bf16.mxu0 %v2068
        %2211 = vmatpush2.bf16.msra.mxu0 %v2067
        %2212 = vmatprep.subr.bf16.mxu0 %v2063
        %2213 = vmatpush2.bf16.msra.mxu0 %v2062
        %2214 = vmatprep.mubr.bf16.mxu0 %v1636
        %2215 = vmatmul.mubr.bf16.gmra.mxu0 %v1635
        %v2216 = vpop.f32.mrf.mxu0
        %v2217 = vadd.f32 %v1744, %v2216
        %v2218 = vpop.f32.mrf.mxu0
        %v2219 = vadd.f32 %v1748, %v2218
        %v2220 = vpop.f32.mrf.mxu0
        %v2221 = vadd.f32 %v1744, %v2220
        %v2222 = vpop.f32.mrf.mxu0
        %v2223 = vadd.f32 %v1748, %v2222
        %2224 = vmatprep.mubr.bf16.mxu0 %v1638
        %2225 = vmatmul.mubr.bf16.gmra.mxu0 %v1637
        %v2226 = vpop.f32.mrf.mxu0
        %v2227 = vadd.f32 %v1744, %v2226
        %v2228 = vpop.f32.mrf.mxu0
        %v2229 = vadd.f32 %v1748, %v2228
        %v2230 = vpop.f32.mrf.mxu0
        %v2231 = vadd.f32 %v1744, %v2230
        %v2232 = vpop.f32.mrf.mxu0
        %v2233 = vadd.f32 %v1748, %v2232
        %2234 = vmatprep.mubr.bf16.mxu0 %v1640
        %2235 = vmatmul.mubr.bf16.gmra.mxu0 %v1639
        %v2236 = vpop.f32.mrf.mxu0
        %v2237 = vadd.f32 %v1744, %v2236
        %v2238 = vpop.f32.mrf.mxu0
        %v2239 = vadd.f32 %v1748, %v2238
        %v2240 = vpop.f32.mrf.mxu0
        %v2241 = vadd.f32 %v1744, %v2240
        %v2242 = vpop.f32.mrf.mxu0
        %v2243 = vadd.f32 %v1748, %v2242
        %2244 = vmatprep.mubr.bf16.mxu0 %v1642
        %2245 = vmatmul.mubr.bf16.gmra.mxu0 %v1641
        %v2246 = vpop.f32.mrf.mxu0
        %v2247 = vadd.f32 %v1744, %v2246
        %v2248 = vpop.f32.mrf.mxu0
        %v2249 = vadd.f32 %v1748, %v2248
        %v2250 = vpop.f32.mrf.mxu0
        %v2251 = vadd.f32 %v1744, %v2250
        %v2252 = vpop.f32.mrf.mxu0
        %v2253 = vadd.f32 %v1748, %v2252
        %2254 = vdwg.mxu0
        %2255 = vmatprep.subr.bf16.mxu0 %v2060
        %2256 = vmatpush1.bf16.msra.mxu0 %v2059
        %2257 = vmatprep.subr.bf16.mxu0 %v2055
        %2258 = vmatpush1.bf16.msra.mxu0 %v2054
        %2259 = vmatprep.subr.bf16.mxu0 %v2050
        %2260 = vmatpush1.bf16.msra.mxu0 %v2049
        %2261 = vmatprep.subr.bf16.mxu0 %v2045
        %2262 = vmatpush1.bf16.msra.mxu0 %v2044
        %2263 = vmatprep.subr.bf16.mxu0 %v2040
        %2264 = vmatpush1.bf16.msra.mxu0 %v2039
        %2265 = vmatprep.subr.bf16.mxu0 %v2035
        %2266 = vmatpush1.bf16.msra.mxu0 %v2034
        %2267 = vmatprep.subr.bf16.mxu0 %v2030
        %2268 = vmatpush1.bf16.msra.mxu0 %v2029
        %2269 = vmatprep.subr.bf16.mxu0 %v2025
        %2270 = vmatpush1.bf16.msra.mxu0 %v2024
        %2271 = vmatprep.subr.bf16.mxu0 %v2100
        %2272 = vmatpush2.bf16.msra.mxu0 %v2099
        %2273 = vmatprep.subr.bf16.mxu0 %v2095
        %2274 = vmatpush2.bf16.msra.mxu0 %v2094
        %2275 = vmatprep.subr.bf16.mxu0 %v2090
        %2276 = vmatpush2.bf16.msra.mxu0 %v2089
        %2277 = vmatprep.subr.bf16.mxu0 %v2085
        %2278 = vmatpush2.bf16.msra.mxu0 %v2084
        %2279 = vmatprep.subr.bf16.mxu0 %v2080
        %2280 = vmatpush2.bf16.msra.mxu0 %v2079
        %2281 = vmatprep.subr.bf16.mxu0 %v2075
        %2282 = vmatpush2.bf16.msra.mxu0 %v2074
        %2283 = vmatprep.subr.bf16.mxu0 %v2070
        %2284 = vmatpush2.bf16.msra.mxu0 %v2069
        %2285 = vmatprep.subr.bf16.mxu0 %v2065
        %2286 = vmatpush2.bf16.msra.mxu0 %v2064
        %2287 = vmatprep.mubr.bf16.mxu0 %v1636
        %2288 = vmatmul.mubr.bf16.gmra.mxu0 %v1635
        %v2289 = vpop.f32.mrf.mxu0
        %v2290 = vadd.f32 %v1752, %v2289
        %v2291 = vpop.f32.mrf.mxu0
        %v2292 = vadd.f32 %v1756, %v2291
        %v2293 = vpop.f32.mrf.mxu0
        %v2294 = vadd.f32 %v1752, %v2293
        %v2295 = vpop.f32.mrf.mxu0
        %v2296 = vadd.f32 %v1756, %v2295
        %2297 = vmatprep.mubr.bf16.mxu0 %v1638
        %2298 = vmatmul.mubr.bf16.gmra.mxu0 %v1637
        %v2299 = vpop.f32.mrf.mxu0
        %v2300 = vadd.f32 %v1752, %v2299
        %v2301 = vpop.f32.mrf.mxu0
        %v2302 = vadd.f32 %v1756, %v2301
        %v2303 = vpop.f32.mrf.mxu0
        %v2304 = vadd.f32 %v1752, %v2303
        %v2305 = vpop.f32.mrf.mxu0
        %v2306 = vadd.f32 %v1756, %v2305
        %2307 = vmatprep.mubr.bf16.mxu0 %v1640
        %2308 = vmatmul.mubr.bf16.gmra.mxu0 %v1639
        %v2309 = vpop.f32.mrf.mxu0
        %v2310 = vadd.f32 %v1752, %v2309
        %v2311 = vpop.f32.mrf.mxu0
        %v2312 = vadd.f32 %v1756, %v2311
        %v2313 = vpop.f32.mrf.mxu0
        %v2314 = vadd.f32 %v1752, %v2313
        %v2315 = vpop.f32.mrf.mxu0
        %v2316 = vadd.f32 %v1756, %v2315
        %2317 = vmatprep.mubr.bf16.mxu0 %v1642
        %2318 = vmatmul.mubr.bf16.gmra.mxu0 %v1641
        %v2319 = vpop.f32.mrf.mxu0
        %v2320 = vadd.f32 %v1752, %v2319
        %v2321 = vpop.f32.mrf.mxu0
        %v2322 = vadd.f32 %v1756, %v2321
        %v2323 = vpop.f32.mrf.mxu0
        %v2324 = vadd.f32 %v1752, %v2323
        %v2325 = vpop.f32.mrf.mxu0
        %v2326 = vadd.f32 %v1756, %v2325
        %2327 = vdwg.mxu0
        %2328 = vmatprep.subr.bf16.mxu0 0
        %2329 = vmatpush1.bf16.msra.mxu0 %v2061
        %2330 = vmatprep.subr.bf16.mxu0 0
        %2331 = vmatpush1.bf16.msra.mxu0 %v2056
        %2332 = vmatprep.subr.bf16.mxu0 0
        %2333 = vmatpush1.bf16.msra.mxu0 %v2051
        %2334 = vmatprep.subr.bf16.mxu0 0
        %2335 = vmatpush1.bf16.msra.mxu0 %v2046
        %2336 = vmatprep.subr.bf16.mxu0 0
        %2337 = vmatpush1.bf16.msra.mxu0 %v2041
        %2338 = vmatprep.subr.bf16.mxu0 0
        %2339 = vmatpush1.bf16.msra.mxu0 %v2036
        %2340 = vmatprep.subr.bf16.mxu0 0
        %2341 = vmatpush1.bf16.msra.mxu0 %v2031
        %2342 = vmatprep.subr.bf16.mxu0 0
        %2343 = vmatpush1.bf16.msra.mxu0 %v2026
        %2344 = vmatprep.subr.bf16.mxu0 0
        %2345 = vmatpush2.bf16.msra.mxu0 %v2101
        %2346 = vmatprep.subr.bf16.mxu0 0
        %2347 = vmatpush2.bf16.msra.mxu0 %v2096
        %2348 = vmatprep.subr.bf16.mxu0 0
        %2349 = vmatpush2.bf16.msra.mxu0 %v2091
        %2350 = vmatprep.subr.bf16.mxu0 0
        %2351 = vmatpush2.bf16.msra.mxu0 %v2086
        %2352 = vmatprep.subr.bf16.mxu0 0
        %2353 = vmatpush2.bf16.msra.mxu0 %v2081
        %2354 = vmatprep.subr.bf16.mxu0 0
        %2355 = vmatpush2.bf16.msra.mxu0 %v2076
        %2356 = vmatprep.subr.bf16.mxu0 0
        %2357 = vmatpush2.bf16.msra.mxu0 %v2071
        %2358 = vmatprep.subr.bf16.mxu0 0
        %2359 = vmatpush2.bf16.msra.mxu0 %v2066
        %2360 = vmatprep.mubr.bf16.mxu0 %v1636
        %2361 = vmatmul.mubr.bf16.gmra.mxu0 %v1635
        %v2362 = vpop.f32.mrf.mxu0
        %v2363 = vadd.f32 %v1760, %v2362
        %v2364 = vpop.f32.mrf.mxu0
        %v2365 = vpop.f32.mrf.mxu0
        %v2366 = vadd.f32 %v1760, %v2365
        %v2367 = vpop.f32.mrf.mxu0
        %2368 = vmatprep.mubr.bf16.mxu0 %v1638
        %2369 = vmatmul.mubr.bf16.gmra.mxu0 %v1637
        %v2370 = vpop.f32.mrf.mxu0
        %v2371 = vadd.f32 %v1760, %v2370
        %v2372 = vpop.f32.mrf.mxu0
        %v2373 = vpop.f32.mrf.mxu0
        %v2374 = vadd.f32 %v1760, %v2373
        %v2375 = vpop.f32.mrf.mxu0
        %2376 = vmatprep.mubr.bf16.mxu0 %v1640
        %2377 = vmatmul.mubr.bf16.gmra.mxu0 %v1639
        %v2378 = vpop.f32.mrf.mxu0
        %v2379 = vadd.f32 %v1760, %v2378
        %v2380 = vpop.f32.mrf.mxu0
        %v2381 = vpop.f32.mrf.mxu0
        %v2382 = vadd.f32 %v1760, %v2381
        %v2383 = vpop.f32.mrf.mxu0
        %2384 = vmatprep.mubr.bf16.mxu0 %v1642
        %2385 = vmatmul.mubr.bf16.gmra.mxu0 %v1641
        %v2386 = vpop.f32.mrf.mxu0
        %v2387 = vadd.f32 %v1760, %v2386
        %v2388 = vpop.f32.mrf.mxu0
        %v2389 = vpop.f32.mrf.mxu0
        %v2390 = vadd.f32 %v1760, %v2389
        %v2391 = vpop.f32.mrf.mxu0
        %2392 = vdwg.mxu0
        %v2393 = vmul.f32 %v2217, 0.25
        %v2394 = vmul.f32 %v2219, 0.25
        %v2395 = vmul.f32 %v2290, 0.25
        %v2396 = vmul.f32 %v2292, 0.25
        %v2397 = vmul.f32 %v2363, 0.25
        %v2398 = vmul.f32 %v2221, 0.25
        %v2399 = vmul.f32 %v2223, 0.25
        %v2400 = vmul.f32 %v2294, 0.25
        %v2401 = vmul.f32 %v2296, 0.25
        %v2402 = vmul.f32 %v2366, 0.25
        %v2403 = vmul.f32 %v2227, 0.25
        %v2404 = vmul.f32 %v2229, 0.25
        %v2405 = vmul.f32 %v2300, 0.25
        %v2406 = vmul.f32 %v2302, 0.25
        %v2407 = vmul.f32 %v2371, 0.25
        %v2408 = vmul.f32 %v2231, 0.25
        %v2409 = vmul.f32 %v2233, 0.25
        %v2410 = vmul.f32 %v2304, 0.25
        %v2411 = vmul.f32 %v2306, 0.25
        %v2412 = vmul.f32 %v2374, 0.25
        %v2413 = vmul.f32 %v2237, 0.25
        %v2414 = vmul.f32 %v2239, 0.25
        %v2415 = vmul.f32 %v2310, 0.25
        %v2416 = vmul.f32 %v2312, 0.25
        %v2417 = vmul.f32 %v2379, 0.25
        %v2418 = vmul.f32 %v2241, 0.25
        %v2419 = vmul.f32 %v2243, 0.25
        %v2420 = vmul.f32 %v2314, 0.25
        %v2421 = vmul.f32 %v2316, 0.25
        %v2422 = vmul.f32 %v2382, 0.25
        %v2423 = vmul.f32 %v2247, 0.25
        %v2424 = vmul.f32 %v2249, 0.25
        %v2425 = vmul.f32 %v2320, 0.25
        %v2426 = vmul.f32 %v2322, 0.25
        %v2427 = vmul.f32 %v2387, 0.25
        %v2428 = vmul.f32 %v2251, 0.25
        %v2429 = vmul.f32 %v2253, 0.25
        %v2430 = vmul.f32 %v2324, 0.25
        %v2431 = vmul.f32 %v2326, 0.25
        %v2432 = vmul.f32 %v2390, 0.25
        %v2433 = vmax.f32 %v2393, %v2394
        %v2434 = vmax.f32 %v2398, %v2399
        %v2435 = vmax.f32 %v2403, %v2404
        %v2436 = vmax.f32 %v2408, %v2409
        %v2437 = vmax.f32 %v2413, %v2414
        %v2438 = vmax.f32 %v2418, %v2419
        %v2439 = vmax.f32 %v2423, %v2424
        %v2440 = vmax.f32 %v2428, %v2429
        %v2441 = vmax.f32 %v2395, %v2396
        %v2442 = vmax.f32 %v2400, %v2401
        %v2443 = vmax.f32 %v2405, %v2406
        %v2444 = vmax.f32 %v2410, %v2411
        %v2445 = vmax.f32 %v2415, %v2416
        %v2446 = vmax.f32 %v2420, %v2421
        %v2447 = vmax.f32 %v2425, %v2426
        %v2448 = vmax.f32 %v2430, %v2431
        %v2449 = vmax.f32 %v2433, %v2441
        %v2450 = vmax.f32 %v2434, %v2442
        %v2451 = vmax.f32 %v2435, %v2443
        %v2452 = vmax.f32 %v2436, %v2444
        %v2453 = vmax.f32 %v2437, %v2445
        %v2454 = vmax.f32 %v2438, %v2446
        %v2455 = vmax.f32 %v2439, %v2447
        %v2456 = vmax.f32 %v2440, %v2448
        %2465 = vrot.lane.b32.xlu0 %v2449, 64
        %v2466 = vpop.permute.xlu0 %2465
        %2467 = vrot.lane.b32.xlu0 %v2450, 64
        %v2468 = vpop.permute.xlu0 %2467
        %2469 = vrot.lane.b32.xlu0 %v2451, 64
        %v2470 = vpop.permute.xlu0 %2469
        %2471 = vrot.lane.b32.xlu0 %v2452, 64
        %v2472 = vpop.permute.xlu0 %2471
        %2473 = vrot.lane.b32.xlu0 %v2453, 64
        %v2474 = vpop.permute.xlu0 %2473
        %2475 = vrot.lane.b32.xlu0 %v2454, 64
        %v2476 = vpop.permute.xlu0 %2475
        %2477 = vrot.lane.b32.xlu0 %v2455, 64
        %v2478 = vpop.permute.xlu0 %2477
        %2479 = vrot.lane.b32.xlu0 %v2456, 64
        %v2480 = vpop.permute.xlu0 %2479
        %v2489 = vmax.f32 %v2449, %v2466
        %v2490 = vmax.f32 %v2450, %v2468
        %v2491 = vmax.f32 %v2451, %v2470
        %v2492 = vmax.f32 %v2452, %v2472
        %v2493 = vmax.f32 %v2453, %v2474
        %v2494 = vmax.f32 %v2454, %v2476
        %v2495 = vmax.f32 %v2455, %v2478
        %v2496 = vmax.f32 %v2456, %v2480
        %v2497 = vmax.f32 %v2489, %v2397
        %v2498 = vmax.f32 %v2490, %v2402
        %v2499 = vmax.f32 %v2491, %v2407
        %v2500 = vmax.f32 %v2492, %v2412
        %v2501 = vmax.f32 %v2493, %v2417
        %v2502 = vmax.f32 %v2494, %v2422
        %v2503 = vmax.f32 %v2495, %v2427
        %v2504 = vmax.f32 %v2496, %v2432
        %2513 = vrot.lane.b32.xlu0 %v2497, 64
        %v2514 = vpop.permute.xlu0 %2513
        %2515 = vrot.lane.b32.xlu0 %v2498, 64
        %v2516 = vpop.permute.xlu0 %2515
        %2517 = vrot.lane.b32.xlu0 %v2499, 64
        %v2518 = vpop.permute.xlu0 %2517
        %2519 = vrot.lane.b32.xlu0 %v2500, 64
        %v2520 = vpop.permute.xlu0 %2519
        %2521 = vrot.lane.b32.xlu0 %v2501, 64
        %v2522 = vpop.permute.xlu0 %2521
        %2523 = vrot.lane.b32.xlu0 %v2502, 64
        %v2524 = vpop.permute.xlu0 %2523
        %2525 = vrot.lane.b32.xlu0 %v2503, 64
        %v2526 = vpop.permute.xlu0 %2525
        %2527 = vrot.lane.b32.xlu0 %v2504, 64
        %v2528 = vpop.permute.xlu0 %2527
        %vm2537 = vcmask 523264
        %v2538 = vsel %vm2537, %v2497, %v2514
        %v2539 = vsel %vm2537, %v2498, %v2516
        %v2540 = vsel %vm2537, %v2499, %v2518
        %v2541 = vsel %vm2537, %v2500, %v2520
        %v2542 = vsel %vm2537, %v2501, %v2522
        %v2543 = vsel %vm2537, %v2502, %v2524
        %v2544 = vsel %vm2537, %v2503, %v2526
        %v2545 = vsel %vm2537, %v2504, %v2528
        %v2546 = vsub.f32 %v2393, %v2538
        %v2547 = vsub.f32 %v2398, %v2539
        %v2548 = vsub.f32 %v2403, %v2540
        %v2549 = vsub.f32 %v2408, %v2541
        %v2550 = vsub.f32 %v2413, %v2542
        %v2551 = vsub.f32 %v2418, %v2543
        %v2552 = vsub.f32 %v2423, %v2544
        %v2553 = vsub.f32 %v2428, %v2545
        %v2554 = vmul.f32 %v2546, 1.442695
        %v2555 = vpow.pop %v2554
        %v2556 = vmul.f32 %v2547, 1.442695
        %v2557 = vpow.pop %v2556
        %v2558 = vmul.f32 %v2548, 1.442695
        %v2559 = vpow.pop %v2558
        %v2560 = vmul.f32 %v2549, 1.442695
        %v2561 = vpow.pop %v2560
        %v2562 = vmul.f32 %v2550, 1.442695
        %v2563 = vpow.pop %v2562
        %v2564 = vmul.f32 %v2551, 1.442695
        %v2565 = vpow.pop %v2564
        %v2566 = vmul.f32 %v2552, 1.442695
        %v2567 = vpow.pop %v2566
        %v2568 = vmul.f32 %v2553, 1.442695
        %v2569 = vpow.pop %v2568
        %v2570 = vsub.f32 %v2394, %v2538
        %v2571 = vsub.f32 %v2399, %v2539
        %v2572 = vsub.f32 %v2404, %v2540
        %v2573 = vsub.f32 %v2409, %v2541
        %v2574 = vsub.f32 %v2414, %v2542
        %v2575 = vsub.f32 %v2419, %v2543
        %v2576 = vsub.f32 %v2424, %v2544
        %v2577 = vsub.f32 %v2429, %v2545
        %v2578 = vmul.f32 %v2570, 1.442695
        %v2579 = vpow.pop %v2578
        %v2580 = vmul.f32 %v2571, 1.442695
        %v2581 = vpow.pop %v2580
        %v2582 = vmul.f32 %v2572, 1.442695
        %v2583 = vpow.pop %v2582
        %v2584 = vmul.f32 %v2573, 1.442695
        %v2585 = vpow.pop %v2584
        %v2586 = vmul.f32 %v2574, 1.442695
        %v2587 = vpow.pop %v2586
        %v2588 = vmul.f32 %v2575, 1.442695
        %v2589 = vpow.pop %v2588
        %v2590 = vmul.f32 %v2576, 1.442695
        %v2591 = vpow.pop %v2590
        %v2592 = vmul.f32 %v2577, 1.442695
        %v2593 = vpow.pop %v2592
        %v2594 = vsub.f32 %v2395, %v2538
        %v2595 = vsub.f32 %v2400, %v2539
        %v2596 = vsub.f32 %v2405, %v2540
        %v2597 = vsub.f32 %v2410, %v2541
        %v2598 = vsub.f32 %v2415, %v2542
        %v2599 = vsub.f32 %v2420, %v2543
        %v2600 = vsub.f32 %v2425, %v2544
        %v2601 = vsub.f32 %v2430, %v2545
        %v2602 = vmul.f32 %v2594, 1.442695
        %v2603 = vpow.pop %v2602
        %v2604 = vmul.f32 %v2595, 1.442695
        %v2605 = vpow.pop %v2604
        %v2606 = vmul.f32 %v2596, 1.442695
        %v2607 = vpow.pop %v2606
        %v2608 = vmul.f32 %v2597, 1.442695
        %v2609 = vpow.pop %v2608
        %v2610 = vmul.f32 %v2598, 1.442695
        %v2611 = vpow.pop %v2610
        %v2612 = vmul.f32 %v2599, 1.442695
        %v2613 = vpow.pop %v2612
        %v2614 = vmul.f32 %v2600, 1.442695
        %v2615 = vpow.pop %v2614
        %v2616 = vmul.f32 %v2601, 1.442695
        %v2617 = vpow.pop %v2616
        %v2618 = vsub.f32 %v2396, %v2538
        %v2619 = vsub.f32 %v2401, %v2539
        %v2620 = vsub.f32 %v2406, %v2540
        %v2621 = vsub.f32 %v2411, %v2541
        %v2622 = vsub.f32 %v2416, %v2542
        %v2623 = vsub.f32 %v2421, %v2543
        %v2624 = vsub.f32 %v2426, %v2544
        %v2625 = vsub.f32 %v2431, %v2545
        %v2626 = vmul.f32 %v2618, 1.442695
        %v2627 = vpow.pop %v2626
        %v2628 = vmul.f32 %v2619, 1.442695
        %v2629 = vpow.pop %v2628
        %v2630 = vmul.f32 %v2620, 1.442695
        %v2631 = vpow.pop %v2630
        %v2632 = vmul.f32 %v2621, 1.442695
        %v2633 = vpow.pop %v2632
        %v2634 = vmul.f32 %v2622, 1.442695
        %v2635 = vpow.pop %v2634
        %v2636 = vmul.f32 %v2623, 1.442695
        %v2637 = vpow.pop %v2636
        %v2638 = vmul.f32 %v2624, 1.442695
        %v2639 = vpow.pop %v2638
        %v2640 = vmul.f32 %v2625, 1.442695
        %v2641 = vpow.pop %v2640
        %v2642 = vsub.f32 %v2397, %v2497
        %v2643 = vsub.f32 %v2402, %v2498
        %v2644 = vsub.f32 %v2407, %v2499
        %v2645 = vsub.f32 %v2412, %v2500
        %v2646 = vsub.f32 %v2417, %v2501
        %v2647 = vsub.f32 %v2422, %v2502
        %v2648 = vsub.f32 %v2427, %v2503
        %v2649 = vsub.f32 %v2432, %v2504
        %v2650 = vmul.f32 %v2642, 1.442695
        %v2651 = vpow.pop %v2650
        %v2652 = vmul.f32 %v2643, 1.442695
        %v2653 = vpow.pop %v2652
        %v2654 = vmul.f32 %v2644, 1.442695
        %v2655 = vpow.pop %v2654
        %v2656 = vmul.f32 %v2645, 1.442695
        %v2657 = vpow.pop %v2656
        %v2658 = vmul.f32 %v2646, 1.442695
        %v2659 = vpow.pop %v2658
        %v2660 = vmul.f32 %v2647, 1.442695
        %v2661 = vpow.pop %v2660
        %v2662 = vmul.f32 %v2648, 1.442695
        %v2663 = vpow.pop %v2662
        %v2664 = vmul.f32 %v2649, 1.442695
        %v2665 = vpow.pop %v2664
        %v2666 = vadd.f32 %v2555, %v2579
        %v2667 = vadd.f32 %v2557, %v2581
        %v2668 = vadd.f32 %v2559, %v2583
        %v2669 = vadd.f32 %v2561, %v2585
        %v2670 = vadd.f32 %v2563, %v2587
        %v2671 = vadd.f32 %v2565, %v2589
        %v2672 = vadd.f32 %v2567, %v2591
        %v2673 = vadd.f32 %v2569, %v2593
        %v2674 = vadd.f32 %v2603, %v2627
        %v2675 = vadd.f32 %v2605, %v2629
        %v2676 = vadd.f32 %v2607, %v2631
        %v2677 = vadd.f32 %v2609, %v2633
        %v2678 = vadd.f32 %v2611, %v2635
        %v2679 = vadd.f32 %v2613, %v2637
        %v2680 = vadd.f32 %v2615, %v2639
        %v2681 = vadd.f32 %v2617, %v2641
        %v2682 = vadd.f32 %v2666, %v2674
        %v2683 = vadd.f32 %v2667, %v2675
        %v2684 = vadd.f32 %v2668, %v2676
        %v2685 = vadd.f32 %v2669, %v2677
        %v2686 = vadd.f32 %v2670, %v2678
        %v2687 = vadd.f32 %v2671, %v2679
        %v2688 = vadd.f32 %v2672, %v2680
        %v2689 = vadd.f32 %v2673, %v2681
        %2698 = vrot.lane.b32.xlu0 %v2682, 64
        %v2699 = vpop.permute.xlu0 %2698
        %2700 = vrot.lane.b32.xlu0 %v2683, 64
        %v2701 = vpop.permute.xlu0 %2700
        %2702 = vrot.lane.b32.xlu0 %v2684, 64
        %v2703 = vpop.permute.xlu0 %2702
        %2704 = vrot.lane.b32.xlu0 %v2685, 64
        %v2705 = vpop.permute.xlu0 %2704
        %2706 = vrot.lane.b32.xlu0 %v2686, 64
        %v2707 = vpop.permute.xlu0 %2706
        %2708 = vrot.lane.b32.xlu0 %v2687, 64
        %v2709 = vpop.permute.xlu0 %2708
        %2710 = vrot.lane.b32.xlu0 %v2688, 64
        %v2711 = vpop.permute.xlu0 %2710
        %2712 = vrot.lane.b32.xlu0 %v2689, 64
        %v2713 = vpop.permute.xlu0 %2712
        %v2722 = vadd.f32 %v2682, %v2699
        %v2723 = vadd.f32 %v2683, %v2701
        %v2724 = vadd.f32 %v2684, %v2703
        %v2725 = vadd.f32 %v2685, %v2705
        %v2726 = vadd.f32 %v2686, %v2707
        %v2727 = vadd.f32 %v2687, %v2709
        %v2728 = vadd.f32 %v2688, %v2711
        %v2729 = vadd.f32 %v2689, %v2713
        %v2730 = vadd.f32 %v2722, %v2651
        %v2731 = vadd.f32 %v2723, %v2653
        %v2732 = vadd.f32 %v2724, %v2655
        %v2733 = vadd.f32 %v2725, %v2657
        %v2734 = vadd.f32 %v2726, %v2659
        %v2735 = vadd.f32 %v2727, %v2661
        %v2736 = vadd.f32 %v2728, %v2663
        %v2737 = vadd.f32 %v2729, %v2665
        %v2738 = vrcp.pop %v2730
        %v2739 = vrcp.pop %v2731
        %v2740 = vrcp.pop %v2732
        %v2741 = vrcp.pop %v2733
        %v2742 = vrcp.pop %v2734
        %v2743 = vrcp.pop %v2735
        %v2744 = vrcp.pop %v2736
        %v2745 = vrcp.pop %v2737
        %s2746 = smul.u32 %s286, 16
        %s2747 = scalar_lea.vmem %s283, %s2746
        %v2748 = vld [vmem:[%s2747] sm:$0xff]
        %v2749 = vld [vmem:[%s2747 + $0x10] sm:$0xff]
        %v2750 = vld [vmem:[%s2747 + $0x20] sm:$0xff]
        %v2751 = vld [vmem:[%s2747 + $0x30] sm:$0xff]
        %v2752 = vld [vmem:[%s2747 + $0x40] sm:$0xff]
        %v2753 = vld [vmem:[%s2747 + $0x50] sm:$0xff]
        %v2754 = vld [vmem:[%s2747 + $0x60] sm:$0xff]
        %v2755 = vld [vmem:[%s2747 + $0x70] sm:$0xff]
        %2757 = vset.pattern.permute.xlu0 0
        %2758 = vperm.xlu0 %2757, %v2748
        %v2759 = vpop.permute.xlu0 %2758
        %2762 = vset.pattern.permute.xlu0 0
        %2763 = vperm.xlu0 %2762, %v2749
        %v2764 = vpop.permute.xlu0 %2763
        %2767 = vset.pattern.permute.xlu0 0
        %2768 = vperm.xlu0 %2767, %v2750
        %v2769 = vpop.permute.xlu0 %2768
        %2772 = vset.pattern.permute.xlu0 0
        %2773 = vperm.xlu0 %2772, %v2751
        %v2774 = vpop.permute.xlu0 %2773
        %2777 = vset.pattern.permute.xlu0 0
        %2778 = vperm.xlu0 %2777, %v2752
        %v2779 = vpop.permute.xlu0 %2778
        %2782 = vset.pattern.permute.xlu0 0
        %2783 = vperm.xlu0 %2782, %v2753
        %v2784 = vpop.permute.xlu0 %2783
        %2787 = vset.pattern.permute.xlu0 0
        %2788 = vperm.xlu0 %2787, %v2754
        %v2789 = vpop.permute.xlu0 %2788
        %2792 = vset.pattern.permute.xlu0 0
        %2793 = vperm.xlu0 %2792, %v2755
        %v2794 = vpop.permute.xlu0 %2793
        %v2796 = vmul.f32 %v2555, %v2759
        %v2797 = vmul.f32 %v2557, %v2764
        %v2798 = vmul.f32 %v2559, %v2769
        %v2799 = vmul.f32 %v2561, %v2774
        %v2800 = vmul.f32 %v2563, %v2779
        %v2801 = vmul.f32 %v2565, %v2784
        %v2802 = vmul.f32 %v2567, %v2789
        %v2803 = vmul.f32 %v2569, %v2794
        %v2804 = vadd.f32 %v2796, 0.0
        %v2805 = vadd.f32 %v2797, 0.0
        %v2806 = vadd.f32 %v2798, 0.0
        %v2807 = vadd.f32 %v2799, 0.0
        %v2808 = vadd.f32 %v2800, 0.0
        %v2809 = vadd.f32 %v2801, 0.0
        %v2810 = vadd.f32 %v2802, 0.0
        %v2811 = vadd.f32 %v2803, 0.0
        %2812 = vset.pattern.permute.xlu0 1
        %2813 = vperm.xlu0 %2812, %v2748
        %v2814 = vpop.permute.xlu0 %2813
        %2816 = vset.pattern.permute.xlu0 1
        %2817 = vperm.xlu0 %2816, %v2749
        %v2818 = vpop.permute.xlu0 %2817
        %2820 = vset.pattern.permute.xlu0 1
        %2821 = vperm.xlu0 %2820, %v2750
        %v2822 = vpop.permute.xlu0 %2821
        %2824 = vset.pattern.permute.xlu0 1
        %2825 = vperm.xlu0 %2824, %v2751
        %v2826 = vpop.permute.xlu0 %2825
        %2828 = vset.pattern.permute.xlu0 1
        %2829 = vperm.xlu0 %2828, %v2752
        %v2830 = vpop.permute.xlu0 %2829
        %2832 = vset.pattern.permute.xlu0 1
        %2833 = vperm.xlu0 %2832, %v2753
        %v2834 = vpop.permute.xlu0 %2833
        %2836 = vset.pattern.permute.xlu0 1
        %2837 = vperm.xlu0 %2836, %v2754
        %v2838 = vpop.permute.xlu0 %2837
        %2840 = vset.pattern.permute.xlu0 1
        %2841 = vperm.xlu0 %2840, %v2755
        %v2842 = vpop.permute.xlu0 %2841
        %v2844 = vmul.f32 %v2555, %v2814
        %v2845 = vmul.f32 %v2557, %v2818
        %v2846 = vmul.f32 %v2559, %v2822
        %v2847 = vmul.f32 %v2561, %v2826
        %v2848 = vmul.f32 %v2563, %v2830
        %v2849 = vmul.f32 %v2565, %v2834
        %v2850 = vmul.f32 %v2567, %v2838
        %v2851 = vmul.f32 %v2569, %v2842
        %v2852 = vadd.f32 %v2844, 0.0
        %v2853 = vadd.f32 %v2845, 0.0
        %v2854 = vadd.f32 %v2846, 0.0
        %v2855 = vadd.f32 %v2847, 0.0
        %v2856 = vadd.f32 %v2848, 0.0
        %v2857 = vadd.f32 %v2849, 0.0
        %v2858 = vadd.f32 %v2850, 0.0
        %v2859 = vadd.f32 %v2851, 0.0
        %v2860 = vld [vmem:[%s2747 + $0x1] sm:$0xff]
        %v2861 = vld [vmem:[%s2747 + $0x11] sm:$0xff]
        %v2862 = vld [vmem:[%s2747 + $0x21] sm:$0xff]
        %v2863 = vld [vmem:[%s2747 + $0x31] sm:$0xff]
        %v2864 = vld [vmem:[%s2747 + $0x41] sm:$0xff]
        %v2865 = vld [vmem:[%s2747 + $0x51] sm:$0xff]
        %v2866 = vld [vmem:[%s2747 + $0x61] sm:$0xff]
        %v2867 = vld [vmem:[%s2747 + $0x71] sm:$0xff]
        %2869 = vset.pattern.permute.xlu0 0
        %2870 = vperm.xlu0 %2869, %v2860
        %v2871 = vpop.permute.xlu0 %2870
        %2874 = vset.pattern.permute.xlu0 0
        %2875 = vperm.xlu0 %2874, %v2861
        %v2876 = vpop.permute.xlu0 %2875
        %2879 = vset.pattern.permute.xlu0 0
        %2880 = vperm.xlu0 %2879, %v2862
        %v2881 = vpop.permute.xlu0 %2880
        %2884 = vset.pattern.permute.xlu0 0
        %2885 = vperm.xlu0 %2884, %v2863
        %v2886 = vpop.permute.xlu0 %2885
        %2889 = vset.pattern.permute.xlu0 0
        %2890 = vperm.xlu0 %2889, %v2864
        %v2891 = vpop.permute.xlu0 %2890
        %2894 = vset.pattern.permute.xlu0 0
        %2895 = vperm.xlu0 %2894, %v2865
        %v2896 = vpop.permute.xlu0 %2895
        %2899 = vset.pattern.permute.xlu0 0
        %2900 = vperm.xlu0 %2899, %v2866
        %v2901 = vpop.permute.xlu0 %2900
        %2904 = vset.pattern.permute.xlu0 0
        %2905 = vperm.xlu0 %2904, %v2867
        %v2906 = vpop.permute.xlu0 %2905
        %v2908 = vmul.f32 %v2555, %v2871
        %v2909 = vmul.f32 %v2557, %v2876
        %v2910 = vmul.f32 %v2559, %v2881
        %v2911 = vmul.f32 %v2561, %v2886
        %v2912 = vmul.f32 %v2563, %v2891
        %v2913 = vmul.f32 %v2565, %v2896
        %v2914 = vmul.f32 %v2567, %v2901
        %v2915 = vmul.f32 %v2569, %v2906
        %2924 = vrot.lane.b32.xlu0 %v2908, 64
        %v2925 = vpop.permute.xlu0 %2924
        %2926 = vrot.lane.b32.xlu0 %v2909, 64
        %v2927 = vpop.permute.xlu0 %2926
        %2928 = vrot.lane.b32.xlu0 %v2910, 64
        %v2929 = vpop.permute.xlu0 %2928
        %2930 = vrot.lane.b32.xlu0 %v2911, 64
        %v2931 = vpop.permute.xlu0 %2930
        %2932 = vrot.lane.b32.xlu0 %v2912, 64
        %v2933 = vpop.permute.xlu0 %2932
        %2934 = vrot.lane.b32.xlu0 %v2913, 64
        %v2935 = vpop.permute.xlu0 %2934
        %2936 = vrot.lane.b32.xlu0 %v2914, 64
        %v2937 = vpop.permute.xlu0 %2936
        %2938 = vrot.lane.b32.xlu0 %v2915, 64
        %v2939 = vpop.permute.xlu0 %2938
        %v2948 = vadd.f32 %v2804, %v2925
        %v2949 = vadd.f32 %v2805, %v2927
        %v2950 = vadd.f32 %v2806, %v2929
        %v2951 = vadd.f32 %v2807, %v2931
        %v2952 = vadd.f32 %v2808, %v2933
        %v2953 = vadd.f32 %v2809, %v2935
        %v2954 = vadd.f32 %v2810, %v2937
        %v2955 = vadd.f32 %v2811, %v2939
        %2956 = vset.pattern.permute.xlu0 1
        %2957 = vperm.xlu0 %2956, %v2860
        %v2958 = vpop.permute.xlu0 %2957
        %2960 = vset.pattern.permute.xlu0 1
        %2961 = vperm.xlu0 %2960, %v2861
        %v2962 = vpop.permute.xlu0 %2961
        %2964 = vset.pattern.permute.xlu0 1
        %2965 = vperm.xlu0 %2964, %v2862
        %v2966 = vpop.permute.xlu0 %2965
        %2968 = vset.pattern.permute.xlu0 1
        %2969 = vperm.xlu0 %2968, %v2863
        %v2970 = vpop.permute.xlu0 %2969
        %2972 = vset.pattern.permute.xlu0 1
        %2973 = vperm.xlu0 %2972, %v2864
        %v2974 = vpop.permute.xlu0 %2973
        %2976 = vset.pattern.permute.xlu0 1
        %2977 = vperm.xlu0 %2976, %v2865
        %v2978 = vpop.permute.xlu0 %2977
        %2980 = vset.pattern.permute.xlu0 1
        %2981 = vperm.xlu0 %2980, %v2866
        %v2982 = vpop.permute.xlu0 %2981
        %2984 = vset.pattern.permute.xlu0 1
        %2985 = vperm.xlu0 %2984, %v2867
        %v2986 = vpop.permute.xlu0 %2985
        %v2988 = vmul.f32 %v2555, %v2958
        %v2989 = vmul.f32 %v2557, %v2962
        %v2990 = vmul.f32 %v2559, %v2966
        %v2991 = vmul.f32 %v2561, %v2970
        %v2992 = vmul.f32 %v2563, %v2974
        %v2993 = vmul.f32 %v2565, %v2978
        %v2994 = vmul.f32 %v2567, %v2982
        %v2995 = vmul.f32 %v2569, %v2986
        %3004 = vrot.lane.b32.xlu0 %v2988, 64
        %v3005 = vpop.permute.xlu0 %3004
        %3006 = vrot.lane.b32.xlu0 %v2989, 64
        %v3007 = vpop.permute.xlu0 %3006
        %3008 = vrot.lane.b32.xlu0 %v2990, 64
        %v3009 = vpop.permute.xlu0 %3008
        %3010 = vrot.lane.b32.xlu0 %v2991, 64
        %v3011 = vpop.permute.xlu0 %3010
        %3012 = vrot.lane.b32.xlu0 %v2992, 64
        %v3013 = vpop.permute.xlu0 %3012
        %3014 = vrot.lane.b32.xlu0 %v2993, 64
        %v3015 = vpop.permute.xlu0 %3014
        %3016 = vrot.lane.b32.xlu0 %v2994, 64
        %v3017 = vpop.permute.xlu0 %3016
        %3018 = vrot.lane.b32.xlu0 %v2995, 64
        %v3019 = vpop.permute.xlu0 %3018
        %v3028 = vadd.f32 %v2852, %v3005
        %v3029 = vadd.f32 %v2853, %v3007
        %v3030 = vadd.f32 %v2854, %v3009
        %v3031 = vadd.f32 %v2855, %v3011
        %v3032 = vadd.f32 %v2856, %v3013
        %v3033 = vadd.f32 %v2857, %v3015
        %v3034 = vadd.f32 %v2858, %v3017
        %v3035 = vadd.f32 %v2859, %v3019
        %v3036 = vld [vmem:[%s2747 + $0x2] sm:$0xff]
        %v3037 = vld [vmem:[%s2747 + $0x12] sm:$0xff]
        %v3038 = vld [vmem:[%s2747 + $0x22] sm:$0xff]
        %v3039 = vld [vmem:[%s2747 + $0x32] sm:$0xff]
        %v3040 = vld [vmem:[%s2747 + $0x42] sm:$0xff]
        %v3041 = vld [vmem:[%s2747 + $0x52] sm:$0xff]
        %v3042 = vld [vmem:[%s2747 + $0x62] sm:$0xff]
        %v3043 = vld [vmem:[%s2747 + $0x72] sm:$0xff]
        %3045 = vset.pattern.permute.xlu0 0
        %3046 = vperm.xlu0 %3045, %v3036
        %v3047 = vpop.permute.xlu0 %3046
        %3050 = vset.pattern.permute.xlu0 0
        %3051 = vperm.xlu0 %3050, %v3037
        %v3052 = vpop.permute.xlu0 %3051
        %3055 = vset.pattern.permute.xlu0 0
        %3056 = vperm.xlu0 %3055, %v3038
        %v3057 = vpop.permute.xlu0 %3056
        %3060 = vset.pattern.permute.xlu0 0
        %3061 = vperm.xlu0 %3060, %v3039
        %v3062 = vpop.permute.xlu0 %3061
        %3065 = vset.pattern.permute.xlu0 0
        %3066 = vperm.xlu0 %3065, %v3040
        %v3067 = vpop.permute.xlu0 %3066
        %3070 = vset.pattern.permute.xlu0 0
        %3071 = vperm.xlu0 %3070, %v3041
        %v3072 = vpop.permute.xlu0 %3071
        %3075 = vset.pattern.permute.xlu0 0
        %3076 = vperm.xlu0 %3075, %v3042
        %v3077 = vpop.permute.xlu0 %3076
        %3080 = vset.pattern.permute.xlu0 0
        %3081 = vperm.xlu0 %3080, %v3043
        %v3082 = vpop.permute.xlu0 %3081
        %v3084 = vmul.f32 %v2579, %v3047
        %v3085 = vmul.f32 %v2581, %v3052
        %v3086 = vmul.f32 %v2583, %v3057
        %v3087 = vmul.f32 %v2585, %v3062
        %v3088 = vmul.f32 %v2587, %v3067
        %v3089 = vmul.f32 %v2589, %v3072
        %v3090 = vmul.f32 %v2591, %v3077
        %v3091 = vmul.f32 %v2593, %v3082
        %v3092 = vadd.f32 %v2948, %v3084
        %v3093 = vadd.f32 %v2949, %v3085
        %v3094 = vadd.f32 %v2950, %v3086
        %v3095 = vadd.f32 %v2951, %v3087
        %v3096 = vadd.f32 %v2952, %v3088
        %v3097 = vadd.f32 %v2953, %v3089
        %v3098 = vadd.f32 %v2954, %v3090
        %v3099 = vadd.f32 %v2955, %v3091
        %3100 = vset.pattern.permute.xlu0 1
        %3101 = vperm.xlu0 %3100, %v3036
        %v3102 = vpop.permute.xlu0 %3101
        %3104 = vset.pattern.permute.xlu0 1
        %3105 = vperm.xlu0 %3104, %v3037
        %v3106 = vpop.permute.xlu0 %3105
        %3108 = vset.pattern.permute.xlu0 1
        %3109 = vperm.xlu0 %3108, %v3038
        %v3110 = vpop.permute.xlu0 %3109
        %3112 = vset.pattern.permute.xlu0 1
        %3113 = vperm.xlu0 %3112, %v3039
        %v3114 = vpop.permute.xlu0 %3113
        %3116 = vset.pattern.permute.xlu0 1
        %3117 = vperm.xlu0 %3116, %v3040
        %v3118 = vpop.permute.xlu0 %3117
        %3120 = vset.pattern.permute.xlu0 1
        %3121 = vperm.xlu0 %3120, %v3041
        %v3122 = vpop.permute.xlu0 %3121
        %3124 = vset.pattern.permute.xlu0 1
        %3125 = vperm.xlu0 %3124, %v3042
        %v3126 = vpop.permute.xlu0 %3125
        %3128 = vset.pattern.permute.xlu0 1
        %3129 = vperm.xlu0 %3128, %v3043
        %v3130 = vpop.permute.xlu0 %3129
        %v3132 = vmul.f32 %v2579, %v3102
        %v3133 = vmul.f32 %v2581, %v3106
        %v3134 = vmul.f32 %v2583, %v3110
        %v3135 = vmul.f32 %v2585, %v3114
        %v3136 = vmul.f32 %v2587, %v3118
        %v3137 = vmul.f32 %v2589, %v3122
        %v3138 = vmul.f32 %v2591, %v3126
        %v3139 = vmul.f32 %v2593, %v3130
        %v3140 = vadd.f32 %v3028, %v3132
        %v3141 = vadd.f32 %v3029, %v3133
        %v3142 = vadd.f32 %v3030, %v3134
        %v3143 = vadd.f32 %v3031, %v3135
        %v3144 = vadd.f32 %v3032, %v3136
        %v3145 = vadd.f32 %v3033, %v3137
        %v3146 = vadd.f32 %v3034, %v3138
        %v3147 = vadd.f32 %v3035, %v3139
        %s3148 = smul.u32 %s571, 16
        %s3149 = scalar_lea.vmem %s283, %s3148
        %v3150 = vld [vmem:[%s3149] sm:$0xff]
        %v3151 = vld [vmem:[%s3149 + $0x10] sm:$0xff]
        %v3152 = vld [vmem:[%s3149 + $0x20] sm:$0xff]
        %v3153 = vld [vmem:[%s3149 + $0x30] sm:$0xff]
        %v3154 = vld [vmem:[%s3149 + $0x40] sm:$0xff]
        %v3155 = vld [vmem:[%s3149 + $0x50] sm:$0xff]
        %v3156 = vld [vmem:[%s3149 + $0x60] sm:$0xff]
        %v3157 = vld [vmem:[%s3149 + $0x70] sm:$0xff]
        %3159 = vset.pattern.permute.xlu0 0
        %3160 = vperm.xlu0 %3159, %v3150
        %v3161 = vpop.permute.xlu0 %3160
        %3164 = vset.pattern.permute.xlu0 0
        %3165 = vperm.xlu0 %3164, %v3151
        %v3166 = vpop.permute.xlu0 %3165
        %3169 = vset.pattern.permute.xlu0 0
        %3170 = vperm.xlu0 %3169, %v3152
        %v3171 = vpop.permute.xlu0 %3170
        %3174 = vset.pattern.permute.xlu0 0
        %3175 = vperm.xlu0 %3174, %v3153
        %v3176 = vpop.permute.xlu0 %3175
        %3179 = vset.pattern.permute.xlu0 0
        %3180 = vperm.xlu0 %3179, %v3154
        %v3181 = vpop.permute.xlu0 %3180
        %3184 = vset.pattern.permute.xlu0 0
        %3185 = vperm.xlu0 %3184, %v3155
        %v3186 = vpop.permute.xlu0 %3185
        %3189 = vset.pattern.permute.xlu0 0
        %3190 = vperm.xlu0 %3189, %v3156
        %v3191 = vpop.permute.xlu0 %3190
        %3194 = vset.pattern.permute.xlu0 0
        %3195 = vperm.xlu0 %3194, %v3157
        %v3196 = vpop.permute.xlu0 %3195
        %v3198 = vmul.f32 %v2579, %v3161
        %v3199 = vmul.f32 %v2581, %v3166
        %v3200 = vmul.f32 %v2583, %v3171
        %v3201 = vmul.f32 %v2585, %v3176
        %v3202 = vmul.f32 %v2587, %v3181
        %v3203 = vmul.f32 %v2589, %v3186
        %v3204 = vmul.f32 %v2591, %v3191
        %v3205 = vmul.f32 %v2593, %v3196
        %3214 = vrot.lane.b32.xlu0 %v3198, 64
        %v3215 = vpop.permute.xlu0 %3214
        %3216 = vrot.lane.b32.xlu0 %v3199, 64
        %v3217 = vpop.permute.xlu0 %3216
        %3218 = vrot.lane.b32.xlu0 %v3200, 64
        %v3219 = vpop.permute.xlu0 %3218
        %3220 = vrot.lane.b32.xlu0 %v3201, 64
        %v3221 = vpop.permute.xlu0 %3220
        %3222 = vrot.lane.b32.xlu0 %v3202, 64
        %v3223 = vpop.permute.xlu0 %3222
        %3224 = vrot.lane.b32.xlu0 %v3203, 64
        %v3225 = vpop.permute.xlu0 %3224
        %3226 = vrot.lane.b32.xlu0 %v3204, 64
        %v3227 = vpop.permute.xlu0 %3226
        %3228 = vrot.lane.b32.xlu0 %v3205, 64
        %v3229 = vpop.permute.xlu0 %3228
        %v3238 = vadd.f32 %v3092, %v3215
        %v3239 = vadd.f32 %v3093, %v3217
        %v3240 = vadd.f32 %v3094, %v3219
        %v3241 = vadd.f32 %v3095, %v3221
        %v3242 = vadd.f32 %v3096, %v3223
        %v3243 = vadd.f32 %v3097, %v3225
        %v3244 = vadd.f32 %v3098, %v3227
        %v3245 = vadd.f32 %v3099, %v3229
        %3246 = vset.pattern.permute.xlu0 1
        %3247 = vperm.xlu0 %3246, %v3150
        %v3248 = vpop.permute.xlu0 %3247
        %3250 = vset.pattern.permute.xlu0 1
        %3251 = vperm.xlu0 %3250, %v3151
        %v3252 = vpop.permute.xlu0 %3251
        %3254 = vset.pattern.permute.xlu0 1
        %3255 = vperm.xlu0 %3254, %v3152
        %v3256 = vpop.permute.xlu0 %3255
        %3258 = vset.pattern.permute.xlu0 1
        %3259 = vperm.xlu0 %3258, %v3153
        %v3260 = vpop.permute.xlu0 %3259
        %3262 = vset.pattern.permute.xlu0 1
        %3263 = vperm.xlu0 %3262, %v3154
        %v3264 = vpop.permute.xlu0 %3263
        %3266 = vset.pattern.permute.xlu0 1
        %3267 = vperm.xlu0 %3266, %v3155
        %v3268 = vpop.permute.xlu0 %3267
        %3270 = vset.pattern.permute.xlu0 1
        %3271 = vperm.xlu0 %3270, %v3156
        %v3272 = vpop.permute.xlu0 %3271
        %3274 = vset.pattern.permute.xlu0 1
        %3275 = vperm.xlu0 %3274, %v3157
        %v3276 = vpop.permute.xlu0 %3275
        %v3278 = vmul.f32 %v2579, %v3248
        %v3279 = vmul.f32 %v2581, %v3252
        %v3280 = vmul.f32 %v2583, %v3256
        %v3281 = vmul.f32 %v2585, %v3260
        %v3282 = vmul.f32 %v2587, %v3264
        %v3283 = vmul.f32 %v2589, %v3268
        %v3284 = vmul.f32 %v2591, %v3272
        %v3285 = vmul.f32 %v2593, %v3276
        %3294 = vrot.lane.b32.xlu0 %v3278, 64
        %v3295 = vpop.permute.xlu0 %3294
        %3296 = vrot.lane.b32.xlu0 %v3279, 64
        %v3297 = vpop.permute.xlu0 %3296
        %3298 = vrot.lane.b32.xlu0 %v3280, 64
        %v3299 = vpop.permute.xlu0 %3298
        %3300 = vrot.lane.b32.xlu0 %v3281, 64
        %v3301 = vpop.permute.xlu0 %3300
        %3302 = vrot.lane.b32.xlu0 %v3282, 64
        %v3303 = vpop.permute.xlu0 %3302
        %3304 = vrot.lane.b32.xlu0 %v3283, 64
        %v3305 = vpop.permute.xlu0 %3304
        %3306 = vrot.lane.b32.xlu0 %v3284, 64
        %v3307 = vpop.permute.xlu0 %3306
        %3308 = vrot.lane.b32.xlu0 %v3285, 64
        %v3309 = vpop.permute.xlu0 %3308
        %v3318 = vadd.f32 %v3140, %v3295
        %v3319 = vadd.f32 %v3141, %v3297
        %v3320 = vadd.f32 %v3142, %v3299
        %v3321 = vadd.f32 %v3143, %v3301
        %v3322 = vadd.f32 %v3144, %v3303
        %v3323 = vadd.f32 %v3145, %v3305
        %v3324 = vadd.f32 %v3146, %v3307
        %v3325 = vadd.f32 %v3147, %v3309
        %v3326 = vld [vmem:[%s3149 + $0x1] sm:$0xff]
        %v3327 = vld [vmem:[%s3149 + $0x11] sm:$0xff]
        %v3328 = vld [vmem:[%s3149 + $0x21] sm:$0xff]
        %v3329 = vld [vmem:[%s3149 + $0x31] sm:$0xff]
        %v3330 = vld [vmem:[%s3149 + $0x41] sm:$0xff]
        %v3331 = vld [vmem:[%s3149 + $0x51] sm:$0xff]
        %v3332 = vld [vmem:[%s3149 + $0x61] sm:$0xff]
        %v3333 = vld [vmem:[%s3149 + $0x71] sm:$0xff]
        %3335 = vset.pattern.permute.xlu0 0
        %3336 = vperm.xlu0 %3335, %v3326
        %v3337 = vpop.permute.xlu0 %3336
        %3340 = vset.pattern.permute.xlu0 0
        %3341 = vperm.xlu0 %3340, %v3327
        %v3342 = vpop.permute.xlu0 %3341
        %3345 = vset.pattern.permute.xlu0 0
        %3346 = vperm.xlu0 %3345, %v3328
        %v3347 = vpop.permute.xlu0 %3346
        %3350 = vset.pattern.permute.xlu0 0
        %3351 = vperm.xlu0 %3350, %v3329
        %v3352 = vpop.permute.xlu0 %3351
        %3355 = vset.pattern.permute.xlu0 0
        %3356 = vperm.xlu0 %3355, %v3330
        %v3357 = vpop.permute.xlu0 %3356
        %3360 = vset.pattern.permute.xlu0 0
        %3361 = vperm.xlu0 %3360, %v3331
        %v3362 = vpop.permute.xlu0 %3361
        %3365 = vset.pattern.permute.xlu0 0
        %3366 = vperm.xlu0 %3365, %v3332
        %v3367 = vpop.permute.xlu0 %3366
        %3370 = vset.pattern.permute.xlu0 0
        %3371 = vperm.xlu0 %3370, %v3333
        %v3372 = vpop.permute.xlu0 %3371
        %v3374 = vmul.f32 %v2603, %v3337
        %v3375 = vmul.f32 %v2605, %v3342
        %v3376 = vmul.f32 %v2607, %v3347
        %v3377 = vmul.f32 %v2609, %v3352
        %v3378 = vmul.f32 %v2611, %v3357
        %v3379 = vmul.f32 %v2613, %v3362
        %v3380 = vmul.f32 %v2615, %v3367
        %v3381 = vmul.f32 %v2617, %v3372
        %v3382 = vadd.f32 %v3238, %v3374
        %v3383 = vadd.f32 %v3239, %v3375
        %v3384 = vadd.f32 %v3240, %v3376
        %v3385 = vadd.f32 %v3241, %v3377
        %v3386 = vadd.f32 %v3242, %v3378
        %v3387 = vadd.f32 %v3243, %v3379
        %v3388 = vadd.f32 %v3244, %v3380
        %v3389 = vadd.f32 %v3245, %v3381
        %3390 = vset.pattern.permute.xlu0 1
        %3391 = vperm.xlu0 %3390, %v3326
        %v3392 = vpop.permute.xlu0 %3391
        %3394 = vset.pattern.permute.xlu0 1
        %3395 = vperm.xlu0 %3394, %v3327
        %v3396 = vpop.permute.xlu0 %3395
        %3398 = vset.pattern.permute.xlu0 1
        %3399 = vperm.xlu0 %3398, %v3328
        %v3400 = vpop.permute.xlu0 %3399
        %3402 = vset.pattern.permute.xlu0 1
        %3403 = vperm.xlu0 %3402, %v3329
        %v3404 = vpop.permute.xlu0 %3403
        %3406 = vset.pattern.permute.xlu0 1
        %3407 = vperm.xlu0 %3406, %v3330
        %v3408 = vpop.permute.xlu0 %3407
        %3410 = vset.pattern.permute.xlu0 1
        %3411 = vperm.xlu0 %3410, %v3331
        %v3412 = vpop.permute.xlu0 %3411
        %3414 = vset.pattern.permute.xlu0 1
        %3415 = vperm.xlu0 %3414, %v3332
        %v3416 = vpop.permute.xlu0 %3415
        %3418 = vset.pattern.permute.xlu0 1
        %3419 = vperm.xlu0 %3418, %v3333
        %v3420 = vpop.permute.xlu0 %3419
        %v3422 = vmul.f32 %v2603, %v3392
        %v3423 = vmul.f32 %v2605, %v3396
        %v3424 = vmul.f32 %v2607, %v3400
        %v3425 = vmul.f32 %v2609, %v3404
        %v3426 = vmul.f32 %v2611, %v3408
        %v3427 = vmul.f32 %v2613, %v3412
        %v3428 = vmul.f32 %v2615, %v3416
        %v3429 = vmul.f32 %v2617, %v3420
        %v3430 = vadd.f32 %v3318, %v3422
        %v3431 = vadd.f32 %v3319, %v3423
        %v3432 = vadd.f32 %v3320, %v3424
        %v3433 = vadd.f32 %v3321, %v3425
        %v3434 = vadd.f32 %v3322, %v3426
        %v3435 = vadd.f32 %v3323, %v3427
        %v3436 = vadd.f32 %v3324, %v3428
        %v3437 = vadd.f32 %v3325, %v3429
        %v3438 = vld [vmem:[%s3149 + $0x2] sm:$0xff]
        %v3439 = vld [vmem:[%s3149 + $0x12] sm:$0xff]
        %v3440 = vld [vmem:[%s3149 + $0x22] sm:$0xff]
        %v3441 = vld [vmem:[%s3149 + $0x32] sm:$0xff]
        %v3442 = vld [vmem:[%s3149 + $0x42] sm:$0xff]
        %v3443 = vld [vmem:[%s3149 + $0x52] sm:$0xff]
        %v3444 = vld [vmem:[%s3149 + $0x62] sm:$0xff]
        %v3445 = vld [vmem:[%s3149 + $0x72] sm:$0xff]
        %3447 = vset.pattern.permute.xlu0 0
        %3448 = vperm.xlu0 %3447, %v3438
        %v3449 = vpop.permute.xlu0 %3448
        %3452 = vset.pattern.permute.xlu0 0
        %3453 = vperm.xlu0 %3452, %v3439
        %v3454 = vpop.permute.xlu0 %3453
        %3457 = vset.pattern.permute.xlu0 0
        %3458 = vperm.xlu0 %3457, %v3440
        %v3459 = vpop.permute.xlu0 %3458
        %3462 = vset.pattern.permute.xlu0 0
        %3463 = vperm.xlu0 %3462, %v3441
        %v3464 = vpop.permute.xlu0 %3463
        %3467 = vset.pattern.permute.xlu0 0
        %3468 = vperm.xlu0 %3467, %v3442
        %v3469 = vpop.permute.xlu0 %3468
        %3472 = vset.pattern.permute.xlu0 0
        %3473 = vperm.xlu0 %3472, %v3443
        %v3474 = vpop.permute.xlu0 %3473
        %3477 = vset.pattern.permute.xlu0 0
        %3478 = vperm.xlu0 %3477, %v3444
        %v3479 = vpop.permute.xlu0 %3478
        %3482 = vset.pattern.permute.xlu0 0
        %3483 = vperm.xlu0 %3482, %v3445
        %v3484 = vpop.permute.xlu0 %3483
        %v3486 = vmul.f32 %v2603, %v3449
        %v3487 = vmul.f32 %v2605, %v3454
        %v3488 = vmul.f32 %v2607, %v3459
        %v3489 = vmul.f32 %v2609, %v3464
        %v3490 = vmul.f32 %v2611, %v3469
        %v3491 = vmul.f32 %v2613, %v3474
        %v3492 = vmul.f32 %v2615, %v3479
        %v3493 = vmul.f32 %v2617, %v3484
        %3502 = vrot.lane.b32.xlu0 %v3486, 64
        %v3503 = vpop.permute.xlu0 %3502
        %3504 = vrot.lane.b32.xlu0 %v3487, 64
        %v3505 = vpop.permute.xlu0 %3504
        %3506 = vrot.lane.b32.xlu0 %v3488, 64
        %v3507 = vpop.permute.xlu0 %3506
        %3508 = vrot.lane.b32.xlu0 %v3489, 64
        %v3509 = vpop.permute.xlu0 %3508
        %3510 = vrot.lane.b32.xlu0 %v3490, 64
        %v3511 = vpop.permute.xlu0 %3510
        %3512 = vrot.lane.b32.xlu0 %v3491, 64
        %v3513 = vpop.permute.xlu0 %3512
        %3514 = vrot.lane.b32.xlu0 %v3492, 64
        %v3515 = vpop.permute.xlu0 %3514
        %3516 = vrot.lane.b32.xlu0 %v3493, 64
        %v3517 = vpop.permute.xlu0 %3516
        %v3526 = vadd.f32 %v3382, %v3503
        %v3527 = vadd.f32 %v3383, %v3505
        %v3528 = vadd.f32 %v3384, %v3507
        %v3529 = vadd.f32 %v3385, %v3509
        %v3530 = vadd.f32 %v3386, %v3511
        %v3531 = vadd.f32 %v3387, %v3513
        %v3532 = vadd.f32 %v3388, %v3515
        %v3533 = vadd.f32 %v3389, %v3517
        %3534 = vset.pattern.permute.xlu0 1
        %3535 = vperm.xlu0 %3534, %v3438
        %v3536 = vpop.permute.xlu0 %3535
        %3538 = vset.pattern.permute.xlu0 1
        %3539 = vperm.xlu0 %3538, %v3439
        %v3540 = vpop.permute.xlu0 %3539
        %3542 = vset.pattern.permute.xlu0 1
        %3543 = vperm.xlu0 %3542, %v3440
        %v3544 = vpop.permute.xlu0 %3543
        %3546 = vset.pattern.permute.xlu0 1
        %3547 = vperm.xlu0 %3546, %v3441
        %v3548 = vpop.permute.xlu0 %3547
        %3550 = vset.pattern.permute.xlu0 1
        %3551 = vperm.xlu0 %3550, %v3442
        %v3552 = vpop.permute.xlu0 %3551
        %3554 = vset.pattern.permute.xlu0 1
        %3555 = vperm.xlu0 %3554, %v3443
        %v3556 = vpop.permute.xlu0 %3555
        %3558 = vset.pattern.permute.xlu0 1
        %3559 = vperm.xlu0 %3558, %v3444
        %v3560 = vpop.permute.xlu0 %3559
        %3562 = vset.pattern.permute.xlu0 1
        %3563 = vperm.xlu0 %3562, %v3445
        %v3564 = vpop.permute.xlu0 %3563
        %v3566 = vmul.f32 %v2603, %v3536
        %v3567 = vmul.f32 %v2605, %v3540
        %v3568 = vmul.f32 %v2607, %v3544
        %v3569 = vmul.f32 %v2609, %v3548
        %v3570 = vmul.f32 %v2611, %v3552
        %v3571 = vmul.f32 %v2613, %v3556
        %v3572 = vmul.f32 %v2615, %v3560
        %v3573 = vmul.f32 %v2617, %v3564
        %3582 = vrot.lane.b32.xlu0 %v3566, 64
        %v3583 = vpop.permute.xlu0 %3582
        %3584 = vrot.lane.b32.xlu0 %v3567, 64
        %v3585 = vpop.permute.xlu0 %3584
        %3586 = vrot.lane.b32.xlu0 %v3568, 64
        %v3587 = vpop.permute.xlu0 %3586
        %3588 = vrot.lane.b32.xlu0 %v3569, 64
        %v3589 = vpop.permute.xlu0 %3588
        %3590 = vrot.lane.b32.xlu0 %v3570, 64
        %v3591 = vpop.permute.xlu0 %3590
        %3592 = vrot.lane.b32.xlu0 %v3571, 64
        %v3593 = vpop.permute.xlu0 %3592
        %3594 = vrot.lane.b32.xlu0 %v3572, 64
        %v3595 = vpop.permute.xlu0 %3594
        %3596 = vrot.lane.b32.xlu0 %v3573, 64
        %v3597 = vpop.permute.xlu0 %3596
        %v3606 = vadd.f32 %v3430, %v3583
        %v3607 = vadd.f32 %v3431, %v3585
        %v3608 = vadd.f32 %v3432, %v3587
        %v3609 = vadd.f32 %v3433, %v3589
        %v3610 = vadd.f32 %v3434, %v3591
        %v3611 = vadd.f32 %v3435, %v3593
        %v3612 = vadd.f32 %v3436, %v3595
        %v3613 = vadd.f32 %v3437, %v3597
        %s3614 = smul.u32 %s864, 16
        %s3615 = scalar_lea.vmem %s283, %s3614
        %v3616 = vld [vmem:[%s3615] sm:$0xff]
        %v3617 = vld [vmem:[%s3615 + $0x10] sm:$0xff]
        %v3618 = vld [vmem:[%s3615 + $0x20] sm:$0xff]
        %v3619 = vld [vmem:[%s3615 + $0x30] sm:$0xff]
        %v3620 = vld [vmem:[%s3615 + $0x40] sm:$0xff]
        %v3621 = vld [vmem:[%s3615 + $0x50] sm:$0xff]
        %v3622 = vld [vmem:[%s3615 + $0x60] sm:$0xff]
        %v3623 = vld [vmem:[%s3615 + $0x70] sm:$0xff]
        %3625 = vset.pattern.permute.xlu0 0
        %3626 = vperm.xlu0 %3625, %v3616
        %v3627 = vpop.permute.xlu0 %3626
        %3630 = vset.pattern.permute.xlu0 0
        %3631 = vperm.xlu0 %3630, %v3617
        %v3632 = vpop.permute.xlu0 %3631
        %3635 = vset.pattern.permute.xlu0 0
        %3636 = vperm.xlu0 %3635, %v3618
        %v3637 = vpop.permute.xlu0 %3636
        %3640 = vset.pattern.permute.xlu0 0
        %3641 = vperm.xlu0 %3640, %v3619
        %v3642 = vpop.permute.xlu0 %3641
        %3645 = vset.pattern.permute.xlu0 0
        %3646 = vperm.xlu0 %3645, %v3620
        %v3647 = vpop.permute.xlu0 %3646
        %3650 = vset.pattern.permute.xlu0 0
        %3651 = vperm.xlu0 %3650, %v3621
        %v3652 = vpop.permute.xlu0 %3651
        %3655 = vset.pattern.permute.xlu0 0
        %3656 = vperm.xlu0 %3655, %v3622
        %v3657 = vpop.permute.xlu0 %3656
        %3660 = vset.pattern.permute.xlu0 0
        %3661 = vperm.xlu0 %3660, %v3623
        %v3662 = vpop.permute.xlu0 %3661
        %v3664 = vmul.f32 %v2627, %v3627
        %v3665 = vmul.f32 %v2629, %v3632
        %v3666 = vmul.f32 %v2631, %v3637
        %v3667 = vmul.f32 %v2633, %v3642
        %v3668 = vmul.f32 %v2635, %v3647
        %v3669 = vmul.f32 %v2637, %v3652
        %v3670 = vmul.f32 %v2639, %v3657
        %v3671 = vmul.f32 %v2641, %v3662
        %v3672 = vadd.f32 %v3526, %v3664
        %v3673 = vadd.f32 %v3527, %v3665
        %v3674 = vadd.f32 %v3528, %v3666
        %v3675 = vadd.f32 %v3529, %v3667
        %v3676 = vadd.f32 %v3530, %v3668
        %v3677 = vadd.f32 %v3531, %v3669
        %v3678 = vadd.f32 %v3532, %v3670
        %v3679 = vadd.f32 %v3533, %v3671
        %3680 = vset.pattern.permute.xlu0 1
        %3681 = vperm.xlu0 %3680, %v3616
        %v3682 = vpop.permute.xlu0 %3681
        %3684 = vset.pattern.permute.xlu0 1
        %3685 = vperm.xlu0 %3684, %v3617
        %v3686 = vpop.permute.xlu0 %3685
        %3688 = vset.pattern.permute.xlu0 1
        %3689 = vperm.xlu0 %3688, %v3618
        %v3690 = vpop.permute.xlu0 %3689
        %3692 = vset.pattern.permute.xlu0 1
        %3693 = vperm.xlu0 %3692, %v3619
        %v3694 = vpop.permute.xlu0 %3693
        %3696 = vset.pattern.permute.xlu0 1
        %3697 = vperm.xlu0 %3696, %v3620
        %v3698 = vpop.permute.xlu0 %3697
        %3700 = vset.pattern.permute.xlu0 1
        %3701 = vperm.xlu0 %3700, %v3621
        %v3702 = vpop.permute.xlu0 %3701
        %3704 = vset.pattern.permute.xlu0 1
        %3705 = vperm.xlu0 %3704, %v3622
        %v3706 = vpop.permute.xlu0 %3705
        %3708 = vset.pattern.permute.xlu0 1
        %3709 = vperm.xlu0 %3708, %v3623
        %v3710 = vpop.permute.xlu0 %3709
        %v3712 = vmul.f32 %v2627, %v3682
        %v3713 = vmul.f32 %v2629, %v3686
        %v3714 = vmul.f32 %v2631, %v3690
        %v3715 = vmul.f32 %v2633, %v3694
        %v3716 = vmul.f32 %v2635, %v3698
        %v3717 = vmul.f32 %v2637, %v3702
        %v3718 = vmul.f32 %v2639, %v3706
        %v3719 = vmul.f32 %v2641, %v3710
        %v3720 = vadd.f32 %v3606, %v3712
        %v3721 = vadd.f32 %v3607, %v3713
        %v3722 = vadd.f32 %v3608, %v3714
        %v3723 = vadd.f32 %v3609, %v3715
        %v3724 = vadd.f32 %v3610, %v3716
        %v3725 = vadd.f32 %v3611, %v3717
        %v3726 = vadd.f32 %v3612, %v3718
        %v3727 = vadd.f32 %v3613, %v3719
        %v3728 = vld [vmem:[%s3615 + $0x1] sm:$0xff]
        %v3729 = vld [vmem:[%s3615 + $0x11] sm:$0xff]
        %v3730 = vld [vmem:[%s3615 + $0x21] sm:$0xff]
        %v3731 = vld [vmem:[%s3615 + $0x31] sm:$0xff]
        %v3732 = vld [vmem:[%s3615 + $0x41] sm:$0xff]
        %v3733 = vld [vmem:[%s3615 + $0x51] sm:$0xff]
        %v3734 = vld [vmem:[%s3615 + $0x61] sm:$0xff]
        %v3735 = vld [vmem:[%s3615 + $0x71] sm:$0xff]
        %3737 = vset.pattern.permute.xlu0 0
        %3738 = vperm.xlu0 %3737, %v3728
        %v3739 = vpop.permute.xlu0 %3738
        %3742 = vset.pattern.permute.xlu0 0
        %3743 = vperm.xlu0 %3742, %v3729
        %v3744 = vpop.permute.xlu0 %3743
        %3747 = vset.pattern.permute.xlu0 0
        %3748 = vperm.xlu0 %3747, %v3730
        %v3749 = vpop.permute.xlu0 %3748
        %3752 = vset.pattern.permute.xlu0 0
        %3753 = vperm.xlu0 %3752, %v3731
        %v3754 = vpop.permute.xlu0 %3753
        %3757 = vset.pattern.permute.xlu0 0
        %3758 = vperm.xlu0 %3757, %v3732
        %v3759 = vpop.permute.xlu0 %3758
        %3762 = vset.pattern.permute.xlu0 0
        %3763 = vperm.xlu0 %3762, %v3733
        %v3764 = vpop.permute.xlu0 %3763
        %3767 = vset.pattern.permute.xlu0 0
        %3768 = vperm.xlu0 %3767, %v3734
        %v3769 = vpop.permute.xlu0 %3768
        %3772 = vset.pattern.permute.xlu0 0
        %3773 = vperm.xlu0 %3772, %v3735
        %v3774 = vpop.permute.xlu0 %3773
        %v3776 = vmul.f32 %v2627, %v3739
        %v3777 = vmul.f32 %v2629, %v3744
        %v3778 = vmul.f32 %v2631, %v3749
        %v3779 = vmul.f32 %v2633, %v3754
        %v3780 = vmul.f32 %v2635, %v3759
        %v3781 = vmul.f32 %v2637, %v3764
        %v3782 = vmul.f32 %v2639, %v3769
        %v3783 = vmul.f32 %v2641, %v3774
        %3792 = vrot.lane.b32.xlu0 %v3776, 64
        %v3793 = vpop.permute.xlu0 %3792
        %3794 = vrot.lane.b32.xlu0 %v3777, 64
        %v3795 = vpop.permute.xlu0 %3794
        %3796 = vrot.lane.b32.xlu0 %v3778, 64
        %v3797 = vpop.permute.xlu0 %3796
        %3798 = vrot.lane.b32.xlu0 %v3779, 64
        %v3799 = vpop.permute.xlu0 %3798
        %3800 = vrot.lane.b32.xlu0 %v3780, 64
        %v3801 = vpop.permute.xlu0 %3800
        %3802 = vrot.lane.b32.xlu0 %v3781, 64
        %v3803 = vpop.permute.xlu0 %3802
        %3804 = vrot.lane.b32.xlu0 %v3782, 64
        %v3805 = vpop.permute.xlu0 %3804
        %3806 = vrot.lane.b32.xlu0 %v3783, 64
        %v3807 = vpop.permute.xlu0 %3806
        %v3816 = vadd.f32 %v3672, %v3793
        %v3817 = vadd.f32 %v3673, %v3795
        %v3818 = vadd.f32 %v3674, %v3797
        %v3819 = vadd.f32 %v3675, %v3799
        %v3820 = vadd.f32 %v3676, %v3801
        %v3821 = vadd.f32 %v3677, %v3803
        %v3822 = vadd.f32 %v3678, %v3805
        %v3823 = vadd.f32 %v3679, %v3807
        %3824 = vset.pattern.permute.xlu0 1
        %3825 = vperm.xlu0 %3824, %v3728
        %v3826 = vpop.permute.xlu0 %3825
        %3828 = vset.pattern.permute.xlu0 1
        %3829 = vperm.xlu0 %3828, %v3729
        %v3830 = vpop.permute.xlu0 %3829
        %3832 = vset.pattern.permute.xlu0 1
        %3833 = vperm.xlu0 %3832, %v3730
        %v3834 = vpop.permute.xlu0 %3833
        %3836 = vset.pattern.permute.xlu0 1
        %3837 = vperm.xlu0 %3836, %v3731
        %v3838 = vpop.permute.xlu0 %3837
        %3840 = vset.pattern.permute.xlu0 1
        %3841 = vperm.xlu0 %3840, %v3732
        %v3842 = vpop.permute.xlu0 %3841
        %3844 = vset.pattern.permute.xlu0 1
        %3845 = vperm.xlu0 %3844, %v3733
        %v3846 = vpop.permute.xlu0 %3845
        %3848 = vset.pattern.permute.xlu0 1
        %3849 = vperm.xlu0 %3848, %v3734
        %v3850 = vpop.permute.xlu0 %3849
        %3852 = vset.pattern.permute.xlu0 1
        %3853 = vperm.xlu0 %3852, %v3735
        %v3854 = vpop.permute.xlu0 %3853
        %v3856 = vmul.f32 %v2627, %v3826
        %v3857 = vmul.f32 %v2629, %v3830
        %v3858 = vmul.f32 %v2631, %v3834
        %v3859 = vmul.f32 %v2633, %v3838
        %v3860 = vmul.f32 %v2635, %v3842
        %v3861 = vmul.f32 %v2637, %v3846
        %v3862 = vmul.f32 %v2639, %v3850
        %v3863 = vmul.f32 %v2641, %v3854
        %3872 = vrot.lane.b32.xlu0 %v3856, 64
        %v3873 = vpop.permute.xlu0 %3872
        %3874 = vrot.lane.b32.xlu0 %v3857, 64
        %v3875 = vpop.permute.xlu0 %3874
        %3876 = vrot.lane.b32.xlu0 %v3858, 64
        %v3877 = vpop.permute.xlu0 %3876
        %3878 = vrot.lane.b32.xlu0 %v3859, 64
        %v3879 = vpop.permute.xlu0 %3878
        %3880 = vrot.lane.b32.xlu0 %v3860, 64
        %v3881 = vpop.permute.xlu0 %3880
        %3882 = vrot.lane.b32.xlu0 %v3861, 64
        %v3883 = vpop.permute.xlu0 %3882
        %3884 = vrot.lane.b32.xlu0 %v3862, 64
        %v3885 = vpop.permute.xlu0 %3884
        %3886 = vrot.lane.b32.xlu0 %v3863, 64
        %v3887 = vpop.permute.xlu0 %3886
        %v3896 = vadd.f32 %v3720, %v3873
        %v3897 = vadd.f32 %v3721, %v3875
        %v3898 = vadd.f32 %v3722, %v3877
        %v3899 = vadd.f32 %v3723, %v3879
        %v3900 = vadd.f32 %v3724, %v3881
        %v3901 = vadd.f32 %v3725, %v3883
        %v3902 = vadd.f32 %v3726, %v3885
        %v3903 = vadd.f32 %v3727, %v3887
        %v3904 = vld [vmem:[%s3615 + $0x2] sm:$0xff]
        %v3905 = vld [vmem:[%s3615 + $0x12] sm:$0xff]
        %v3906 = vld [vmem:[%s3615 + $0x22] sm:$0xff]
        %v3907 = vld [vmem:[%s3615 + $0x32] sm:$0xff]
        %v3908 = vld [vmem:[%s3615 + $0x42] sm:$0xff]
        %v3909 = vld [vmem:[%s3615 + $0x52] sm:$0xff]
        %v3910 = vld [vmem:[%s3615 + $0x62] sm:$0xff]
        %v3911 = vld [vmem:[%s3615 + $0x72] sm:$0xff]
        %3913 = vset.pattern.permute.xlu0 0
        %3914 = vperm.xlu0 %3913, %v3904
        %v3915 = vpop.permute.xlu0 %3914
        %3918 = vset.pattern.permute.xlu0 0
        %3919 = vperm.xlu0 %3918, %v3905
        %v3920 = vpop.permute.xlu0 %3919
        %3923 = vset.pattern.permute.xlu0 0
        %3924 = vperm.xlu0 %3923, %v3906
        %v3925 = vpop.permute.xlu0 %3924
        %3928 = vset.pattern.permute.xlu0 0
        %3929 = vperm.xlu0 %3928, %v3907
        %v3930 = vpop.permute.xlu0 %3929
        %3933 = vset.pattern.permute.xlu0 0
        %3934 = vperm.xlu0 %3933, %v3908
        %v3935 = vpop.permute.xlu0 %3934
        %3938 = vset.pattern.permute.xlu0 0
        %3939 = vperm.xlu0 %3938, %v3909
        %v3940 = vpop.permute.xlu0 %3939
        %3943 = vset.pattern.permute.xlu0 0
        %3944 = vperm.xlu0 %3943, %v3910
        %v3945 = vpop.permute.xlu0 %3944
        %3948 = vset.pattern.permute.xlu0 0
        %3949 = vperm.xlu0 %3948, %v3911
        %v3950 = vpop.permute.xlu0 %3949
        %v3952 = vmul.f32 %v2651, %v3915
        %v3953 = vmul.f32 %v2653, %v3920
        %v3954 = vmul.f32 %v2655, %v3925
        %v3955 = vmul.f32 %v2657, %v3930
        %v3956 = vmul.f32 %v2659, %v3935
        %v3957 = vmul.f32 %v2661, %v3940
        %v3958 = vmul.f32 %v2663, %v3945
        %v3959 = vmul.f32 %v2665, %v3950
        %v3960 = vadd.f32 %v3816, %v3952
        %v3961 = vadd.f32 %v3817, %v3953
        %v3962 = vadd.f32 %v3818, %v3954
        %v3963 = vadd.f32 %v3819, %v3955
        %v3964 = vadd.f32 %v3820, %v3956
        %v3965 = vadd.f32 %v3821, %v3957
        %v3966 = vadd.f32 %v3822, %v3958
        %v3967 = vadd.f32 %v3823, %v3959
        %3968 = vset.pattern.permute.xlu0 1
        %3969 = vperm.xlu0 %3968, %v3904
        %v3970 = vpop.permute.xlu0 %3969
        %3972 = vset.pattern.permute.xlu0 1
        %3973 = vperm.xlu0 %3972, %v3905
        %v3974 = vpop.permute.xlu0 %3973
        %3976 = vset.pattern.permute.xlu0 1
        %3977 = vperm.xlu0 %3976, %v3906
        %v3978 = vpop.permute.xlu0 %3977
        %3980 = vset.pattern.permute.xlu0 1
        %3981 = vperm.xlu0 %3980, %v3907
        %v3982 = vpop.permute.xlu0 %3981
        %3984 = vset.pattern.permute.xlu0 1
        %3985 = vperm.xlu0 %3984, %v3908
        %v3986 = vpop.permute.xlu0 %3985
        %3988 = vset.pattern.permute.xlu0 1
        %3989 = vperm.xlu0 %3988, %v3909
        %v3990 = vpop.permute.xlu0 %3989
        %3992 = vset.pattern.permute.xlu0 1
        %3993 = vperm.xlu0 %3992, %v3910
        %v3994 = vpop.permute.xlu0 %3993
        %3996 = vset.pattern.permute.xlu0 1
        %3997 = vperm.xlu0 %3996, %v3911
        %v3998 = vpop.permute.xlu0 %3997
        %v4000 = vmul.f32 %v2651, %v3970
        %v4001 = vmul.f32 %v2653, %v3974
        %v4002 = vmul.f32 %v2655, %v3978
        %v4003 = vmul.f32 %v2657, %v3982
        %v4004 = vmul.f32 %v2659, %v3986
        %v4005 = vmul.f32 %v2661, %v3990
        %v4006 = vmul.f32 %v2663, %v3994
        %v4007 = vmul.f32 %v2665, %v3998
        %v4008 = vadd.f32 %v3896, %v4000
        %v4009 = vadd.f32 %v3897, %v4001
        %v4010 = vadd.f32 %v3898, %v4002
        %v4011 = vadd.f32 %v3899, %v4003
        %v4012 = vadd.f32 %v3900, %v4004
        %v4013 = vadd.f32 %v3901, %v4005
        %v4014 = vadd.f32 %v3902, %v4006
        %v4015 = vadd.f32 %v3903, %v4007
        %v4016 = vmul.f32 %v2738, 8.0
        %v4017 = vmul.f32 %v2739, 8.0
        %v4018 = vmul.f32 %v2740, 8.0
        %v4019 = vmul.f32 %v2741, 8.0
        %v4020 = vmul.f32 %v2742, 8.0
        %v4021 = vmul.f32 %v2743, 8.0
        %v4022 = vmul.f32 %v2744, 8.0
        %v4023 = vmul.f32 %v2745, 8.0
        %v4024 = vmul.f32 %v3960, %v4016
        %v4025 = vmul.f32 %v3961, %v4017
        %v4026 = vmul.f32 %v3962, %v4018
        %v4027 = vmul.f32 %v3963, %v4019
        %v4028 = vmul.f32 %v3964, %v4020
        %v4029 = vmul.f32 %v3965, %v4021
        %v4030 = vmul.f32 %v3966, %v4022
        %v4031 = vmul.f32 %v3967, %v4023
        %v4032 = vmul.f32 %v4008, %v4016
        %v4033 = vmul.f32 %v4009, %v4017
        %v4034 = vmul.f32 %v4010, %v4018
        %v4035 = vmul.f32 %v4011, %v4019
        %v4036 = vmul.f32 %v4012, %v4020
        %v4037 = vmul.f32 %v4013, %v4021
        %v4038 = vmul.f32 %v4014, %v4022
        %v4039 = vmul.f32 %v4015, %v4023
        %4048 = vrot.lane.b32.xlu0 %v4032, 64
        %v4049 = vpop.permute.xlu0 %4048
        %4050 = vrot.lane.b32.xlu0 %v4033, 64
        %v4051 = vpop.permute.xlu0 %4050
        %4052 = vrot.lane.b32.xlu0 %v4034, 64
        %v4053 = vpop.permute.xlu0 %4052
        %4054 = vrot.lane.b32.xlu0 %v4035, 64
        %v4055 = vpop.permute.xlu0 %4054
        %4056 = vrot.lane.b32.xlu0 %v4036, 64
        %v4057 = vpop.permute.xlu0 %4056
        %4058 = vrot.lane.b32.xlu0 %v4037, 64
        %v4059 = vpop.permute.xlu0 %4058
        %4060 = vrot.lane.b32.xlu0 %v4038, 64
        %v4061 = vpop.permute.xlu0 %4060
        %4062 = vrot.lane.b32.xlu0 %v4039, 64
        %v4063 = vpop.permute.xlu0 %4062
        %v4072 = vsel %vm2537, %v4024, %v4049
        %v4073 = vsel %vm2537, %v4025, %v4051
        %v4074 = vsel %vm2537, %v4026, %v4053
        %v4075 = vsel %vm2537, %v4027, %v4055
        %v4076 = vsel %vm2537, %v4028, %v4057
        %v4077 = vsel %vm2537, %v4029, %v4059
        %v4078 = vsel %vm2537, %v4030, %v4061
        %v4079 = vsel %vm2537, %v4031, %v4063
        %4080 = vst [vmem:[%s273] sm:$0xff] %v4072
        %4081 = vst [vmem:[%s273 + $0x8] sm:$0xff] %v4073
        %4082 = vst [vmem:[%s273 + $0x10] sm:$0xff] %v4074
        %4083 = vst [vmem:[%s273 + $0x18] sm:$0xff] %v4075
        %4084 = vst [vmem:[%s273 + $0x20] sm:$0xff] %v4076
        %4085 = vst [vmem:[%s273 + $0x28] sm:$0xff] %v4077
        %4086 = vst [vmem:[%s273 + $0x30] sm:$0xff] %v4078
        %4087 = vst [vmem:[%s273 + $0x38] sm:$0xff] %v4079
        %s4088 = sand.u32 %s178, 1
        %s4089 = scalar_lea.sflag [#allocation4], %s4088
        %s4090 = sand.u32 %s178, 1
        %s4091 = smul.addr %s4090, 64
        %s4092 = scalar_lea.vmem [#allocation3], %s4091
        // Predicated region
        $region45: #{tpu_custom_call.1} parent=43 // pred_check
          %p4093 = pneg %p188
        $region46: #{tpu_custom_call.1} parent=43 // pred_check_branch
          %4095 = sbr.rel (%p4093) target = $region48
        $region47: #{tpu_custom_call.1} parent=43 // pred_region
          %s4096 = smul.u32 8, %s25
          %s4098 = ssub.s32 1024, 1024
          %4099 = vsyncadd %s4089, %s4098
          %s4100 = smul.addr %s24, 8
          %s4101 = sadd.s32 %s4096, %s4100
          %s4102 = smul.addr %s4101, 128
          %s4103 = scalar_lea.hbm %s6, %s4102
          %s4104 = sshll.u32 %s4092, 4
          %s4105 = int_to_ptr.vmem [resolvable:$true] %s4104
          %4110 = dma.vmem_to_hbm [thread:$0]  %s4105, 1024, %s4103, %s4089, 128, 128, 8
        $region48: #{tpu_custom_call.1} parent=43 // pred_fallthru
          _
      $region44: #{tpu_custom_call.1} parent=5 // pred_fallthru
        _
      %p4111 = scmp.le.s32.totalorder 2, %s15
      // Predicated region
      $region49: #{tpu_custom_call.1} parent=5 // pred_check
        %p4112 = pneg %p4111
      $region50: #{tpu_custom_call.1} parent=5 // pred_check_branch
        %4114 = sbr.rel (%p4112) target = $region52
      $region51: #{tpu_custom_call.1} parent=5 // pred_region
        %s4115 = ssub.s32 %s15, 2
        // Predicated region
        $region53: #{tpu_custom_call.1} parent=51 // pred_check
          %p4116 = pneg %p194
        $region54: #{tpu_custom_call.1} parent=51 // pred_check_branch
          %4118 = sbr.rel (%p4116) target = $region56
        $region55: #{tpu_custom_call.1} parent=51 // pred_region
          %s4119 = sand.u32 %s179, 1
          %s4120 = scalar_lea.sflag [#allocation4], %s4119
          %s4121 = sand.u32 %s179, 1
          %s4122 = smul.addr %s4121, 64
          %s4123 = scalar_lea.vmem [#allocation3], %s4122
          %4124 = dma.done %s4120, 1024
        $region56: #{tpu_custom_call.1} parent=51 // pred_fallthru
          _
      $region52: #{tpu_custom_call.1} parent=5 // pred_fallthru
        _
    $region6: #{tpu_custom_call.1} parent=1 // loop_footer
      %s19 = sadd.s32 1, %s15
    $region7: #{tpu_custom_call.1} parent=1 // loop_footer_branch
      %14 = sbr.rel target = $region3
    $region8: #{tpu_custom_call.1} parent=1 // loop_exit
      _
    %4125 = vsyncpa [#allocation4], 1
    %s4126 = scalar_lea.sflag [#allocation4], 1
    %4127 = vsyncpa %s4126, 1

</llo_original>
